<compile_context>
chip_gen: v6e
topology: v6e:2x2x1
jax: 0.10.0
libtpu: 0.0.40
codegen_flags: <defaults>
</compile_context>

<pallas_src>
import functools

import jax
import jax.numpy as jnp
from jax import lax
from jax.experimental import pallas as pl
from jax.experimental.pallas import tpu as pltpu

HALO = 4  # 1 frame of conv halo per layer x 4 layers


def _generator_kernel(x_ref, w1_ref, b1_ref, w2h_ref, w2l_ref, b2_ref,
                      w3h_ref, w3l_ref, b3_ref, w4_ref, b4_ref, o_ref,
                      *, t_valid):
    # Layout: channels on sublanes, time on lanes.
    #   x_ref : (1, 1, 1, tw + 8) f32   lane-dense input window (incl. halo)
    #   w1    : (64, 3)    b1: (64, 1)
    #   w2h/l : (128, 192) bf16 hi/lo, taps folded into K;  b2: (128, 1)
    #   w3h/l : (64, 384)  bf16 hi/lo, taps folded into K;  b3: (64, 1)
    #   w4    : (64, 3)    b4: (1, 1) scalar in SMEM
    #   o_ref : (1, 1, 1, tw) f32       lane-dense output row
    f32 = jnp.float32
    tw = o_ref.shape[-1]
    s = pl.program_id(1) * tw                    # first output frame of this tile

    xw = x_ref[0, 0]                             # (1, tw + 8)

    def mask_time(h, first_time):
        # Zero activations whose global frame is outside [0, t_valid): this is
        # exactly PyTorch's per-layer zero padding at the two sequence ends.
        n = h.shape[-1]
        tvec = first_time + lax.broadcasted_iota(jnp.int32, (1, n), 1)
        return jnp.where((tvec >= 0) & (tvec < t_valid), h, 0.0)

    def split_bf16(h):
        hi = h.astype(jnp.bfloat16)
        lo = (h - hi.astype(f32)).astype(jnp.bfloat16)
        return hi, lo

    def taps3(h, n):
        # (C, n+2) f32 -> hi/lo bf16 im2col operands (3C, n); K index = tap*C + c.
        hi, lo = split_bf16(h)                   # bf16 BEFORE the concat
        cat = lambda a: jnp.concatenate(
            [a[:, 0:n], a[:, 1:n + 1], a[:, 2:n + 2]], axis=0)
        return cat(hi), cat(lo)

    def mxu3(wh, wl, xh, xl):
        # ~f32-accurate matmul from 3 bf16 MXU passes (hi/lo split, f32 accum).
        d = lambda a, b: jnp.dot(a, b, preferred_element_type=f32)
        return d(wh, xh) + d(wh, xl) + d(wl, xh)

    # ---- layer 1: Conv1d(1 -> 64) + ReLU  (Cin=1 -> pure VPU broadcast MACs)
    n1 = tw + 6
    h1 = (w1_ref[:, 0:1] * xw[:, 0:n1]
          + w1_ref[:, 1:2] * xw[:, 1:n1 + 1]
          + w1_ref[:, 2:3] * xw[:, 2:n1 + 2]) + b1_ref[...]
    h1 = mask_time(jnp.maximum(h1, 0.0), s - 3)                 # (64, tw+6)

    # ---- layer 2: Conv1d(64 -> 128) + ReLU  (taps folded into K=192, N=tw)
    n2 = tw + 4
    l2h, l2l = taps3(h1, n2)
    h2 = mxu3(w2h_ref[...], w2l_ref[...], l2h, l2l) + b2_ref[...]
    h2 = mask_time(jnp.maximum(h2, 0.0), s - 2)                 # (128, tw+4)

    # ---- layer 3: ConvTranspose1d(128 -> 64) + ReLU  (== 3-tap conv, K=384)
    n3 = tw + 2
    l3h, l3l = taps3(h2, n3)
    h3 = mxu3(w3h_ref[...], w3l_ref[...], l3h, l3l) + b3_ref[...]
    h3 = mask_time(jnp.maximum(h3, 0.0), s - 1)                 # (64, tw+2)

    # ---- layer 4: ConvTranspose1d(64 -> 1) + Tanh  (VPU MACs + sublane reduce)
    acc = (w4_ref[:, 0:1] * h3[:, 0:tw]
           + w4_ref[:, 1:2] * h3[:, 1:tw + 1]
           + w4_ref[:, 2:3] * h3[:, 2:tw + 2])                  # (64, tw)
    y = jnp.tanh(jnp.sum(acc, axis=0, keepdims=True) + b4_ref[0, 0])
    o_ref[0, 0] = y.astype(o_ref.dtype)                         # lane-dense store


def _round_up(n, m):
    return ((n + m - 1) // m) * m


def _pick_time_tile(T, B, max_tile):
    """Largest lane-aligned time tile <= max_tile (amortises the ~0.35us
    per-grid-step overhead), but keep >= 2 total grid steps so v7x megacore
    has something to split when B == 1."""
    max_tile = max(128, (max_tile // 128) * 128)
    tw = min(max_tile, _round_up(T, 128))
    if B * ((T + tw - 1) // tw) < 2:
        tw = max(128, _round_up((T + 1) // 2, 128))
    return tw


def generator_forward(x, params, *, max_tile=2048):
    # x: (B, 1, T) f32 -> (B, 1, T) f32
    B, C, T = x.shape
    assert C == 1
    tw = _pick_time_tile(T, B, max_tile)
    n_t = (T + tw - 1) // tw
    Tp = n_t * tw
    win = tw + 2 * HALO

    f32, bf16 = jnp.float32, jnp.bfloat16

    # Lane-dense overlapping per-tile input windows (only 8 frames duplicated
    # per tile): per-step input VMEM stays tiny and bounded for any T.
    xpad = jnp.pad(x.reshape(B, T), ((0, 0), (HALO, HALO + Tp - T)))
    idx = jnp.arange(n_t)[:, None] * tw + jnp.arange(win)[None, :]
    xwin = xpad[:, idx].reshape(B, n_t, 1, win)

    def hi_lo(w):
        hi = w.astype(bf16)
        return hi, (w - hi.astype(f32)).astype(bf16)

    w1c = params["w1"].reshape(3, 64).T                         # (64, 3)
    b1c = params["b1"].reshape(64, 1)
    w2t = jnp.transpose(params["w2"], (2, 0, 1)).reshape(128, 3 * 64)
    w2h, w2l = hi_lo(w2t)
    b2c = params["b2"].reshape(128, 1)
    w3t = jnp.transpose(params["w3"], (2, 0, 1)).reshape(64, 3 * 128)
    w3h, w3l = hi_lo(w3t)
    b3c = params["b3"].reshape(64, 1)
    w4c = params["w4"].reshape(3, 64).T                         # (64, 3)
    b4s = params["b4"].reshape(1, 1)

    def const(shape):
        return pl.BlockSpec(shape, lambda b, t: (0,) * len(shape))

    out = pl.pallas_call(
        functools.partial(_generator_kernel, t_valid=T),
        out_shape=jax.ShapeDtypeStruct((B, n_t, 1, tw), jnp.float32),
        grid=(B, n_t),
        in_specs=[
            pl.BlockSpec((1, 1, 1, win), lambda b, t: (b, t, 0, 0)),
            const((64, 3)), const((64, 1)),
            const((128, 3 * 64)), const((128, 3 * 64)), const((128, 1)),
            const((64, 3 * 128)), const((64, 3 * 128)), const((64, 1)),
            const((64, 3)),
            pl.BlockSpec(memory_space=pltpu.MemorySpace.SMEM),   # scalar b4
        ],
        out_specs=pl.BlockSpec((1, 1, 1, tw), lambda b, t: (b, t, 0, 0)),
        compiler_params=pltpu.CompilerParams(
            dimension_semantics=("parallel", "parallel"),
            vmem_limit_bytes=48 * 1024 * 1024,
        ),
    )(xwin, w1c, b1c, w2h, w2l, b2c, w3h, w3l, b3c, w4c, b4s)

    # (B, n_t, 1, tw) flattens contiguously to (B, Tp); crop the T padding.
    return out.reshape(B, Tp)[:, :T].reshape(B, 1, T)


def init_params(key):
    # Synthetic weights as correlation taps (3, Cin, Cout), torch-style bounds.
    ks = jax.random.split(key, 8)

    def taps(k, cin, cout):
        bound = 1.0 / float(3 * cin) ** 0.5
        return jax.random.uniform(k, (3, cin, cout), jnp.float32, -bound, bound)

    def bias(k, cin, cout):
        bound = 1.0 / float(3 * cin) ** 0.5
        return jax.random.uniform(k, (cout,), jnp.float32, -bound, bound)

    return {
        "w1": taps(ks[0], 1, 64),    "b1": bias(ks[1], 1, 64),
        "w2": taps(ks[2], 64, 128),  "b2": bias(ks[3], 64, 128),
        "w3": taps(ks[4], 128, 64),  "b3": bias(ks[5], 128, 64),
        "w4": taps(ks[6], 64, 1),    "b4": bias(ks[7], 64, 1),
    }


# ---------------- pure-JAX reference (f32, HIGHEST) for the self-check ------

def _conv3_ref(h, w, b):
    # h: (B, T, Cin), w: (3, Cin, Cout) correlation taps, padding=1 (per layer).
    Tn = h.shape[1]
    hp = jnp.pad(h, ((0, 0), (1, 1), (0, 0)))
    hi = lax.Precision.HIGHEST
    y = (jnp.einsum("btc,cd->btd", hp[:, 0:Tn], w[0], precision=hi)
         + jnp.einsum("btc,cd->btd", hp[:, 1:Tn + 1], w[1], precision=hi)
         + jnp.einsum("btc,cd->btd", hp[:, 2:Tn + 2], w[2], precision=hi))
    return y + b


def generator_reference(x, params):
    B, _, T = x.shape
    h = x.reshape(B, T, 1)
    h = jax.nn.relu(_conv3_ref(h, params["w1"], params["b1"]))
    h = jax.nn.relu(_conv3_ref(h, params["w2"], params["b2"]))
    h = jax.nn.relu(_conv3_ref(h, params["w3"], params["b3"]))
    h = jnp.tanh(_conv3_ref(h, params["w4"], params["b4"]))
    return h.reshape(B, 1, T)


if __name__ == "__main__":
    key = jax.random.PRNGKey(0)
    kx, kp = jax.random.split(key)
    params = init_params(kp)

    # (a) multi-tile, non-divisible T: exercises halos, T-padding + both
    #     sequence-boundary masks.  Small tile forced so several grid steps run.
    B, T = 2, 1500
    x = jax.random.normal(kx, (B, 1, T), dtype=jnp.float32)
    fwd_small = jax.jit(functools.partial(generator_forward, max_tile=512))
    out = jax.block_until_ready(fwd_small(x, params))
    assert out.shape == (B, 1, T) and out.dtype == jnp.float32
    ref = jax.block_until_ready(generator_reference(x, params))
    err = float(jnp.max(jnp.abs(out - ref)))
    assert err < 1e-3, f"tiled kernel/reference mismatch: max abs err {err}"

    # (b) default big-tile config with B=1: exercises the >=2-grid-step
    #     (megacore) branch of the tile picker.
    x1 = x[:1, :, :1024]
    out1 = jax.block_until_ready(jax.jit(generator_forward)(x1, params))
    ref1 = jax.block_until_ready(generator_reference(x1, params))
    err1 = float(jnp.max(jnp.abs(out1 - ref1)))
    assert err1 < 1e-3, f"default-tile kernel/reference mismatch: max abs err {err1}"

    print("KERNEL_OK")
</pallas_src>

<mosaic_0001>
module attributes {stable_mosaic.version = 11 : i64} {
  func.func @_generator_kernel(%arg0: i32, %arg1: i32, %arg2: memref<1x1x1x520xf32, #tpu.memory_space<vmem>>, %arg3: memref<64x3xf32, #tpu.memory_space<vmem>>, %arg4: memref<64x1xf32, #tpu.memory_space<vmem>>, %arg5: memref<128x192xbf16, #tpu.memory_space<vmem>>, %arg6: memref<128x192xbf16, #tpu.memory_space<vmem>>, %arg7: memref<128x1xf32, #tpu.memory_space<vmem>>, %arg8: memref<64x384xbf16, #tpu.memory_space<vmem>>, %arg9: memref<64x384xbf16, #tpu.memory_space<vmem>>, %arg10: memref<64x1xf32, #tpu.memory_space<vmem>>, %arg11: memref<64x3xf32, #tpu.memory_space<vmem>>, %arg12: memref<1x1xf32, #tpu.memory_space<smem>>, %arg13: memref<1x1x1x512xf32, #tpu.memory_space<vmem>>) attributes {dimension_semantics = [#tpu.dimension_semantics<parallel>, #tpu.dimension_semantics<parallel>], iteration_bounds = array<i64: 2, 3>, scalar_prefetch = 0 : i64, scratch_operands = 0 : i64, tpu.core_type = #tpu.core_type<tc>, window_params = [{transform_indices = @transform_0, window_bounds = array<i64: 1, 1, 1, 520>}, {pipeline_mode = #tpu.pipeline_mode<synchronous>, transform_indices = @transform_1, window_bounds = array<i64: 64, 3>}, {pipeline_mode = #tpu.pipeline_mode<synchronous>, transform_indices = @transform_2, window_bounds = array<i64: 64, 1>}, {pipeline_mode = #tpu.pipeline_mode<synchronous>, transform_indices = @transform_3, window_bounds = array<i64: 128, 192>}, {pipeline_mode = #tpu.pipeline_mode<synchronous>, transform_indices = @transform_4, window_bounds = array<i64: 128, 192>}, {pipeline_mode = #tpu.pipeline_mode<synchronous>, transform_indices = @transform_5, window_bounds = array<i64: 128, 1>}, {pipeline_mode = #tpu.pipeline_mode<synchronous>, transform_indices = @transform_6, window_bounds = array<i64: 64, 384>}, {pipeline_mode = #tpu.pipeline_mode<synchronous>, transform_indices = @transform_7, window_bounds = array<i64: 64, 384>}, {pipeline_mode = #tpu.pipeline_mode<synchronous>, transform_indices = @transform_8, window_bounds = array<i64: 64, 1>}, {pipeline_mode = #tpu.pipeline_mode<synchronous>, transform_indices = @transform_9, window_bounds = array<i64: 64, 3>}, {transform_indices = @transform_10, window_bounds = array<i64: 1, 1>}, {transform_indices = @transform_11, window_bounds = array<i64: 1, 1, 1, 512>}]} {
    %c512_i32 = arith.constant 512 : i32
    %0 = arith.muli %arg1, %c512_i32 : i32
    %c0 = arith.constant 0 : index
    %c0_0 = arith.constant 0 : index
    %c0_1 = arith.constant 0 : index
    %c0_2 = arith.constant 0 : index
    %1 = vector.load %arg2[%c0, %c0_0, %c0_1, %c0_2] : memref<1x1x1x520xf32, #tpu.memory_space<vmem>>, vector<1x1x1x520xf32>
    %2 = vector.shape_cast %1 : vector<1x1x1x520xf32> to vector<1x520xf32>
    %c0_3 = arith.constant 0 : index
    %c0_4 = arith.constant 0 : index
    %3 = vector.load %arg3[%c0_3, %c0_4] : memref<64x3xf32, #tpu.memory_space<vmem>>, vector<64x1xf32>
    %4 = vector.extract_strided_slice %2 {offsets = [0, 0], sizes = [1, 518], strides = [1, 1]} : vector<1x520xf32> to vector<1x518xf32>
    %5 = vector.broadcast %3 : vector<64x1xf32> to vector<64x518xf32>
    %6 = vector.broadcast %4 : vector<1x518xf32> to vector<64x518xf32>
    %7 = arith.mulf %5, %6 : vector<64x518xf32>
    %c0_5 = arith.constant 0 : index
    %c1 = arith.constant 1 : index
    %8 = vector.load %arg3[%c0_5, %c1] : memref<64x3xf32, #tpu.memory_space<vmem>>, vector<64x1xf32>
    %9 = vector.extract_strided_slice %2 {offsets = [0, 1], sizes = [1, 518], strides = [1, 1]} : vector<1x520xf32> to vector<1x518xf32>
    %10 = vector.broadcast %8 : vector<64x1xf32> to vector<64x518xf32>
    %11 = vector.broadcast %9 : vector<1x518xf32> to vector<64x518xf32>
    %12 = arith.mulf %10, %11 : vector<64x518xf32>
    %13 = arith.addf %7, %12 : vector<64x518xf32>
    %c0_6 = arith.constant 0 : index
    %c2 = arith.constant 2 : index
    %14 = vector.load %arg3[%c0_6, %c2] : memref<64x3xf32, #tpu.memory_space<vmem>>, vector<64x1xf32>
    %15 = vector.extract_strided_slice %2 {offsets = [0, 2], sizes = [1, 518], strides = [1, 1]} : vector<1x520xf32> to vector<1x518xf32>
    %16 = vector.broadcast %14 : vector<64x1xf32> to vector<64x518xf32>
    %17 = vector.broadcast %15 : vector<1x518xf32> to vector<64x518xf32>
    %18 = arith.mulf %16, %17 : vector<64x518xf32>
    %19 = arith.addf %13, %18 : vector<64x518xf32>
    %c0_7 = arith.constant 0 : index
    %c0_8 = arith.constant 0 : index
    %20 = vector.load %arg4[%c0_7, %c0_8] : memref<64x1xf32, #tpu.memory_space<vmem>>, vector<64x1xf32>
    %21 = vector.broadcast %20 : vector<64x1xf32> to vector<64x518xf32>
    %22 = arith.addf %19, %21 : vector<64x518xf32>
    %cst = arith.constant 0.000000e+00 : f32
    %23 = vector.broadcast %cst : f32 to vector<64x518xf32>
    %24 = arith.maximumf %22, %23 : vector<64x518xf32>
    %c3_i32 = arith.constant 3 : i32
    %25 = arith.subi %0, %c3_i32 : i32
    %26 = tpu.iota {dimensions = array<i32: 1>} : vector<1x518xi32>
    %27 = vector.broadcast %25 : i32 to vector<1x518xi32>
    %28 = arith.addi %27, %26 : vector<1x518xi32>
    %c0_i32 = arith.constant 0 : i32
    %29 = vector.broadcast %c0_i32 : i32 to vector<1x518xi32>
    %30 = arith.cmpi sge, %28, %29 : vector<1x518xi32>
    %c1500_i32 = arith.constant 1500 : i32
    %31 = vector.broadcast %c1500_i32 : i32 to vector<1x518xi32>
    %32 = arith.cmpi slt, %28, %31 : vector<1x518xi32>
    %33 = arith.andi %30, %32 : vector<1x518xi1>
    %cst_9 = arith.constant 0.000000e+00 : f32
    %34 = vector.shape_cast %33 : vector<1x518xi1> to vector<1x518xi1>
    %35 = vector.broadcast %34 : vector<1x518xi1> to vector<64x518xi1>
    %36 = vector.broadcast %cst_9 : f32 to vector<64x518xf32>
    %37 = arith.select %35, %24, %36 : vector<64x518xi1>, vector<64x518xf32>
    %38 = arith.truncf %37 : vector<64x518xf32> to vector<64x518xbf16>
    %39 = arith.extf %38 : vector<64x518xbf16> to vector<64x518xf32>
    %40 = arith.subf %37, %39 : vector<64x518xf32>
    %41 = arith.truncf %40 : vector<64x518xf32> to vector<64x518xbf16>
    %42 = vector.extract_strided_slice %38 {offsets = [0, 0], sizes = [64, 516], strides = [1, 1]} : vector<64x518xbf16> to vector<64x516xbf16>
    %43 = vector.extract_strided_slice %38 {offsets = [0, 1], sizes = [64, 516], strides = [1, 1]} : vector<64x518xbf16> to vector<64x516xbf16>
    %44 = vector.extract_strided_slice %38 {offsets = [0, 2], sizes = [64, 516], strides = [1, 1]} : vector<64x518xbf16> to vector<64x516xbf16>
    %45 = tpu.concatenate %42, %43, %44 in 0 : vector<64x516xbf16>, vector<64x516xbf16>, vector<64x516xbf16> -> vector<192x516xbf16>
    %46 = vector.extract_strided_slice %41 {offsets = [0, 0], sizes = [64, 516], strides = [1, 1]} : vector<64x518xbf16> to vector<64x516xbf16>
    %47 = vector.extract_strided_slice %41 {offsets = [0, 1], sizes = [64, 516], strides = [1, 1]} : vector<64x518xbf16> to vector<64x516xbf16>
    %48 = vector.extract_strided_slice %41 {offsets = [0, 2], sizes = [64, 516], strides = [1, 1]} : vector<64x518xbf16> to vector<64x516xbf16>
    %49 = tpu.concatenate %46, %47, %48 in 0 : vector<64x516xbf16>, vector<64x516xbf16>, vector<64x516xbf16> -> vector<192x516xbf16>
    %c0_10 = arith.constant 0 : index
    %c0_11 = arith.constant 0 : index
    %50 = vector.load %arg5[%c0_10, %c0_11] : memref<128x192xbf16, #tpu.memory_space<vmem>>, vector<128x192xbf16>
    %c0_12 = arith.constant 0 : index
    %c0_13 = arith.constant 0 : index
    %51 = vector.load %arg6[%c0_12, %c0_13] : memref<128x192xbf16, #tpu.memory_space<vmem>>, vector<128x192xbf16>
    %cst_14 = arith.constant dense<0.000000e+00> : vector<128x516xf32>
    %52 = tpu.matmul %50, %45, %cst_14 {dimension_numbers = #tpu.dot_dimension_numbers<[1], [0], [0], [1], [0, 0, 1, 1], [], []>} : vector<128x192xbf16>, vector<192x516xbf16>, vector<128x516xf32> -> vector<128x516xf32>
    %cst_15 = arith.constant dense<0.000000e+00> : vector<128x516xf32>
    %53 = tpu.matmul %50, %49, %cst_15 {dimension_numbers = #tpu.dot_dimension_numbers<[1], [0], [0], [1], [0, 0, 1, 1], [], []>} : vector<128x192xbf16>, vector<192x516xbf16>, vector<128x516xf32> -> vector<128x516xf32>
    %54 = arith.addf %52, %53 : vector<128x516xf32>
    %cst_16 = arith.constant dense<0.000000e+00> : vector<128x516xf32>
    %55 = tpu.matmul %51, %45, %cst_16 {dimension_numbers = #tpu.dot_dimension_numbers<[1], [0], [0], [1], [0, 0, 1, 1], [], []>} : vector<128x192xbf16>, vector<192x516xbf16>, vector<128x516xf32> -> vector<128x516xf32>
    %56 = arith.addf %54, %55 : vector<128x516xf32>
    %c0_17 = arith.constant 0 : index
    %c0_18 = arith.constant 0 : index
    %57 = vector.load %arg7[%c0_17, %c0_18] : memref<128x1xf32, #tpu.memory_space<vmem>>, vector<128x1xf32>
    %58 = vector.broadcast %57 : vector<128x1xf32> to vector<128x516xf32>
    %59 = arith.addf %56, %58 : vector<128x516xf32>
    %cst_19 = arith.constant 0.000000e+00 : f32
    %60 = vector.broadcast %cst_19 : f32 to vector<128x516xf32>
    %61 = arith.maximumf %59, %60 : vector<128x516xf32>
    %c2_i32 = arith.constant 2 : i32
    %62 = arith.subi %0, %c2_i32 : i32
    %63 = tpu.iota {dimensions = array<i32: 1>} : vector<1x516xi32>
    %64 = vector.broadcast %62 : i32 to vector<1x516xi32>
    %65 = arith.addi %64, %63 : vector<1x516xi32>
    %c0_i32_20 = arith.constant 0 : i32
    %66 = vector.broadcast %c0_i32_20 : i32 to vector<1x516xi32>
    %67 = arith.cmpi sge, %65, %66 : vector<1x516xi32>
    %c1500_i32_21 = arith.constant 1500 : i32
    %68 = vector.broadcast %c1500_i32_21 : i32 to vector<1x516xi32>
    %69 = arith.cmpi slt, %65, %68 : vector<1x516xi32>
    %70 = arith.andi %67, %69 : vector<1x516xi1>
    %cst_22 = arith.constant 0.000000e+00 : f32
    %71 = vector.shape_cast %70 : vector<1x516xi1> to vector<1x516xi1>
    %72 = vector.broadcast %71 : vector<1x516xi1> to vector<128x516xi1>
    %73 = vector.broadcast %cst_22 : f32 to vector<128x516xf32>
    %74 = arith.select %72, %61, %73 : vector<128x516xi1>, vector<128x516xf32>
    %75 = arith.truncf %74 : vector<128x516xf32> to vector<128x516xbf16>
    %76 = arith.extf %75 : vector<128x516xbf16> to vector<128x516xf32>
    %77 = arith.subf %74, %76 : vector<128x516xf32>
    %78 = arith.truncf %77 : vector<128x516xf32> to vector<128x516xbf16>
    %79 = vector.extract_strided_slice %75 {offsets = [0, 0], sizes = [128, 514], strides = [1, 1]} : vector<128x516xbf16> to vector<128x514xbf16>
    %80 = vector.extract_strided_slice %75 {offsets = [0, 1], sizes = [128, 514], strides = [1, 1]} : vector<128x516xbf16> to vector<128x514xbf16>
    %81 = vector.extract_strided_slice %75 {offsets = [0, 2], sizes = [128, 514], strides = [1, 1]} : vector<128x516xbf16> to vector<128x514xbf16>
    %82 = tpu.concatenate %79, %80, %81 in 0 : vector<128x514xbf16>, vector<128x514xbf16>, vector<128x514xbf16> -> vector<384x514xbf16>
    %83 = vector.extract_strided_slice %78 {offsets = [0, 0], sizes = [128, 514], strides = [1, 1]} : vector<128x516xbf16> to vector<128x514xbf16>
    %84 = vector.extract_strided_slice %78 {offsets = [0, 1], sizes = [128, 514], strides = [1, 1]} : vector<128x516xbf16> to vector<128x514xbf16>
    %85 = vector.extract_strided_slice %78 {offsets = [0, 2], sizes = [128, 514], strides = [1, 1]} : vector<128x516xbf16> to vector<128x514xbf16>
    %86 = tpu.concatenate %83, %84, %85 in 0 : vector<128x514xbf16>, vector<128x514xbf16>, vector<128x514xbf16> -> vector<384x514xbf16>
    %c0_23 = arith.constant 0 : index
    %c0_24 = arith.constant 0 : index
    %87 = vector.load %arg8[%c0_23, %c0_24] : memref<64x384xbf16, #tpu.memory_space<vmem>>, vector<64x384xbf16>
    %c0_25 = arith.constant 0 : index
    %c0_26 = arith.constant 0 : index
    %88 = vector.load %arg9[%c0_25, %c0_26] : memref<64x384xbf16, #tpu.memory_space<vmem>>, vector<64x384xbf16>
    %cst_27 = arith.constant dense<0.000000e+00> : vector<64x514xf32>
    %89 = tpu.matmul %87, %82, %cst_27 {dimension_numbers = #tpu.dot_dimension_numbers<[1], [0], [0], [1], [0, 0, 1, 1], [], []>} : vector<64x384xbf16>, vector<384x514xbf16>, vector<64x514xf32> -> vector<64x514xf32>
    %cst_28 = arith.constant dense<0.000000e+00> : vector<64x514xf32>
    %90 = tpu.matmul %87, %86, %cst_28 {dimension_numbers = #tpu.dot_dimension_numbers<[1], [0], [0], [1], [0, 0, 1, 1], [], []>} : vector<64x384xbf16>, vector<384x514xbf16>, vector<64x514xf32> -> vector<64x514xf32>
    %91 = arith.addf %89, %90 : vector<64x514xf32>
    %cst_29 = arith.constant dense<0.000000e+00> : vector<64x514xf32>
    %92 = tpu.matmul %88, %82, %cst_29 {dimension_numbers = #tpu.dot_dimension_numbers<[1], [0], [0], [1], [0, 0, 1, 1], [], []>} : vector<64x384xbf16>, vector<384x514xbf16>, vector<64x514xf32> -> vector<64x514xf32>
    %93 = arith.addf %91, %92 : vector<64x514xf32>
    %c0_30 = arith.constant 0 : index
    %c0_31 = arith.constant 0 : index
    %94 = vector.load %arg10[%c0_30, %c0_31] : memref<64x1xf32, #tpu.memory_space<vmem>>, vector<64x1xf32>
    %95 = vector.broadcast %94 : vector<64x1xf32> to vector<64x514xf32>
    %96 = arith.addf %93, %95 : vector<64x514xf32>
    %cst_32 = arith.constant 0.000000e+00 : f32
    %97 = vector.broadcast %cst_32 : f32 to vector<64x514xf32>
    %98 = arith.maximumf %96, %97 : vector<64x514xf32>
    %c1_i32 = arith.constant 1 : i32
    %99 = arith.subi %0, %c1_i32 : i32
    %100 = tpu.iota {dimensions = array<i32: 1>} : vector<1x514xi32>
    %101 = vector.broadcast %99 : i32 to vector<1x514xi32>
    %102 = arith.addi %101, %100 : vector<1x514xi32>
    %c0_i32_33 = arith.constant 0 : i32
    %103 = vector.broadcast %c0_i32_33 : i32 to vector<1x514xi32>
    %104 = arith.cmpi sge, %102, %103 : vector<1x514xi32>
    %c1500_i32_34 = arith.constant 1500 : i32
    %105 = vector.broadcast %c1500_i32_34 : i32 to vector<1x514xi32>
    %106 = arith.cmpi slt, %102, %105 : vector<1x514xi32>
    %107 = arith.andi %104, %106 : vector<1x514xi1>
    %cst_35 = arith.constant 0.000000e+00 : f32
    %108 = vector.shape_cast %107 : vector<1x514xi1> to vector<1x514xi1>
    %109 = vector.broadcast %108 : vector<1x514xi1> to vector<64x514xi1>
    %110 = vector.broadcast %cst_35 : f32 to vector<64x514xf32>
    %111 = arith.select %109, %98, %110 : vector<64x514xi1>, vector<64x514xf32>
    %c0_36 = arith.constant 0 : index
    %c0_37 = arith.constant 0 : index
    %112 = vector.load %arg11[%c0_36, %c0_37] : memref<64x3xf32, #tpu.memory_space<vmem>>, vector<64x1xf32>
    %113 = vector.extract_strided_slice %111 {offsets = [0, 0], sizes = [64, 512], strides = [1, 1]} : vector<64x514xf32> to vector<64x512xf32>
    %114 = vector.broadcast %112 : vector<64x1xf32> to vector<64x512xf32>
    %115 = arith.mulf %114, %113 : vector<64x512xf32>
    %c0_38 = arith.constant 0 : index
    %c1_39 = arith.constant 1 : index
    %116 = vector.load %arg11[%c0_38, %c1_39] : memref<64x3xf32, #tpu.memory_space<vmem>>, vector<64x1xf32>
    %117 = vector.extract_strided_slice %111 {offsets = [0, 1], sizes = [64, 512], strides = [1, 1]} : vector<64x514xf32> to vector<64x512xf32>
    %118 = vector.broadcast %116 : vector<64x1xf32> to vector<64x512xf32>
    %119 = arith.mulf %118, %117 : vector<64x512xf32>
    %120 = arith.addf %115, %119 : vector<64x512xf32>
    %c0_40 = arith.constant 0 : index
    %c2_41 = arith.constant 2 : index
    %121 = vector.load %arg11[%c0_40, %c2_41] : memref<64x3xf32, #tpu.memory_space<vmem>>, vector<64x1xf32>
    %122 = vector.extract_strided_slice %111 {offsets = [0, 2], sizes = [64, 512], strides = [1, 1]} : vector<64x514xf32> to vector<64x512xf32>
    %123 = vector.broadcast %121 : vector<64x1xf32> to vector<64x512xf32>
    %124 = arith.mulf %123, %122 : vector<64x512xf32>
    %125 = arith.addf %120, %124 : vector<64x512xf32>
    %cst_42 = arith.constant dense<0.000000e+00> : vector<512xf32>
    %126 = vector.multi_reduction <add>, %125, %cst_42 [0] : vector<64x512xf32> to vector<512xf32>
    %127 = vector.shape_cast %126 : vector<512xf32> to vector<1x512xf32>
    %c0_43 = arith.constant 0 : index
    %c0_44 = arith.constant 0 : index
    %128 = memref.load %arg12[%c0_43, %c0_44] : memref<1x1xf32, #tpu.memory_space<smem>>
    %129 = vector.broadcast %128 : f32 to vector<1x512xf32>
    %130 = arith.addf %127, %129 : vector<1x512xf32>
    %131 = math.tanh %130 : vector<1x512xf32>
    %c0_45 = arith.constant 0 : index
    %c0_46 = arith.constant 0 : index
    %c0_47 = arith.constant 0 : index
    %c0_48 = arith.constant 0 : index
    %132 = vector.load %arg13[%c0_45, %c0_46, %c0_47, %c0_48] : memref<1x1x1x512xf32, #tpu.memory_space<vmem>>, vector<1x1x1x512xf32>
    %133 = vector.shape_cast %132 : vector<1x1x1x512xf32> to vector<1x512xf32>
    %134 = vector.shape_cast %131 : vector<1x512xf32> to vector<1x1x1x512xf32>
    tpu.vector_store %arg13[%c0_45, %c0_46, %c0_47, %c0_48], %134 {strides = array<i32>} : memref<1x1x1x512xf32, #tpu.memory_space<vmem>>, vector<1x1x1x512xf32>,
    return
  }
  func.func @transform_0(%arg0: i32, %arg1: i32) -> (i32, i32, i32, i32) {
    %c0_i32 = arith.constant 0 : i32
    %c0_i32_0 = arith.constant 0 : i32
    %c0_i32_1 = arith.constant 0 : i32
    return %arg0, %arg1, %c0_i32, %c0_i32_0 : i32, i32, i32, i32
  }
  func.func @transform_1(%arg0: i32, %arg1: i32) -> (i32, i32) {
    %c0_i32 = arith.constant 0 : i32
    %c0_i32_0 = arith.constant 0 : i32
    %c0_i32_1 = arith.constant 0 : i32
    return %c0_i32, %c0_i32_0 : i32, i32
  }
  func.func @transform_2(%arg0: i32, %arg1: i32) -> (i32, i32) {
    %c0_i32 = arith.constant 0 : i32
    %c0_i32_0 = arith.constant 0 : i32
    %c0_i32_1 = arith.constant 0 : i32
    return %c0_i32, %c0_i32_0 : i32, i32
  }
  func.func @transform_3(%arg0: i32, %arg1: i32) -> (i32, i32) {
    %c0_i32 = arith.constant 0 : i32
    %c0_i32_0 = arith.constant 0 : i32
    %c0_i32_1 = arith.constant 0 : i32
    return %c0_i32, %c0_i32_0 : i32, i32
  }
  func.func @transform_4(%arg0: i32, %arg1: i32) -> (i32, i32) {
    %c0_i32 = arith.constant 0 : i32
    %c0_i32_0 = arith.constant 0 : i32
    %c0_i32_1 = arith.constant 0 : i32
    return %c0_i32, %c0_i32_0 : i32, i32
  }
  func.func @transform_5(%arg0: i32, %arg1: i32) -> (i32, i32) {
    %c0_i32 = arith.constant 0 : i32
    %c0_i32_0 = arith.constant 0 : i32
    %c0_i32_1 = arith.constant 0 : i32
    return %c0_i32, %c0_i32_0 : i32, i32
  }
  func.func @transform_6(%arg0: i32, %arg1: i32) -> (i32, i32) {
    %c0_i32 = arith.constant 0 : i32
    %c0_i32_0 = arith.constant 0 : i32
    %c0_i32_1 = arith.constant 0 : i32
    return %c0_i32, %c0_i32_0 : i32, i32
  }
  func.func @transform_7(%arg0: i32, %arg1: i32) -> (i32, i32) {
    %c0_i32 = arith.constant 0 : i32
    %c0_i32_0 = arith.constant 0 : i32
    %c0_i32_1 = arith.constant 0 : i32
    return %c0_i32, %c0_i32_0 : i32, i32
  }
  func.func @transform_8(%arg0: i32, %arg1: i32) -> (i32, i32) {
    %c0_i32 = arith.constant 0 : i32
    %c0_i32_0 = arith.constant 0 : i32
    %c0_i32_1 = arith.constant 0 : i32
    return %c0_i32, %c0_i32_0 : i32, i32
  }
  func.func @transform_9(%arg0: i32, %arg1: i32) -> (i32, i32) {
    %c0_i32 = arith.constant 0 : i32
    %c0_i32_0 = arith.constant 0 : i32
    %c0_i32_1 = arith.constant 0 : i32
    return %c0_i32, %c0_i32_0 : i32, i32
  }
  func.func @transform_10(%arg0: i32, %arg1: i32) -> (i32, i32) {
    %c0_i32 = arith.constant 0 : i32
    %c0_i32_0 = arith.constant 0 : i32
    %c0_i32_1 = arith.constant 0 : i32
    return %c0_i32, %c0_i32_0 : i32, i32
  }
  func.func @transform_11(%arg0: i32, %arg1: i32) -> (i32, i32, i32, i32) {
    %c0_i32 = arith.constant 0 : i32
    %c0_i32_0 = arith.constant 0 : i32
    %c0_i32_1 = arith.constant 0 : i32
    return %arg0, %arg1, %c0_i32, %c0_i32_0 : i32, i32, i32, i32
  }
}

</mosaic_0001>

<llo_original>
// kernel: generator_forward.1
$region0: #{generator_forward.1}
  #allocation0 [shape = 'u32[]', space=smem, size = 0x4, offset = 0x4, fixed_abs, tag = 'smem constant byte address 0x4 - core index']
  #allocation1 [shape = 'u32[144,128]{1,0:T(1,128)}', space=vmem, size = 0x12000, scoped, tag = 'internal scratch']
  #allocation2 [shape = 'f32[1,1]{1,0:T(1,128)S(6)}', space=smem, size = 0x200, scoped, tag = 'scoped memory for generator_forward.1']
  %s0 = inlined_call_operand.vmem [shape: f32[2,3,1,520], index: 0, kind: input, shape index: {}]
  %s1 = inlined_call_operand.vmem [shape: f32[64,3], index: 1, kind: input, shape index: {}]
  %s2 = inlined_call_operand.vmem [shape: f32[64,1], index: 2, kind: input, shape index: {}]
  %s3 = inlined_call_operand.vmem [shape: bf16[128,192], index: 3, kind: input, shape index: {}]
  %s4 = inlined_call_operand.vmem [shape: bf16[128,192], index: 4, kind: input, shape index: {}]
  %s5 = inlined_call_operand.vmem [shape: f32[128,1], index: 5, kind: input, shape index: {}]
  %s6 = inlined_call_operand.vmem [shape: bf16[64,384], index: 6, kind: input, shape index: {}]
  %s7 = inlined_call_operand.vmem [shape: bf16[64,384], index: 7, kind: input, shape index: {}]
  %s8 = inlined_call_operand.vmem [shape: f32[64,1], index: 8, kind: input, shape index: {}]
  %s9 = inlined_call_operand.vmem [shape: f32[64,3], index: 9, kind: input, shape index: {}]
  %s10 = inlined_call_operand.<no memory space> [shape: f32[1,1], index: 10, kind: input, shape index: {}]
  %s11 = inlined_call_operand.vmem [shape: f32[2,3,1,512], index: 11, kind: output, shape index: {}]
  %s12 = sld [smem:[#allocation0]]
  $region77: #{generator_forward.1} parent=0
    _
  %s14 = ssub.s32 1, %s12
  %s15 = scalar_select 0, %s14, %s12
  %16 = sst [smem:[#allocation2]] %s10
  loop: start=0, step=1, limit=8
  $region2: #{generator_forward.1} parent=0 // loop_pre_header
    _
  $region3: #{generator_forward.1} parent=0 // loop_header
    %s18 = sphi 0, %s22
    %p19 = scmp.ge.s32.totalorder %s18, 8
    %s25 = sphi 0, %s37
    %s26 = sphi 0, %s33
    %s27 = sphi 0, %s25
    %s28 = sphi 0, %s26
    %s29 = sphi 0, %s27
    %s30 = sphi 0, %s28
    %s42 = sphi 0, %s44
    %s45 = sphi 0, %s42
    %s46 = sphi 0, %s45
    %s62 = sphi 0, %s46
    %s66 = sphi 0, %s66
    %s68 = sphi 0, %s66
    %s69 = sphi 0, %s68
    %s83 = sphi 0, %s69
    %s87 = sphi 0, %s87
    %s89 = sphi 0, %s87
    %s90 = sphi 0, %s89
    %s104 = sphi 0, %s90
    %s108 = sphi 0, %s108
    %s110 = sphi 0, %s108
    %s111 = sphi 0, %s110
    %s125 = sphi 0, %s111
    %s129 = sphi 0, %s129
    %s131 = sphi 0, %s129
    %s132 = sphi 0, %s131
    %s146 = sphi 0, %s132
    %s150 = sphi 0, %s150
    %s152 = sphi 0, %s150
    %s153 = sphi 0, %s152
    %s167 = sphi 0, %s153
    %s171 = sphi 0, %s171
    %s173 = sphi 0, %s171
    %s174 = sphi 0, %s173
    %s188 = sphi 0, %s174
    %s192 = sphi 0, %s192
    %s194 = sphi 0, %s192
    %s195 = sphi 0, %s194
    %s209 = sphi 0, %s195
    %s213 = sphi 0, %s213
    %s215 = sphi 0, %s213
    %s216 = sphi 0, %s215
    %s230 = sphi 0, %s216
    %s234 = sphi 0, %s234
    %s236 = sphi 0, %s234
    %s237 = sphi 0, %s236
    %s251 = sphi 0, %s237
    %s255 = sphi 0, %s255
    %s257 = sphi 0, %s255
    %s258 = sphi 0, %s257
    %s272 = sphi 0, %s258
    %s280 = sphi 0, %s282
    %s283 = sphi 0, %s280
    %s284 = sphi 0, %s283
    %s300 = sphi 0, %s284
  $region4: #{generator_forward.1} parent=0 // loop_header_branch
    %21 = sbr.rel (%p19) target = $region8
  $region5: #{generator_forward.1} parent=0 // loop_body
    %s23 = ssub.s32 %s18, 1
    %s24 = ssub.s32 %s18, 2
    %s31 = sadd.s32 1, %s26
    %p32 = scmp.ge.s32.totalorder %s31, 3
    %s33 = scalar_select %p32, 0, %s31
    %s34 = sadd.s32 1, %s25
    %s35 = scalar_select %p32, %s34, %s25
    %p36 = scmp.ge.s32.totalorder %s35, 2
    %s37 = scalar_select %p36, 0, %s35
    %s38 = ssub.s32 %s25, %s37
    %s39 = ssub.s32 %s26, %s33
    %s40 = sor.u32 %s38, %s39
    %p41 = scmp.eq.s32.totalorder %s40, 0
    %s43 = sadd.s32 %s42, 1
    %s44 = scalar_select %p41, %s42, %s43
    %p47 = pneg %p41
    %p48 = scmp.eq.s32.totalorder %s18, 5
    %p49 = por %p47, %p48
    %p50 = scmp.ne.s32.totalorder %s42, %s45
    %p51 = scmp.eq.s32.totalorder %s18, 0
    %p52 = por %p50, %p51
    %p53 = scmp.ne.s32.totalorder %s42, %s45
    %p54 = scmp.eq.s32.totalorder %s23, 5
    %p55 = por %p53, %p54
    %p56 = scmp.ne.s32.totalorder %s45, %s46
    %p57 = scmp.eq.s32.totalorder %s23, 0
    %p58 = por %p56, %p57
    %p59 = scmp.ne.s32.totalorder %s45, %s46
    %p60 = scmp.eq.s32.totalorder %s24, 5
    %p61 = por %p59, %p60
    %p63 = scmp.ne.s32.totalorder %s46, %s62
    %p64 = scmp.eq.s32.totalorder %s24, 0
    %p65 = por %p63, %p64
    %s67 = sadd.s32 %s66, 1
    %p70 = scmp.eq.s32.totalorder %s18, 5
    %p71 = scmp.ne.s32.totalorder %s66, %s68
    %p72 = scmp.eq.s32.totalorder %s18, 0
    %p73 = por %p71, %p72
    %p74 = scmp.ne.s32.totalorder %s66, %s68
    %p75 = scmp.eq.s32.totalorder %s23, 5
    %p76 = por %p74, %p75
    %p77 = scmp.ne.s32.totalorder %s68, %s69
    %p78 = scmp.eq.s32.totalorder %s23, 0
    %p79 = por %p77, %p78
    %p80 = scmp.ne.s32.totalorder %s68, %s69
    %p81 = scmp.eq.s32.totalorder %s24, 5
    %p82 = por %p80, %p81
    %p84 = scmp.ne.s32.totalorder %s69, %s83
    %p85 = scmp.eq.s32.totalorder %s24, 0
    %p86 = por %p84, %p85
    %s88 = sadd.s32 %s87, 1
    %p91 = scmp.eq.s32.totalorder %s18, 5
    %p92 = scmp.ne.s32.totalorder %s87, %s89
    %p93 = scmp.eq.s32.totalorder %s18, 0
    %p94 = por %p92, %p93
    %p95 = scmp.ne.s32.totalorder %s87, %s89
    %p96 = scmp.eq.s32.totalorder %s23, 5
    %p97 = por %p95, %p96
    %p98 = scmp.ne.s32.totalorder %s89, %s90
    %p99 = scmp.eq.s32.totalorder %s23, 0
    %p100 = por %p98, %p99
    %p101 = scmp.ne.s32.totalorder %s89, %s90
    %p102 = scmp.eq.s32.totalorder %s24, 5
    %p103 = por %p101, %p102
    %p105 = scmp.ne.s32.totalorder %s90, %s104
    %p106 = scmp.eq.s32.totalorder %s24, 0
    %p107 = por %p105, %p106
    %s109 = sadd.s32 %s108, 1
    %p112 = scmp.eq.s32.totalorder %s18, 5
    %p113 = scmp.ne.s32.totalorder %s108, %s110
    %p114 = scmp.eq.s32.totalorder %s18, 0
    %p115 = por %p113, %p114
    %p116 = scmp.ne.s32.totalorder %s108, %s110
    %p117 = scmp.eq.s32.totalorder %s23, 5
    %p118 = por %p116, %p117
    %p119 = scmp.ne.s32.totalorder %s110, %s111
    %p120 = scmp.eq.s32.totalorder %s23, 0
    %p121 = por %p119, %p120
    %p122 = scmp.ne.s32.totalorder %s110, %s111
    %p123 = scmp.eq.s32.totalorder %s24, 5
    %p124 = por %p122, %p123
    %p126 = scmp.ne.s32.totalorder %s111, %s125
    %p127 = scmp.eq.s32.totalorder %s24, 0
    %p128 = por %p126, %p127
    %s130 = sadd.s32 %s129, 1
    %p133 = scmp.eq.s32.totalorder %s18, 5
    %p134 = scmp.ne.s32.totalorder %s129, %s131
    %p135 = scmp.eq.s32.totalorder %s18, 0
    %p136 = por %p134, %p135
    %p137 = scmp.ne.s32.totalorder %s129, %s131
    %p138 = scmp.eq.s32.totalorder %s23, 5
    %p139 = por %p137, %p138
    %p140 = scmp.ne.s32.totalorder %s131, %s132
    %p141 = scmp.eq.s32.totalorder %s23, 0
    %p142 = por %p140, %p141
    %p143 = scmp.ne.s32.totalorder %s131, %s132
    %p144 = scmp.eq.s32.totalorder %s24, 5
    %p145 = por %p143, %p144
    %p147 = scmp.ne.s32.totalorder %s132, %s146
    %p148 = scmp.eq.s32.totalorder %s24, 0
    %p149 = por %p147, %p148
    %s151 = sadd.s32 %s150, 1
    %p154 = scmp.eq.s32.totalorder %s18, 5
    %p155 = scmp.ne.s32.totalorder %s150, %s152
    %p156 = scmp.eq.s32.totalorder %s18, 0
    %p157 = por %p155, %p156
    %p158 = scmp.ne.s32.totalorder %s150, %s152
    %p159 = scmp.eq.s32.totalorder %s23, 5
    %p160 = por %p158, %p159
    %p161 = scmp.ne.s32.totalorder %s152, %s153
    %p162 = scmp.eq.s32.totalorder %s23, 0
    %p163 = por %p161, %p162
    %p164 = scmp.ne.s32.totalorder %s152, %s153
    %p165 = scmp.eq.s32.totalorder %s24, 5
    %p166 = por %p164, %p165
    %p168 = scmp.ne.s32.totalorder %s153, %s167
    %p169 = scmp.eq.s32.totalorder %s24, 0
    %p170 = por %p168, %p169
    %s172 = sadd.s32 %s171, 1
    %p175 = scmp.eq.s32.totalorder %s18, 5
    %p176 = scmp.ne.s32.totalorder %s171, %s173
    %p177 = scmp.eq.s32.totalorder %s18, 0
    %p178 = por %p176, %p177
    %p179 = scmp.ne.s32.totalorder %s171, %s173
    %p180 = scmp.eq.s32.totalorder %s23, 5
    %p181 = por %p179, %p180
    %p182 = scmp.ne.s32.totalorder %s173, %s174
    %p183 = scmp.eq.s32.totalorder %s23, 0
    %p184 = por %p182, %p183
    %p185 = scmp.ne.s32.totalorder %s173, %s174
    %p186 = scmp.eq.s32.totalorder %s24, 5
    %p187 = por %p185, %p186
    %p189 = scmp.ne.s32.totalorder %s174, %s188
    %p190 = scmp.eq.s32.totalorder %s24, 0
    %p191 = por %p189, %p190
    %s193 = sadd.s32 %s192, 1
    %p196 = scmp.eq.s32.totalorder %s18, 5
    %p197 = scmp.ne.s32.totalorder %s192, %s194
    %p198 = scmp.eq.s32.totalorder %s18, 0
    %p199 = por %p197, %p198
    %p200 = scmp.ne.s32.totalorder %s192, %s194
    %p201 = scmp.eq.s32.totalorder %s23, 5
    %p202 = por %p200, %p201
    %p203 = scmp.ne.s32.totalorder %s194, %s195
    %p204 = scmp.eq.s32.totalorder %s23, 0
    %p205 = por %p203, %p204
    %p206 = scmp.ne.s32.totalorder %s194, %s195
    %p207 = scmp.eq.s32.totalorder %s24, 5
    %p208 = por %p206, %p207
    %p210 = scmp.ne.s32.totalorder %s195, %s209
    %p211 = scmp.eq.s32.totalorder %s24, 0
    %p212 = por %p210, %p211
    %s214 = sadd.s32 %s213, 1
    %p217 = scmp.eq.s32.totalorder %s18, 5
    %p218 = scmp.ne.s32.totalorder %s213, %s215
    %p219 = scmp.eq.s32.totalorder %s18, 0
    %p220 = por %p218, %p219
    %p221 = scmp.ne.s32.totalorder %s213, %s215
    %p222 = scmp.eq.s32.totalorder %s23, 5
    %p223 = por %p221, %p222
    %p224 = scmp.ne.s32.totalorder %s215, %s216
    %p225 = scmp.eq.s32.totalorder %s23, 0
    %p226 = por %p224, %p225
    %p227 = scmp.ne.s32.totalorder %s215, %s216
    %p228 = scmp.eq.s32.totalorder %s24, 5
    %p229 = por %p227, %p228
    %p231 = scmp.ne.s32.totalorder %s216, %s230
    %p232 = scmp.eq.s32.totalorder %s24, 0
    %p233 = por %p231, %p232
    %s235 = sadd.s32 %s234, 1
    %p238 = scmp.eq.s32.totalorder %s18, 5
    %p239 = scmp.ne.s32.totalorder %s234, %s236
    %p240 = scmp.eq.s32.totalorder %s18, 0
    %p241 = por %p239, %p240
    %p242 = scmp.ne.s32.totalorder %s234, %s236
    %p243 = scmp.eq.s32.totalorder %s23, 5
    %p244 = por %p242, %p243
    %p245 = scmp.ne.s32.totalorder %s236, %s237
    %p246 = scmp.eq.s32.totalorder %s23, 0
    %p247 = por %p245, %p246
    %p248 = scmp.ne.s32.totalorder %s236, %s237
    %p249 = scmp.eq.s32.totalorder %s24, 5
    %p250 = por %p248, %p249
    %p252 = scmp.ne.s32.totalorder %s237, %s251
    %p253 = scmp.eq.s32.totalorder %s24, 0
    %p254 = por %p252, %p253
    %s256 = sadd.s32 %s255, 1
    %p259 = scmp.eq.s32.totalorder %s18, 5
    %p260 = scmp.ne.s32.totalorder %s255, %s257
    %p261 = scmp.eq.s32.totalorder %s18, 0
    %p262 = por %p260, %p261
    %p263 = scmp.ne.s32.totalorder %s255, %s257
    %p264 = scmp.eq.s32.totalorder %s23, 5
    %p265 = por %p263, %p264
    %p266 = scmp.ne.s32.totalorder %s257, %s258
    %p267 = scmp.eq.s32.totalorder %s23, 0
    %p268 = por %p266, %p267
    %p269 = scmp.ne.s32.totalorder %s257, %s258
    %p270 = scmp.eq.s32.totalorder %s24, 5
    %p271 = por %p269, %p270
    %p273 = scmp.ne.s32.totalorder %s258, %s272
    %p274 = scmp.eq.s32.totalorder %s24, 0
    %p275 = por %p273, %p274
    %s276 = ssub.s32 %s25, %s37
    %s277 = ssub.s32 %s26, %s33
    %s278 = sor.u32 %s276, %s277
    %p279 = scmp.eq.s32.totalorder %s278, 0
    %s281 = sadd.s32 %s280, 1
    %s282 = scalar_select %p279, %s280, %s281
    %p285 = pneg %p279
    %p286 = scmp.eq.s32.totalorder %s18, 5
    %p287 = por %p285, %p286
    %p288 = scmp.ne.s32.totalorder %s280, %s283
    %p289 = scmp.eq.s32.totalorder %s18, 0
    %p290 = por %p288, %p289
    %p291 = scmp.ne.s32.totalorder %s280, %s283
    %p292 = scmp.eq.s32.totalorder %s23, 5
    %p293 = por %p291, %p292
    %p294 = scmp.ne.s32.totalorder %s283, %s284
    %p295 = scmp.eq.s32.totalorder %s23, 0
    %p296 = por %p294, %p295
    %p297 = scmp.ne.s32.totalorder %s283, %s284
    %p298 = scmp.eq.s32.totalorder %s24, 5
    %p299 = por %p297, %p298
    %p301 = scmp.ne.s32.totalorder %s284, %s300
    %p302 = scmp.eq.s32.totalorder %s24, 0
    %p303 = por %p301, %p302
    %p304 = scmp.le.s32.totalorder 1, %s18
    %p305 = scmp.lt.s32.totalorder %s18, 7
    %p306 = pnand %p304, %p305
    %p307 = pneg %p306
    // Predicated region
    $region9: #{generator_forward.1} parent=5 // pred_check
      _
    $region10: #{generator_forward.1} parent=5 // pred_check_branch
      %309 = sbr.rel (%p306) target = $region12
    $region11: #{generator_forward.1} parent=5 // pred_region
      %s310 = ssub.s32 %s18, 1
      // Predicated region
      $region13: #{generator_forward.1} parent=11 // pred_check
        %p311 = pneg %p79
      $region14: #{generator_forward.1} parent=11 // pred_check_branch
        %313 = sbr.rel (%p311) target = $region16
      $region15: #{generator_forward.1} parent=11 // pred_region
        _
      $region16: #{generator_forward.1} parent=11 // pred_fallthru
        _
      // Predicated region
      $region17: #{generator_forward.1} parent=11 // pred_check
        %p314 = pneg %p100
      $region18: #{generator_forward.1} parent=11 // pred_check_branch
        %316 = sbr.rel (%p314) target = $region20
      $region19: #{generator_forward.1} parent=11 // pred_region
        _
      $region20: #{generator_forward.1} parent=11 // pred_fallthru
        _
      // Predicated region
      $region21: #{generator_forward.1} parent=11 // pred_check
        %p317 = pneg %p121
      $region22: #{generator_forward.1} parent=11 // pred_check_branch
        %319 = sbr.rel (%p317) target = $region24
      $region23: #{generator_forward.1} parent=11 // pred_region
        _
      $region24: #{generator_forward.1} parent=11 // pred_fallthru
        _
      // Predicated region
      $region25: #{generator_forward.1} parent=11 // pred_check
        %p320 = pneg %p142
      $region26: #{generator_forward.1} parent=11 // pred_check_branch
        %322 = sbr.rel (%p320) target = $region28
      $region27: #{generator_forward.1} parent=11 // pred_region
        _
      $region28: #{generator_forward.1} parent=11 // pred_fallthru
        _
      // Predicated region
      $region29: #{generator_forward.1} parent=11 // pred_check
        %p323 = pneg %p163
      $region30: #{generator_forward.1} parent=11 // pred_check_branch
        %325 = sbr.rel (%p323) target = $region32
      $region31: #{generator_forward.1} parent=11 // pred_region
        _
      $region32: #{generator_forward.1} parent=11 // pred_fallthru
        _
      // Predicated region
      $region33: #{generator_forward.1} parent=11 // pred_check
        %p326 = pneg %p184
      $region34: #{generator_forward.1} parent=11 // pred_check_branch
        %328 = sbr.rel (%p326) target = $region36
      $region35: #{generator_forward.1} parent=11 // pred_region
        _
      $region36: #{generator_forward.1} parent=11 // pred_fallthru
        _
      // Predicated region
      $region37: #{generator_forward.1} parent=11 // pred_check
        %p329 = pneg %p205
      $region38: #{generator_forward.1} parent=11 // pred_check_branch
        %331 = sbr.rel (%p329) target = $region40
      $region39: #{generator_forward.1} parent=11 // pred_region
        _
      $region40: #{generator_forward.1} parent=11 // pred_fallthru
        _
      // Predicated region
      $region41: #{generator_forward.1} parent=11 // pred_check
        %p332 = pneg %p226
      $region42: #{generator_forward.1} parent=11 // pred_check_branch
        %334 = sbr.rel (%p332) target = $region44
      $region43: #{generator_forward.1} parent=11 // pred_region
        _
      $region44: #{generator_forward.1} parent=11 // pred_fallthru
        _
      // Predicated region
      $region45: #{generator_forward.1} parent=11 // pred_check
        %p335 = pneg %p247
      $region46: #{generator_forward.1} parent=11 // pred_check_branch
        %337 = sbr.rel (%p335) target = $region48
      $region47: #{generator_forward.1} parent=11 // pred_region
        _
      $region48: #{generator_forward.1} parent=11 // pred_fallthru
        _
      // Predicated region
      $region49: #{generator_forward.1} parent=11 // pred_check
        %p338 = pneg %p268
      $region50: #{generator_forward.1} parent=11 // pred_check_branch
        %340 = sbr.rel (%p338) target = $region52
      $region51: #{generator_forward.1} parent=11 // pred_region
        _
      $region52: #{generator_forward.1} parent=11 // pred_fallthru
        _
    $region12: #{generator_forward.1} parent=5 // pred_fallthru
      _
    %p341 = scmp.lt.s32.totalorder %s18, 6
    // Predicated region
    $region53: #{generator_forward.1} parent=5 // pred_check
      %p342 = pneg %p341
    $region54: #{generator_forward.1} parent=5 // pred_check_branch
      %344 = sbr.rel (%p342) target = $region56
    $region55: #{generator_forward.1} parent=5 // pred_region
      // Predicated region
      $region57: #{generator_forward.1} parent=55 // pred_check
        %p345 = pneg %p52
      $region58: #{generator_forward.1} parent=55 // pred_check_branch
        %347 = sbr.rel (%p345) target = $region60
      $region59: #{generator_forward.1} parent=55 // pred_region
        %p348 = scmp.lt.s32.totalorder %s25, 1
        %s349 = scalar_select %p348, %s25, 1
        %p350 = scmp.lt.s32.totalorder %s26, 2
        %s351 = scalar_select %p350, %s26, 2
        %s352 = smul.addr %s351, 5
        %s353 = smul.addr %s349, 15
        %s354 = sadd.s32 %s352, %s353
        %s355 = scalar_lea.vmem %s0, %s354
      $region60: #{generator_forward.1} parent=55 // pred_fallthru
        _
    $region56: #{generator_forward.1} parent=5 // pred_fallthru
      _
    %p356 = scmp.le.s32.totalorder 1, %s18
    %p357 = scmp.lt.s32.totalorder %s18, 7
    %p358 = pnand %p356, %p357
    %p359 = pneg %p358
    // Predicated region
    $region61: #{generator_forward.1} parent=5 // pred_check
      _
    $region62: #{generator_forward.1} parent=5 // pred_check_branch
      %361 = sbr.rel (%p358) target = $region64
    $region63: #{generator_forward.1} parent=5 // pred_region
      %s362 = ssub.s32 %s18, 1
      %p363 = scmp.lt.s32.totalorder %s27, 1
      %s364 = scalar_select %p363, %s27, 1
      %p365 = scmp.lt.s32.totalorder %s28, 2
      %s366 = scalar_select %p365, %s28, 2
      %s367 = smul.addr %s366, 5
      %s368 = smul.addr %s364, 15
      %s369 = sadd.s32 %s367, %s368
      %s370 = scalar_lea.vmem %s0, %s369
      %p371 = pneg %p58
      %p372 = pneg %p55
      %p373 = pneg %p79
      %p374 = pneg %p76
      %p375 = pneg %p100
      %p376 = pneg %p97
      %p377 = pneg %p121
      %p378 = pneg %p118
      %p379 = pneg %p142
      %p380 = pneg %p139
      %p381 = pneg %p163
      %p382 = pneg %p160
      %p383 = pneg %p184
      %p384 = pneg %p181
      %p385 = pneg %p205
      %p386 = pneg %p202
      %p387 = pneg %p226
      %p388 = pneg %p223
      %p389 = pneg %p247
      %p390 = pneg %p244
      %p391 = pneg %p268
      %p392 = pneg %p265
      %p393 = pneg %p296
      %p394 = pneg %p293
      %p395 = scmp.lt.s32.totalorder %s27, 1
      %s396 = scalar_select %p395, %s27, 1
      %p397 = scmp.lt.s32.totalorder %s28, 2
      %s398 = scalar_select %p397, %s28, 2
      %s399 = smul.addr %s398, 4
      %s400 = smul.addr %s396, 12
      %s401 = sadd.s32 %s399, %s400
      %s402 = scalar_lea.vmem %s11, %s401
      %p403 = scmp.lt.s32.totalorder %s27, 1
      %s404 = scalar_select %p403, %s27, 1
      %p405 = scmp.lt.s32.totalorder %s28, 2
      %s406 = scalar_select %p405, %s28, 2
      %s407 = smul.addr %s406, 5
      %s408 = smul.addr %s404, 15
      %s409 = sadd.s32 %s407, %s408
      %s410 = scalar_lea.vmem %s0, %s409
      %p411 = scmp.lt.s32.totalorder %s27, 1
      %s412 = scalar_select %p411, %s27, 1
      %p413 = scmp.lt.s32.totalorder %s28, 2
      %s414 = scalar_select %p413, %s28, 2
      %s415 = smul.addr %s414, 4
      %s416 = smul.addr %s412, 12
      %s417 = sadd.s32 %s415, %s416
      %s418 = scalar_lea.vmem %s11, %s417
      %s420 = smul.u32 %s28, 512
      %v421 = vld [vmem:[%s410] sm:$0x1f]
      %v422 = vld [vmem:[%s1] sm:$0xff]
      %v423 = vld [vmem:[%s1 + $0x8] sm:$0xff]
      %v424 = vld [vmem:[%s1 + $0x10] sm:$0xff]
      %v425 = vld [vmem:[%s1 + $0x18] sm:$0xff]
      %v426 = vld [vmem:[%s1 + $0x20] sm:$0xff]
      %v427 = vld [vmem:[%s1 + $0x28] sm:$0xff]
      %v428 = vld [vmem:[%s1 + $0x30] sm:$0xff]
      %v429 = vld [vmem:[%s1 + $0x38] sm:$0xff]
      %431 = vset.pattern.permute.xlu0 0
      %432 = vperm.xlu0 %431, %v422
      %v433 = vpop.permute.xlu0 %432
      %436 = vset.pattern.permute.xlu0 0
      %437 = vperm.xlu0 %436, %v423
      %v438 = vpop.permute.xlu0 %437
      %441 = vset.pattern.permute.xlu0 0
      %442 = vperm.xlu0 %441, %v424
      %v443 = vpop.permute.xlu0 %442
      %446 = vset.pattern.permute.xlu0 0
      %447 = vperm.xlu0 %446, %v425
      %v448 = vpop.permute.xlu0 %447
      %451 = vset.pattern.permute.xlu0 0
      %452 = vperm.xlu0 %451, %v426
      %v453 = vpop.permute.xlu0 %452
      %456 = vset.pattern.permute.xlu0 0
      %457 = vperm.xlu0 %456, %v427
      %v458 = vpop.permute.xlu0 %457
      %461 = vset.pattern.permute.xlu0 0
      %462 = vperm.xlu0 %461, %v428
      %v463 = vpop.permute.xlu0 %462
      %466 = vset.pattern.permute.xlu0 0
      %467 = vperm.xlu0 %466, %v429
      %v468 = vpop.permute.xlu0 %467
      %v471 = vlaneseq
      %v472 = vshrl.u32 %v471, 7
      %v473 = vsub.s32 0, %v472
      %v474 = vrot.slane %v421, %v473
      %v475 = vlaneseq
      %v476 = vshrl.u32 %v475, 7
      %v477 = vsub.s32 1, %v476
      %v478 = vrot.slane %v421, %v477
      %v479 = vlaneseq
      %v480 = vshrl.u32 %v479, 7
      %v481 = vsub.s32 2, %v480
      %v482 = vrot.slane %v421, %v481
      %v483 = vlaneseq
      %v484 = vshrl.u32 %v483, 7
      %v485 = vsub.s32 3, %v484
      %v486 = vrot.slane %v421, %v485
      %v487 = vlaneseq
      %v488 = vshrl.u32 %v487, 7
      %v489 = vsub.s32 4, %v488
      %v490 = vrot.slane %v421, %v489
      %v496 = vmul.f32 %v433, %v474
      %v497 = vmul.f32 %v433, %v478
      %v498 = vmul.f32 %v433, %v482
      %v499 = vmul.f32 %v433, %v486
      %v500 = vmul.f32 %v433, %v490
      %v501 = vmul.f32 %v438, %v474
      %v502 = vmul.f32 %v438, %v478
      %v503 = vmul.f32 %v438, %v482
      %v504 = vmul.f32 %v438, %v486
      %v505 = vmul.f32 %v438, %v490
      %v506 = vmul.f32 %v443, %v474
      %v507 = vmul.f32 %v443, %v478
      %v508 = vmul.f32 %v443, %v482
      %v509 = vmul.f32 %v443, %v486
      %v510 = vmul.f32 %v443, %v490
      %v511 = vmul.f32 %v448, %v474
      %v512 = vmul.f32 %v448, %v478
      %v513 = vmul.f32 %v448, %v482
      %v514 = vmul.f32 %v448, %v486
      %v515 = vmul.f32 %v448, %v490
      %v516 = vmul.f32 %v453, %v474
      %v517 = vmul.f32 %v453, %v478
      %v518 = vmul.f32 %v453, %v482
      %v519 = vmul.f32 %v453, %v486
      %v520 = vmul.f32 %v453, %v490
      %v521 = vmul.f32 %v458, %v474
      %v522 = vmul.f32 %v458, %v478
      %v523 = vmul.f32 %v458, %v482
      %v524 = vmul.f32 %v458, %v486
      %v525 = vmul.f32 %v458, %v490
      %v526 = vmul.f32 %v463, %v474
      %v527 = vmul.f32 %v463, %v478
      %v528 = vmul.f32 %v463, %v482
      %v529 = vmul.f32 %v463, %v486
      %v530 = vmul.f32 %v463, %v490
      %v531 = vmul.f32 %v468, %v474
      %v532 = vmul.f32 %v468, %v478
      %v533 = vmul.f32 %v468, %v482
      %v534 = vmul.f32 %v468, %v486
      %v535 = vmul.f32 %v468, %v490
      %536 = vset.pattern.permute.xlu0 1
      %537 = vperm.xlu0 %536, %v422
      %v538 = vpop.permute.xlu0 %537
      %540 = vset.pattern.permute.xlu0 1
      %541 = vperm.xlu0 %540, %v423
      %v542 = vpop.permute.xlu0 %541
      %544 = vset.pattern.permute.xlu0 1
      %545 = vperm.xlu0 %544, %v424
      %v546 = vpop.permute.xlu0 %545
      %548 = vset.pattern.permute.xlu0 1
      %549 = vperm.xlu0 %548, %v425
      %v550 = vpop.permute.xlu0 %549
      %552 = vset.pattern.permute.xlu0 1
      %553 = vperm.xlu0 %552, %v426
      %v554 = vpop.permute.xlu0 %553
      %556 = vset.pattern.permute.xlu0 1
      %557 = vperm.xlu0 %556, %v427
      %v558 = vpop.permute.xlu0 %557
      %560 = vset.pattern.permute.xlu0 1
      %561 = vperm.xlu0 %560, %v428
      %v562 = vpop.permute.xlu0 %561
      %564 = vset.pattern.permute.xlu0 1
      %565 = vperm.xlu0 %564, %v429
      %v566 = vpop.permute.xlu0 %565
      %v568 = vmul.f32 %v538, %v474
      %v569 = vmul.f32 %v538, %v478
      %v570 = vmul.f32 %v538, %v482
      %v571 = vmul.f32 %v538, %v486
      %v572 = vmul.f32 %v538, %v490
      %v573 = vmul.f32 %v542, %v474
      %v574 = vmul.f32 %v542, %v478
      %v575 = vmul.f32 %v542, %v482
      %v576 = vmul.f32 %v542, %v486
      %v577 = vmul.f32 %v542, %v490
      %v578 = vmul.f32 %v546, %v474
      %v579 = vmul.f32 %v546, %v478
      %v580 = vmul.f32 %v546, %v482
      %v581 = vmul.f32 %v546, %v486
      %v582 = vmul.f32 %v546, %v490
      %v583 = vmul.f32 %v550, %v474
      %v584 = vmul.f32 %v550, %v478
      %v585 = vmul.f32 %v550, %v482
      %v586 = vmul.f32 %v550, %v486
      %v587 = vmul.f32 %v550, %v490
      %v588 = vmul.f32 %v554, %v474
      %v589 = vmul.f32 %v554, %v478
      %v590 = vmul.f32 %v554, %v482
      %v591 = vmul.f32 %v554, %v486
      %v592 = vmul.f32 %v554, %v490
      %v593 = vmul.f32 %v558, %v474
      %v594 = vmul.f32 %v558, %v478
      %v595 = vmul.f32 %v558, %v482
      %v596 = vmul.f32 %v558, %v486
      %v597 = vmul.f32 %v558, %v490
      %v598 = vmul.f32 %v562, %v474
      %v599 = vmul.f32 %v562, %v478
      %v600 = vmul.f32 %v562, %v482
      %v601 = vmul.f32 %v562, %v486
      %v602 = vmul.f32 %v562, %v490
      %v603 = vmul.f32 %v566, %v474
      %v604 = vmul.f32 %v566, %v478
      %v605 = vmul.f32 %v566, %v482
      %v606 = vmul.f32 %v566, %v486
      %v607 = vmul.f32 %v566, %v490
      %648 = vrot.lane.b32.xlu0 %v568, 127
      %v649 = vpop.permute.xlu0 %648
      %650 = vrot.lane.b32.xlu0 %v569, 127
      %v651 = vpop.permute.xlu0 %650
      %652 = vrot.lane.b32.xlu0 %v570, 127
      %v653 = vpop.permute.xlu0 %652
      %654 = vrot.lane.b32.xlu0 %v571, 127
      %v655 = vpop.permute.xlu0 %654
      %656 = vrot.lane.b32.xlu0 %v572, 127
      %v657 = vpop.permute.xlu0 %656
      %658 = vrot.lane.b32.xlu0 %v573, 127
      %v659 = vpop.permute.xlu0 %658
      %660 = vrot.lane.b32.xlu0 %v574, 127
      %v661 = vpop.permute.xlu0 %660
      %662 = vrot.lane.b32.xlu0 %v575, 127
      %v663 = vpop.permute.xlu0 %662
      %664 = vrot.lane.b32.xlu0 %v576, 127
      %v665 = vpop.permute.xlu0 %664
      %666 = vrot.lane.b32.xlu0 %v577, 127
      %v667 = vpop.permute.xlu0 %666
      %668 = vrot.lane.b32.xlu0 %v578, 127
      %v669 = vpop.permute.xlu0 %668
      %670 = vrot.lane.b32.xlu0 %v579, 127
      %v671 = vpop.permute.xlu0 %670
      %672 = vrot.lane.b32.xlu0 %v580, 127
      %v673 = vpop.permute.xlu0 %672
      %674 = vrot.lane.b32.xlu0 %v581, 127
      %v675 = vpop.permute.xlu0 %674
      %676 = vrot.lane.b32.xlu0 %v582, 127
      %v677 = vpop.permute.xlu0 %676
      %678 = vrot.lane.b32.xlu0 %v583, 127
      %v679 = vpop.permute.xlu0 %678
      %680 = vrot.lane.b32.xlu0 %v584, 127
      %v681 = vpop.permute.xlu0 %680
      %682 = vrot.lane.b32.xlu0 %v585, 127
      %v683 = vpop.permute.xlu0 %682
      %684 = vrot.lane.b32.xlu0 %v586, 127
      %v685 = vpop.permute.xlu0 %684
      %686 = vrot.lane.b32.xlu0 %v587, 127
      %v687 = vpop.permute.xlu0 %686
      %688 = vrot.lane.b32.xlu0 %v588, 127
      %v689 = vpop.permute.xlu0 %688
      %690 = vrot.lane.b32.xlu0 %v589, 127
      %v691 = vpop.permute.xlu0 %690
      %692 = vrot.lane.b32.xlu0 %v590, 127
      %v693 = vpop.permute.xlu0 %692
      %694 = vrot.lane.b32.xlu0 %v591, 127
      %v695 = vpop.permute.xlu0 %694
      %696 = vrot.lane.b32.xlu0 %v592, 127
      %v697 = vpop.permute.xlu0 %696
      %698 = vrot.lane.b32.xlu0 %v593, 127
      %v699 = vpop.permute.xlu0 %698
      %700 = vrot.lane.b32.xlu0 %v594, 127
      %v701 = vpop.permute.xlu0 %700
      %702 = vrot.lane.b32.xlu0 %v595, 127
      %v703 = vpop.permute.xlu0 %702
      %704 = vrot.lane.b32.xlu0 %v596, 127
      %v705 = vpop.permute.xlu0 %704
      %706 = vrot.lane.b32.xlu0 %v597, 127
      %v707 = vpop.permute.xlu0 %706
      %708 = vrot.lane.b32.xlu0 %v598, 127
      %v709 = vpop.permute.xlu0 %708
      %710 = vrot.lane.b32.xlu0 %v599, 127
      %v711 = vpop.permute.xlu0 %710
      %712 = vrot.lane.b32.xlu0 %v600, 127
      %v713 = vpop.permute.xlu0 %712
      %714 = vrot.lane.b32.xlu0 %v601, 127
      %v715 = vpop.permute.xlu0 %714
      %716 = vrot.lane.b32.xlu0 %v602, 127
      %v717 = vpop.permute.xlu0 %716
      %718 = vrot.lane.b32.xlu0 %v603, 127
      %v719 = vpop.permute.xlu0 %718
      %720 = vrot.lane.b32.xlu0 %v604, 127
      %v721 = vpop.permute.xlu0 %720
      %722 = vrot.lane.b32.xlu0 %v605, 127
      %v723 = vpop.permute.xlu0 %722
      %724 = vrot.lane.b32.xlu0 %v606, 127
      %v725 = vpop.permute.xlu0 %724
      %726 = vrot.lane.b32.xlu0 %v607, 127
      %v727 = vpop.permute.xlu0 %726
      %vm728 = vcmask 1039360
      %v729 = vsel %vm728, %v649, %v651
      %v730 = vsel %vm728, %v651, %v653
      %v731 = vsel %vm728, %v653, %v655
      %v732 = vsel %vm728, %v655, %v657
      %v733 = vsel %vm728, %v659, %v661
      %v734 = vsel %vm728, %v661, %v663
      %v735 = vsel %vm728, %v663, %v665
      %v736 = vsel %vm728, %v665, %v667
      %v737 = vsel %vm728, %v669, %v671
      %v738 = vsel %vm728, %v671, %v673
      %v739 = vsel %vm728, %v673, %v675
      %v740 = vsel %vm728, %v675, %v677
      %v741 = vsel %vm728, %v679, %v681
      %v742 = vsel %vm728, %v681, %v683
      %v743 = vsel %vm728, %v683, %v685
      %v744 = vsel %vm728, %v685, %v687
      %v745 = vsel %vm728, %v689, %v691
      %v746 = vsel %vm728, %v691, %v693
      %v747 = vsel %vm728, %v693, %v695
      %v748 = vsel %vm728, %v695, %v697
      %v749 = vsel %vm728, %v699, %v701
      %v750 = vsel %vm728, %v701, %v703
      %v751 = vsel %vm728, %v703, %v705
      %v752 = vsel %vm728, %v705, %v707
      %v753 = vsel %vm728, %v709, %v711
      %v754 = vsel %vm728, %v711, %v713
      %v755 = vsel %vm728, %v713, %v715
      %v756 = vsel %vm728, %v715, %v717
      %v757 = vsel %vm728, %v719, %v721
      %v758 = vsel %vm728, %v721, %v723
      %v759 = vsel %vm728, %v723, %v725
      %v760 = vsel %vm728, %v725, %v727
      %v801 = vadd.f32 %v496, %v729
      %v802 = vadd.f32 %v497, %v730
      %v803 = vadd.f32 %v498, %v731
      %v804 = vadd.f32 %v499, %v732
      %v805 = vadd.f32 %v500, %v657
      %v806 = vadd.f32 %v501, %v733
      %v807 = vadd.f32 %v502, %v734
      %v808 = vadd.f32 %v503, %v735
      %v809 = vadd.f32 %v504, %v736
      %v810 = vadd.f32 %v505, %v667
      %v811 = vadd.f32 %v506, %v737
      %v812 = vadd.f32 %v507, %v738
      %v813 = vadd.f32 %v508, %v739
      %v814 = vadd.f32 %v509, %v740
      %v815 = vadd.f32 %v510, %v677
      %v816 = vadd.f32 %v511, %v741
      %v817 = vadd.f32 %v512, %v742
      %v818 = vadd.f32 %v513, %v743
      %v819 = vadd.f32 %v514, %v744
      %v820 = vadd.f32 %v515, %v687
      %v821 = vadd.f32 %v516, %v745
      %v822 = vadd.f32 %v517, %v746
      %v823 = vadd.f32 %v518, %v747
      %v824 = vadd.f32 %v519, %v748
      %v825 = vadd.f32 %v520, %v697
      %v826 = vadd.f32 %v521, %v749
      %v827 = vadd.f32 %v522, %v750
      %v828 = vadd.f32 %v523, %v751
      %v829 = vadd.f32 %v524, %v752
      %v830 = vadd.f32 %v525, %v707
      %v831 = vadd.f32 %v526, %v753
      %v832 = vadd.f32 %v527, %v754
      %v833 = vadd.f32 %v528, %v755
      %v834 = vadd.f32 %v529, %v756
      %v835 = vadd.f32 %v530, %v717
      %v836 = vadd.f32 %v531, %v757
      %v837 = vadd.f32 %v532, %v758
      %v838 = vadd.f32 %v533, %v759
      %v839 = vadd.f32 %v534, %v760
      %v840 = vadd.f32 %v535, %v727
      %841 = vset.pattern.permute.xlu0 2
      %842 = vperm.xlu0 %841, %v422
      %v843 = vpop.permute.xlu0 %842
      %845 = vset.pattern.permute.xlu0 2
      %846 = vperm.xlu0 %845, %v423
      %v847 = vpop.permute.xlu0 %846
      %849 = vset.pattern.permute.xlu0 2
      %850 = vperm.xlu0 %849, %v424
      %v851 = vpop.permute.xlu0 %850
      %853 = vset.pattern.permute.xlu0 2
      %854 = vperm.xlu0 %853, %v425
      %v855 = vpop.permute.xlu0 %854
      %857 = vset.pattern.permute.xlu0 2
      %858 = vperm.xlu0 %857, %v426
      %v859 = vpop.permute.xlu0 %858
      %861 = vset.pattern.permute.xlu0 2
      %862 = vperm.xlu0 %861, %v427
      %v863 = vpop.permute.xlu0 %862
      %865 = vset.pattern.permute.xlu0 2
      %866 = vperm.xlu0 %865, %v428
      %v867 = vpop.permute.xlu0 %866
      %869 = vset.pattern.permute.xlu0 2
      %870 = vperm.xlu0 %869, %v429
      %v871 = vpop.permute.xlu0 %870
      %v873 = vmul.f32 %v843, %v474
      %v874 = vmul.f32 %v843, %v478
      %v875 = vmul.f32 %v843, %v482
      %v876 = vmul.f32 %v843, %v486
      %v877 = vmul.f32 %v843, %v490
      %v878 = vmul.f32 %v847, %v474
      %v879 = vmul.f32 %v847, %v478
      %v880 = vmul.f32 %v847, %v482
      %v881 = vmul.f32 %v847, %v486
      %v882 = vmul.f32 %v847, %v490
      %v883 = vmul.f32 %v851, %v474
      %v884 = vmul.f32 %v851, %v478
      %v885 = vmul.f32 %v851, %v482
      %v886 = vmul.f32 %v851, %v486
      %v887 = vmul.f32 %v851, %v490
      %v888 = vmul.f32 %v855, %v474
      %v889 = vmul.f32 %v855, %v478
      %v890 = vmul.f32 %v855, %v482
      %v891 = vmul.f32 %v855, %v486
      %v892 = vmul.f32 %v855, %v490
      %v893 = vmul.f32 %v859, %v474
      %v894 = vmul.f32 %v859, %v478
      %v895 = vmul.f32 %v859, %v482
      %v896 = vmul.f32 %v859, %v486
      %v897 = vmul.f32 %v859, %v490
      %v898 = vmul.f32 %v863, %v474
      %v899 = vmul.f32 %v863, %v478
      %v900 = vmul.f32 %v863, %v482
      %v901 = vmul.f32 %v863, %v486
      %v902 = vmul.f32 %v863, %v490
      %v903 = vmul.f32 %v867, %v474
      %v904 = vmul.f32 %v867, %v478
      %v905 = vmul.f32 %v867, %v482
      %v906 = vmul.f32 %v867, %v486
      %v907 = vmul.f32 %v867, %v490
      %v908 = vmul.f32 %v871, %v474
      %v909 = vmul.f32 %v871, %v478
      %v910 = vmul.f32 %v871, %v482
      %v911 = vmul.f32 %v871, %v486
      %v912 = vmul.f32 %v871, %v490
      %953 = vrot.lane.b32.xlu0 %v873, 126
      %v954 = vpop.permute.xlu0 %953
      %955 = vrot.lane.b32.xlu0 %v874, 126
      %v956 = vpop.permute.xlu0 %955
      %957 = vrot.lane.b32.xlu0 %v875, 126
      %v958 = vpop.permute.xlu0 %957
      %959 = vrot.lane.b32.xlu0 %v876, 126
      %v960 = vpop.permute.xlu0 %959
      %961 = vrot.lane.b32.xlu0 %v877, 126
      %v962 = vpop.permute.xlu0 %961
      %963 = vrot.lane.b32.xlu0 %v878, 126
      %v964 = vpop.permute.xlu0 %963
      %965 = vrot.lane.b32.xlu0 %v879, 126
      %v966 = vpop.permute.xlu0 %965
      %967 = vrot.lane.b32.xlu0 %v880, 126
      %v968 = vpop.permute.xlu0 %967
      %969 = vrot.lane.b32.xlu0 %v881, 126
      %v970 = vpop.permute.xlu0 %969
      %971 = vrot.lane.b32.xlu0 %v882, 126
      %v972 = vpop.permute.xlu0 %971
      %973 = vrot.lane.b32.xlu0 %v883, 126
      %v974 = vpop.permute.xlu0 %973
      %975 = vrot.lane.b32.xlu0 %v884, 126
      %v976 = vpop.permute.xlu0 %975
      %977 = vrot.lane.b32.xlu0 %v885, 126
      %v978 = vpop.permute.xlu0 %977
      %979 = vrot.lane.b32.xlu0 %v886, 126
      %v980 = vpop.permute.xlu0 %979
      %981 = vrot.lane.b32.xlu0 %v887, 126
      %v982 = vpop.permute.xlu0 %981
      %983 = vrot.lane.b32.xlu0 %v888, 126
      %v984 = vpop.permute.xlu0 %983
      %985 = vrot.lane.b32.xlu0 %v889, 126
      %v986 = vpop.permute.xlu0 %985
      %987 = vrot.lane.b32.xlu0 %v890, 126
      %v988 = vpop.permute.xlu0 %987
      %989 = vrot.lane.b32.xlu0 %v891, 126
      %v990 = vpop.permute.xlu0 %989
      %991 = vrot.lane.b32.xlu0 %v892, 126
      %v992 = vpop.permute.xlu0 %991
      %993 = vrot.lane.b32.xlu0 %v893, 126
      %v994 = vpop.permute.xlu0 %993
      %995 = vrot.lane.b32.xlu0 %v894, 126
      %v996 = vpop.permute.xlu0 %995
      %997 = vrot.lane.b32.xlu0 %v895, 126
      %v998 = vpop.permute.xlu0 %997
      %999 = vrot.lane.b32.xlu0 %v896, 126
      %v1000 = vpop.permute.xlu0 %999
      %1001 = vrot.lane.b32.xlu0 %v897, 126
      %v1002 = vpop.permute.xlu0 %1001
      %1003 = vrot.lane.b32.xlu0 %v898, 126
      %v1004 = vpop.permute.xlu0 %1003
      %1005 = vrot.lane.b32.xlu0 %v899, 126
      %v1006 = vpop.permute.xlu0 %1005
      %1007 = vrot.lane.b32.xlu0 %v900, 126
      %v1008 = vpop.permute.xlu0 %1007
      %1009 = vrot.lane.b32.xlu0 %v901, 126
      %v1010 = vpop.permute.xlu0 %1009
      %1011 = vrot.lane.b32.xlu0 %v902, 126
      %v1012 = vpop.permute.xlu0 %1011
      %1013 = vrot.lane.b32.xlu0 %v903, 126
      %v1014 = vpop.permute.xlu0 %1013
      %1015 = vrot.lane.b32.xlu0 %v904, 126
      %v1016 = vpop.permute.xlu0 %1015
      %1017 = vrot.lane.b32.xlu0 %v905, 126
      %v1018 = vpop.permute.xlu0 %1017
      %1019 = vrot.lane.b32.xlu0 %v906, 126
      %v1020 = vpop.permute.xlu0 %1019
      %1021 = vrot.lane.b32.xlu0 %v907, 126
      %v1022 = vpop.permute.xlu0 %1021
      %1023 = vrot.lane.b32.xlu0 %v908, 126
      %v1024 = vpop.permute.xlu0 %1023
      %1025 = vrot.lane.b32.xlu0 %v909, 126
      %v1026 = vpop.permute.xlu0 %1025
      %1027 = vrot.lane.b32.xlu0 %v910, 126
      %v1028 = vpop.permute.xlu0 %1027
      %1029 = vrot.lane.b32.xlu0 %v911, 126
      %v1030 = vpop.permute.xlu0 %1029
      %1031 = vrot.lane.b32.xlu0 %v912, 126
      %v1032 = vpop.permute.xlu0 %1031
      %vm1033 = vcmask 1031168
      %v1034 = vsel %vm1033, %v954, %v956
      %v1035 = vsel %vm1033, %v956, %v958
      %v1036 = vsel %vm1033, %v958, %v960
      %v1037 = vsel %vm1033, %v960, %v962
      %v1038 = vsel %vm1033, %v964, %v966
      %v1039 = vsel %vm1033, %v966, %v968
      %v1040 = vsel %vm1033, %v968, %v970
      %v1041 = vsel %vm1033, %v970, %v972
      %v1042 = vsel %vm1033, %v974, %v976
      %v1043 = vsel %vm1033, %v976, %v978
      %v1044 = vsel %vm1033, %v978, %v980
      %v1045 = vsel %vm1033, %v980, %v982
      %v1046 = vsel %vm1033, %v984, %v986
      %v1047 = vsel %vm1033, %v986, %v988
      %v1048 = vsel %vm1033, %v988, %v990
      %v1049 = vsel %vm1033, %v990, %v992
      %v1050 = vsel %vm1033, %v994, %v996
      %v1051 = vsel %vm1033, %v996, %v998
      %v1052 = vsel %vm1033, %v998, %v1000
      %v1053 = vsel %vm1033, %v1000, %v1002
      %v1054 = vsel %vm1033, %v1004, %v1006
      %v1055 = vsel %vm1033, %v1006, %v1008
      %v1056 = vsel %vm1033, %v1008, %v1010
      %v1057 = vsel %vm1033, %v1010, %v1012
      %v1058 = vsel %vm1033, %v1014, %v1016
      %v1059 = vsel %vm1033, %v1016, %v1018
      %v1060 = vsel %vm1033, %v1018, %v1020
      %v1061 = vsel %vm1033, %v1020, %v1022
      %v1062 = vsel %vm1033, %v1024, %v1026
      %v1063 = vsel %vm1033, %v1026, %v1028
      %v1064 = vsel %vm1033, %v1028, %v1030
      %v1065 = vsel %vm1033, %v1030, %v1032
      %v1106 = vadd.f32 %v801, %v1034
      %v1107 = vadd.f32 %v802, %v1035
      %v1108 = vadd.f32 %v803, %v1036
      %v1109 = vadd.f32 %v804, %v1037
      %v1110 = vadd.f32 %v805, %v962
      %v1111 = vadd.f32 %v806, %v1038
      %v1112 = vadd.f32 %v807, %v1039
      %v1113 = vadd.f32 %v808, %v1040
      %v1114 = vadd.f32 %v809, %v1041
      %v1115 = vadd.f32 %v810, %v972
      %v1116 = vadd.f32 %v811, %v1042
      %v1117 = vadd.f32 %v812, %v1043
      %v1118 = vadd.f32 %v813, %v1044
      %v1119 = vadd.f32 %v814, %v1045
      %v1120 = vadd.f32 %v815, %v982
      %v1121 = vadd.f32 %v816, %v1046
      %v1122 = vadd.f32 %v817, %v1047
      %v1123 = vadd.f32 %v818, %v1048
      %v1124 = vadd.f32 %v819, %v1049
      %v1125 = vadd.f32 %v820, %v992
      %v1126 = vadd.f32 %v821, %v1050
      %v1127 = vadd.f32 %v822, %v1051
      %v1128 = vadd.f32 %v823, %v1052
      %v1129 = vadd.f32 %v824, %v1053
      %v1130 = vadd.f32 %v825, %v1002
      %v1131 = vadd.f32 %v826, %v1054
      %v1132 = vadd.f32 %v827, %v1055
      %v1133 = vadd.f32 %v828, %v1056
      %v1134 = vadd.f32 %v829, %v1057
      %v1135 = vadd.f32 %v830, %v1012
      %v1136 = vadd.f32 %v831, %v1058
      %v1137 = vadd.f32 %v832, %v1059
      %v1138 = vadd.f32 %v833, %v1060
      %v1139 = vadd.f32 %v834, %v1061
      %v1140 = vadd.f32 %v835, %v1022
      %v1141 = vadd.f32 %v836, %v1062
      %v1142 = vadd.f32 %v837, %v1063
      %v1143 = vadd.f32 %v838, %v1064
      %v1144 = vadd.f32 %v839, %v1065
      %v1145 = vadd.f32 %v840, %v1032
      %v1146 = vld [vmem:[%s2] sm:$0xff]
      %v1147 = vld [vmem:[%s2 + $0x8] sm:$0xff]
      %v1148 = vld [vmem:[%s2 + $0x10] sm:$0xff]
      %v1149 = vld [vmem:[%s2 + $0x18] sm:$0xff]
      %v1150 = vld [vmem:[%s2 + $0x20] sm:$0xff]
      %v1151 = vld [vmem:[%s2 + $0x28] sm:$0xff]
      %v1152 = vld [vmem:[%s2 + $0x30] sm:$0xff]
      %v1153 = vld [vmem:[%s2 + $0x38] sm:$0xff]
      %1155 = vset.pattern.permute.xlu0 0
      %1156 = vperm.xlu0 %1155, %v1146
      %v1157 = vpop.permute.xlu0 %1156
      %1160 = vset.pattern.permute.xlu0 0
      %1161 = vperm.xlu0 %1160, %v1147
      %v1162 = vpop.permute.xlu0 %1161
      %1165 = vset.pattern.permute.xlu0 0
      %1166 = vperm.xlu0 %1165, %v1148
      %v1167 = vpop.permute.xlu0 %1166
      %1170 = vset.pattern.permute.xlu0 0
      %1171 = vperm.xlu0 %1170, %v1149
      %v1172 = vpop.permute.xlu0 %1171
      %1175 = vset.pattern.permute.xlu0 0
      %1176 = vperm.xlu0 %1175, %v1150
      %v1177 = vpop.permute.xlu0 %1176
      %1180 = vset.pattern.permute.xlu0 0
      %1181 = vperm.xlu0 %1180, %v1151
      %v1182 = vpop.permute.xlu0 %1181
      %1185 = vset.pattern.permute.xlu0 0
      %1186 = vperm.xlu0 %1185, %v1152
      %v1187 = vpop.permute.xlu0 %1186
      %1190 = vset.pattern.permute.xlu0 0
      %1191 = vperm.xlu0 %1190, %v1153
      %v1192 = vpop.permute.xlu0 %1191
      %v1194 = vadd.f32 %v1106, %v1157
      %v1195 = vadd.f32 %v1107, %v1157
      %v1196 = vadd.f32 %v1108, %v1157
      %v1197 = vadd.f32 %v1109, %v1157
      %v1198 = vadd.f32 %v1110, %v1157
      %v1199 = vadd.f32 %v1111, %v1162
      %v1200 = vadd.f32 %v1112, %v1162
      %v1201 = vadd.f32 %v1113, %v1162
      %v1202 = vadd.f32 %v1114, %v1162
      %v1203 = vadd.f32 %v1115, %v1162
      %v1204 = vadd.f32 %v1116, %v1167
      %v1205 = vadd.f32 %v1117, %v1167
      %v1206 = vadd.f32 %v1118, %v1167
      %v1207 = vadd.f32 %v1119, %v1167
      %v1208 = vadd.f32 %v1120, %v1167
      %v1209 = vadd.f32 %v1121, %v1172
      %v1210 = vadd.f32 %v1122, %v1172
      %v1211 = vadd.f32 %v1123, %v1172
      %v1212 = vadd.f32 %v1124, %v1172
      %v1213 = vadd.f32 %v1125, %v1172
      %v1214 = vadd.f32 %v1126, %v1177
      %v1215 = vadd.f32 %v1127, %v1177
      %v1216 = vadd.f32 %v1128, %v1177
      %v1217 = vadd.f32 %v1129, %v1177
      %v1218 = vadd.f32 %v1130, %v1177
      %v1219 = vadd.f32 %v1131, %v1182
      %v1220 = vadd.f32 %v1132, %v1182
      %v1221 = vadd.f32 %v1133, %v1182
      %v1222 = vadd.f32 %v1134, %v1182
      %v1223 = vadd.f32 %v1135, %v1182
      %v1224 = vadd.f32 %v1136, %v1187
      %v1225 = vadd.f32 %v1137, %v1187
      %v1226 = vadd.f32 %v1138, %v1187
      %v1227 = vadd.f32 %v1139, %v1187
      %v1228 = vadd.f32 %v1140, %v1187
      %v1229 = vadd.f32 %v1141, %v1192
      %v1230 = vadd.f32 %v1142, %v1192
      %v1231 = vadd.f32 %v1143, %v1192
      %v1232 = vadd.f32 %v1144, %v1192
      %v1233 = vadd.f32 %v1145, %v1192
      %v1234 = vmax.f32 %v1194, 0.0
      %v1235 = vmax.f32 %v1195, 0.0
      %v1236 = vmax.f32 %v1196, 0.0
      %v1237 = vmax.f32 %v1197, 0.0
      %v1238 = vmax.f32 %v1198, 0.0
      %v1239 = vmax.f32 %v1199, 0.0
      %v1240 = vmax.f32 %v1200, 0.0
      %v1241 = vmax.f32 %v1201, 0.0
      %v1242 = vmax.f32 %v1202, 0.0
      %v1243 = vmax.f32 %v1203, 0.0
      %v1244 = vmax.f32 %v1204, 0.0
      %v1245 = vmax.f32 %v1205, 0.0
      %v1246 = vmax.f32 %v1206, 0.0
      %v1247 = vmax.f32 %v1207, 0.0
      %v1248 = vmax.f32 %v1208, 0.0
      %v1249 = vmax.f32 %v1209, 0.0
      %v1250 = vmax.f32 %v1210, 0.0
      %v1251 = vmax.f32 %v1211, 0.0
      %v1252 = vmax.f32 %v1212, 0.0
      %v1253 = vmax.f32 %v1213, 0.0
      %v1254 = vmax.f32 %v1214, 0.0
      %v1255 = vmax.f32 %v1215, 0.0
      %v1256 = vmax.f32 %v1216, 0.0
      %v1257 = vmax.f32 %v1217, 0.0
      %v1258 = vmax.f32 %v1218, 0.0
      %v1259 = vmax.f32 %v1219, 0.0
      %v1260 = vmax.f32 %v1220, 0.0
      %v1261 = vmax.f32 %v1221, 0.0
      %v1262 = vmax.f32 %v1222, 0.0
      %v1263 = vmax.f32 %v1223, 0.0
      %v1264 = vmax.f32 %v1224, 0.0
      %v1265 = vmax.f32 %v1225, 0.0
      %v1266 = vmax.f32 %v1226, 0.0
      %v1267 = vmax.f32 %v1227, 0.0
      %v1268 = vmax.f32 %v1228, 0.0
      %v1269 = vmax.f32 %v1229, 0.0
      %v1270 = vmax.f32 %v1230, 0.0
      %v1271 = vmax.f32 %v1231, 0.0
      %v1272 = vmax.f32 %v1232, 0.0
      %v1273 = vmax.f32 %v1233, 0.0
      %s1274 = ssub.s32 %s420, 3
      %v1275 = vlaneseq
      %v1276 = vand.u32 %v1275, 127
      %v1277 = vadd.s32 %v1276, 128
      %v1278 = vadd.s32 %v1276, 256
      %v1279 = vadd.s32 %v1276, 384
      %v1280 = vadd.s32 %v1276, 512
      %v1281 = vstv %s1274
      %v1282 = vadd.s32 %v1281, %v1276
      %v1283 = vadd.s32 %v1281, %v1277
      %v1284 = vadd.s32 %v1281, %v1278
      %v1285 = vadd.s32 %v1281, %v1279
      %v1286 = vadd.s32 %v1281, %v1280
      %vm1287 = vcmp.ge.s32.totalorder %v1282, 0
      %vm1288 = vcmp.ge.s32.totalorder %v1283, 0
      %vm1289 = vcmp.ge.s32.totalorder %v1284, 0
      %vm1290 = vcmp.ge.s32.totalorder %v1285, 0
      %vm1291 = vcmp.ge.s32.totalorder %v1286, 0
      %vm1292 = vcmp.lt.s32.totalorder %v1282, 1500
      %vm1293 = vcmp.lt.s32.totalorder %v1283, 1500
      %vm1294 = vcmp.lt.s32.totalorder %v1284, 1500
      %vm1295 = vcmp.lt.s32.totalorder %v1285, 1500
      %vm1296 = vcmp.lt.s32.totalorder %v1286, 1500
      %vm1297 = vmand %vm1287, %vm1292
      %vm1298 = vmand %vm1288, %vm1293
      %vm1299 = vmand %vm1289, %vm1294
      %vm1300 = vmand %vm1290, %vm1295
      %vm1301 = vmand %vm1291, %vm1296
      %v1302 = vsel %vm1297, 1, 0
      %v1303 = vsel %vm1298, 1, 0
      %v1304 = vsel %vm1299, 1, 0
      %v1305 = vsel %vm1300, 1, 0
      %v1306 = vsel %vm1301, 1, 0
      %vm1307 = vcmp.eq.s32.totalorder %v1302, 1
      %vm1308 = vcmp.eq.s32.totalorder %v1303, 1
      %vm1309 = vcmp.eq.s32.totalorder %v1304, 1
      %vm1310 = vcmp.eq.s32.totalorder %v1305, 1
      %vm1311 = vcmp.eq.s32.totalorder %v1306, 1
      %v1312 = vsel %vm1307, %v1234, 0.0
      %v1313 = vsel %vm1308, %v1235, 0.0
      %v1314 = vsel %vm1309, %v1236, 0.0
      %v1315 = vsel %vm1310, %v1237, 0.0
      %v1316 = vsel %vm1311, %v1238, 0.0
      %v1317 = vsel %vm1307, %v1239, 0.0
      %v1318 = vsel %vm1308, %v1240, 0.0
      %v1319 = vsel %vm1309, %v1241, 0.0
      %v1320 = vsel %vm1310, %v1242, 0.0
      %v1321 = vsel %vm1311, %v1243, 0.0
      %v1322 = vsel %vm1307, %v1244, 0.0
      %v1323 = vsel %vm1308, %v1245, 0.0
      %v1324 = vsel %vm1309, %v1246, 0.0
      %v1325 = vsel %vm1310, %v1247, 0.0
      %v1326 = vsel %vm1311, %v1248, 0.0
      %v1327 = vsel %vm1307, %v1249, 0.0
      %v1328 = vsel %vm1308, %v1250, 0.0
      %v1329 = vsel %vm1309, %v1251, 0.0
      %v1330 = vsel %vm1310, %v1252, 0.0
      %v1331 = vsel %vm1311, %v1253, 0.0
      %v1332 = vsel %vm1307, %v1254, 0.0
      %v1333 = vsel %vm1308, %v1255, 0.0
      %v1334 = vsel %vm1309, %v1256, 0.0
      %v1335 = vsel %vm1310, %v1257, 0.0
      %v1336 = vsel %vm1311, %v1258, 0.0
      %v1337 = vsel %vm1307, %v1259, 0.0
      %v1338 = vsel %vm1308, %v1260, 0.0
      %v1339 = vsel %vm1309, %v1261, 0.0
      %v1340 = vsel %vm1310, %v1262, 0.0
      %v1341 = vsel %vm1311, %v1263, 0.0
      %v1342 = vsel %vm1307, %v1264, 0.0
      %v1343 = vsel %vm1308, %v1265, 0.0
      %v1344 = vsel %vm1309, %v1266, 0.0
      %v1345 = vsel %vm1310, %v1267, 0.0
      %v1346 = vsel %vm1311, %v1268, 0.0
      %v1347 = vsel %vm1307, %v1269, 0.0
      %v1348 = vsel %vm1308, %v1270, 0.0
      %v1349 = vsel %vm1309, %v1271, 0.0
      %v1350 = vsel %vm1310, %v1272, 0.0
      %v1351 = vsel %vm1311, %v1273, 0.0
      %v1352 = vpack.c.bf16 %v1317, %v1312
      %v1353 = vpack.c.bf16 %v1318, %v1313
      %v1354 = vpack.c.bf16 %v1319, %v1314
      %v1355 = vpack.c.bf16 %v1320, %v1315
      %v1356 = vpack.c.bf16 %v1321, %v1316
      %v1357 = vpack.c.bf16 %v1327, %v1322
      %v1358 = vpack.c.bf16 %v1328, %v1323
      %v1359 = vpack.c.bf16 %v1329, %v1324
      %v1360 = vpack.c.bf16 %v1330, %v1325
      %v1361 = vpack.c.bf16 %v1331, %v1326
      %v1362 = vpack.c.bf16 %v1337, %v1332
      %v1363 = vpack.c.bf16 %v1338, %v1333
      %v1364 = vpack.c.bf16 %v1339, %v1334
      %v1365 = vpack.c.bf16 %v1340, %v1335
      %v1366 = vpack.c.bf16 %v1341, %v1336
      %v1367 = vpack.c.bf16 %v1347, %v1342
      %v1368 = vpack.c.bf16 %v1348, %v1343
      %v1369 = vpack.c.bf16 %v1349, %v1344
      %v1370 = vpack.c.bf16 %v1350, %v1345
      %v1371 = vpack.c.bf16 %v1351, %v1346
      %v1372 = vunpack.c.l.bf16 %v1352
      %v1373 = vunpack.c.l.bf16 %v1353
      %v1374 = vunpack.c.l.bf16 %v1354
      %v1375 = vunpack.c.l.bf16 %v1355
      %v1376 = vunpack.c.l.bf16 %v1356
      %v1377 = vunpack.c.h.bf16 %v1352
      %v1378 = vunpack.c.h.bf16 %v1353
      %v1379 = vunpack.c.h.bf16 %v1354
      %v1380 = vunpack.c.h.bf16 %v1355
      %v1381 = vunpack.c.h.bf16 %v1356
      %v1382 = vunpack.c.l.bf16 %v1357
      %v1383 = vunpack.c.l.bf16 %v1358
      %v1384 = vunpack.c.l.bf16 %v1359
      %v1385 = vunpack.c.l.bf16 %v1360
      %v1386 = vunpack.c.l.bf16 %v1361
      %v1387 = vunpack.c.h.bf16 %v1357
      %v1388 = vunpack.c.h.bf16 %v1358
      %v1389 = vunpack.c.h.bf16 %v1359
      %v1390 = vunpack.c.h.bf16 %v1360
      %v1391 = vunpack.c.h.bf16 %v1361
      %v1392 = vunpack.c.l.bf16 %v1362
      %v1393 = vunpack.c.l.bf16 %v1363
      %v1394 = vunpack.c.l.bf16 %v1364
      %v1395 = vunpack.c.l.bf16 %v1365
      %v1396 = vunpack.c.l.bf16 %v1366
      %v1397 = vunpack.c.h.bf16 %v1362
      %v1398 = vunpack.c.h.bf16 %v1363
      %v1399 = vunpack.c.h.bf16 %v1364
      %v1400 = vunpack.c.h.bf16 %v1365
      %v1401 = vunpack.c.h.bf16 %v1366
      %v1402 = vunpack.c.l.bf16 %v1367
      %v1403 = vunpack.c.l.bf16 %v1368
      %v1404 = vunpack.c.l.bf16 %v1369
      %v1405 = vunpack.c.l.bf16 %v1370
      %v1406 = vunpack.c.l.bf16 %v1371
      %v1407 = vunpack.c.h.bf16 %v1367
      %v1408 = vunpack.c.h.bf16 %v1368
      %v1409 = vunpack.c.h.bf16 %v1369
      %v1410 = vunpack.c.h.bf16 %v1370
      %v1411 = vunpack.c.h.bf16 %v1371
      %v1412 = vsub.f32 %v1312, %v1372
      %v1413 = vsub.f32 %v1313, %v1373
      %v1414 = vsub.f32 %v1314, %v1374
      %v1415 = vsub.f32 %v1315, %v1375
      %v1416 = vsub.f32 %v1316, %v1376
      %v1417 = vsub.f32 %v1317, %v1377
      %v1418 = vsub.f32 %v1318, %v1378
      %v1419 = vsub.f32 %v1319, %v1379
      %v1420 = vsub.f32 %v1320, %v1380
      %v1421 = vsub.f32 %v1321, %v1381
      %v1422 = vsub.f32 %v1322, %v1382
      %v1423 = vsub.f32 %v1323, %v1383
      %v1424 = vsub.f32 %v1324, %v1384
      %v1425 = vsub.f32 %v1325, %v1385
      %v1426 = vsub.f32 %v1326, %v1386
      %v1427 = vsub.f32 %v1327, %v1387
      %v1428 = vsub.f32 %v1328, %v1388
      %v1429 = vsub.f32 %v1329, %v1389
      %v1430 = vsub.f32 %v1330, %v1390
      %v1431 = vsub.f32 %v1331, %v1391
      %v1432 = vsub.f32 %v1332, %v1392
      %v1433 = vsub.f32 %v1333, %v1393
      %v1434 = vsub.f32 %v1334, %v1394
      %v1435 = vsub.f32 %v1335, %v1395
      %v1436 = vsub.f32 %v1336, %v1396
      %v1437 = vsub.f32 %v1337, %v1397
      %v1438 = vsub.f32 %v1338, %v1398
      %v1439 = vsub.f32 %v1339, %v1399
      %v1440 = vsub.f32 %v1340, %v1400
      %v1441 = vsub.f32 %v1341, %v1401
      %v1442 = vsub.f32 %v1342, %v1402
      %v1443 = vsub.f32 %v1343, %v1403
      %v1444 = vsub.f32 %v1344, %v1404
      %v1445 = vsub.f32 %v1345, %v1405
      %v1446 = vsub.f32 %v1346, %v1406
      %v1447 = vsub.f32 %v1347, %v1407
      %v1448 = vsub.f32 %v1348, %v1408
      %v1449 = vsub.f32 %v1349, %v1409
      %v1450 = vsub.f32 %v1350, %v1410
      %v1451 = vsub.f32 %v1351, %v1411
      %v1452 = vpack.c.bf16 %v1417, %v1412
      %v1453 = vpack.c.bf16 %v1418, %v1413
      %v1454 = vpack.c.bf16 %v1419, %v1414
      %v1455 = vpack.c.bf16 %v1420, %v1415
      %v1456 = vpack.c.bf16 %v1421, %v1416
      %v1457 = vpack.c.bf16 %v1427, %v1422
      %v1458 = vpack.c.bf16 %v1428, %v1423
      %v1459 = vpack.c.bf16 %v1429, %v1424
      %v1460 = vpack.c.bf16 %v1430, %v1425
      %v1461 = vpack.c.bf16 %v1431, %v1426
      %v1462 = vpack.c.bf16 %v1437, %v1432
      %v1463 = vpack.c.bf16 %v1438, %v1433
      %v1464 = vpack.c.bf16 %v1439, %v1434
      %v1465 = vpack.c.bf16 %v1440, %v1435
      %v1466 = vpack.c.bf16 %v1441, %v1436
      %v1467 = vpack.c.bf16 %v1447, %v1442
      %v1468 = vpack.c.bf16 %v1448, %v1443
      %v1469 = vpack.c.bf16 %v1449, %v1444
      %v1470 = vpack.c.bf16 %v1450, %v1445
      %v1471 = vpack.c.bf16 %v1451, %v1446
      %1492 = vrot.lane.b32.xlu0 %v1352, 127
      %v1493 = vpop.permute.xlu0 %1492
      %1494 = vrot.lane.b32.xlu0 %v1353, 127
      %v1495 = vpop.permute.xlu0 %1494
      %1496 = vrot.lane.b32.xlu0 %v1354, 127
      %v1497 = vpop.permute.xlu0 %1496
      %1498 = vrot.lane.b32.xlu0 %v1355, 127
      %v1499 = vpop.permute.xlu0 %1498
      %1500 = vrot.lane.b32.xlu0 %v1356, 127
      %v1501 = vpop.permute.xlu0 %1500
      %1502 = vrot.lane.b32.xlu0 %v1357, 127
      %v1503 = vpop.permute.xlu0 %1502
      %1504 = vrot.lane.b32.xlu0 %v1358, 127
      %v1505 = vpop.permute.xlu0 %1504
      %1506 = vrot.lane.b32.xlu0 %v1359, 127
      %v1507 = vpop.permute.xlu0 %1506
      %1508 = vrot.lane.b32.xlu0 %v1360, 127
      %v1509 = vpop.permute.xlu0 %1508
      %1510 = vrot.lane.b32.xlu0 %v1361, 127
      %v1511 = vpop.permute.xlu0 %1510
      %1512 = vrot.lane.b32.xlu0 %v1362, 127
      %v1513 = vpop.permute.xlu0 %1512
      %1514 = vrot.lane.b32.xlu0 %v1363, 127
      %v1515 = vpop.permute.xlu0 %1514
      %1516 = vrot.lane.b32.xlu0 %v1364, 127
      %v1517 = vpop.permute.xlu0 %1516
      %1518 = vrot.lane.b32.xlu0 %v1365, 127
      %v1519 = vpop.permute.xlu0 %1518
      %1520 = vrot.lane.b32.xlu0 %v1366, 127
      %v1521 = vpop.permute.xlu0 %1520
      %1522 = vrot.lane.b32.xlu0 %v1367, 127
      %v1523 = vpop.permute.xlu0 %1522
      %1524 = vrot.lane.b32.xlu0 %v1368, 127
      %v1525 = vpop.permute.xlu0 %1524
      %1526 = vrot.lane.b32.xlu0 %v1369, 127
      %v1527 = vpop.permute.xlu0 %1526
      %1528 = vrot.lane.b32.xlu0 %v1370, 127
      %v1529 = vpop.permute.xlu0 %1528
      %1530 = vrot.lane.b32.xlu0 %v1371, 127
      %v1531 = vpop.permute.xlu0 %1530
      %vm1532 = vcmask 1039360
      %v1533 = vsel %vm1532, %v1493, %v1495
      %v1534 = vsel %vm1532, %v1495, %v1497
      %v1535 = vsel %vm1532, %v1497, %v1499
      %v1536 = vsel %vm1532, %v1499, %v1501
      %v1537 = vsel %vm1532, %v1503, %v1505
      %v1538 = vsel %vm1532, %v1505, %v1507
      %v1539 = vsel %vm1532, %v1507, %v1509
      %v1540 = vsel %vm1532, %v1509, %v1511
      %v1541 = vsel %vm1532, %v1513, %v1515
      %v1542 = vsel %vm1532, %v1515, %v1517
      %v1543 = vsel %vm1532, %v1517, %v1519
      %v1544 = vsel %vm1532, %v1519, %v1521
      %v1545 = vsel %vm1532, %v1523, %v1525
      %v1546 = vsel %vm1532, %v1525, %v1527
      %v1547 = vsel %vm1532, %v1527, %v1529
      %v1548 = vsel %vm1532, %v1529, %v1531
      %1569 = vrot.lane.b32.xlu0 %v1352, 126
      %v1570 = vpop.permute.xlu0 %1569
      %1571 = vrot.lane.b32.xlu0 %v1353, 126
      %v1572 = vpop.permute.xlu0 %1571
      %1573 = vrot.lane.b32.xlu0 %v1354, 126
      %v1574 = vpop.permute.xlu0 %1573
      %1575 = vrot.lane.b32.xlu0 %v1355, 126
      %v1576 = vpop.permute.xlu0 %1575
      %1577 = vrot.lane.b32.xlu0 %v1356, 126
      %v1578 = vpop.permute.xlu0 %1577
      %1579 = vrot.lane.b32.xlu0 %v1357, 126
      %v1580 = vpop.permute.xlu0 %1579
      %1581 = vrot.lane.b32.xlu0 %v1358, 126
      %v1582 = vpop.permute.xlu0 %1581
      %1583 = vrot.lane.b32.xlu0 %v1359, 126
      %v1584 = vpop.permute.xlu0 %1583
      %1585 = vrot.lane.b32.xlu0 %v1360, 126
      %v1586 = vpop.permute.xlu0 %1585
      %1587 = vrot.lane.b32.xlu0 %v1361, 126
      %v1588 = vpop.permute.xlu0 %1587
      %1589 = vrot.lane.b32.xlu0 %v1362, 126
      %v1590 = vpop.permute.xlu0 %1589
      %1591 = vrot.lane.b32.xlu0 %v1363, 126
      %v1592 = vpop.permute.xlu0 %1591
      %1593 = vrot.lane.b32.xlu0 %v1364, 126
      %v1594 = vpop.permute.xlu0 %1593
      %1595 = vrot.lane.b32.xlu0 %v1365, 126
      %v1596 = vpop.permute.xlu0 %1595
      %1597 = vrot.lane.b32.xlu0 %v1366, 126
      %v1598 = vpop.permute.xlu0 %1597
      %1599 = vrot.lane.b32.xlu0 %v1367, 126
      %v1600 = vpop.permute.xlu0 %1599
      %1601 = vrot.lane.b32.xlu0 %v1368, 126
      %v1602 = vpop.permute.xlu0 %1601
      %1603 = vrot.lane.b32.xlu0 %v1369, 126
      %v1604 = vpop.permute.xlu0 %1603
      %1605 = vrot.lane.b32.xlu0 %v1370, 126
      %v1606 = vpop.permute.xlu0 %1605
      %1607 = vrot.lane.b32.xlu0 %v1371, 126
      %v1608 = vpop.permute.xlu0 %1607
      %vm1609 = vcmask 1031168
      %v1610 = vsel %vm1609, %v1570, %v1572
      %v1611 = vsel %vm1609, %v1572, %v1574
      %v1612 = vsel %vm1609, %v1574, %v1576
      %v1613 = vsel %vm1609, %v1576, %v1578
      %v1614 = vsel %vm1609, %v1580, %v1582
      %v1615 = vsel %vm1609, %v1582, %v1584
      %v1616 = vsel %vm1609, %v1584, %v1586
      %v1617 = vsel %vm1609, %v1586, %v1588
      %v1618 = vsel %vm1609, %v1590, %v1592
      %v1619 = vsel %vm1609, %v1592, %v1594
      %v1620 = vsel %vm1609, %v1594, %v1596
      %v1621 = vsel %vm1609, %v1596, %v1598
      %v1622 = vsel %vm1609, %v1600, %v1602
      %v1623 = vsel %vm1609, %v1602, %v1604
      %v1624 = vsel %vm1609, %v1604, %v1606
      %v1625 = vsel %vm1609, %v1606, %v1608
      %1666 = vrot.lane.b32.xlu0 %v1452, 127
      %v1667 = vpop.permute.xlu0 %1666
      %1668 = vrot.lane.b32.xlu0 %v1453, 127
      %v1669 = vpop.permute.xlu0 %1668
      %1670 = vrot.lane.b32.xlu0 %v1454, 127
      %v1671 = vpop.permute.xlu0 %1670
      %1672 = vrot.lane.b32.xlu0 %v1455, 127
      %v1673 = vpop.permute.xlu0 %1672
      %1674 = vrot.lane.b32.xlu0 %v1456, 127
      %v1675 = vpop.permute.xlu0 %1674
      %1676 = vrot.lane.b32.xlu0 %v1457, 127
      %v1677 = vpop.permute.xlu0 %1676
      %1678 = vrot.lane.b32.xlu0 %v1458, 127
      %v1679 = vpop.permute.xlu0 %1678
      %1680 = vrot.lane.b32.xlu0 %v1459, 127
      %v1681 = vpop.permute.xlu0 %1680
      %1682 = vrot.lane.b32.xlu0 %v1460, 127
      %v1683 = vpop.permute.xlu0 %1682
      %1684 = vrot.lane.b32.xlu0 %v1461, 127
      %v1685 = vpop.permute.xlu0 %1684
      %1686 = vrot.lane.b32.xlu0 %v1462, 127
      %v1687 = vpop.permute.xlu0 %1686
      %1688 = vrot.lane.b32.xlu0 %v1463, 127
      %v1689 = vpop.permute.xlu0 %1688
      %1690 = vrot.lane.b32.xlu0 %v1464, 127
      %v1691 = vpop.permute.xlu0 %1690
      %1692 = vrot.lane.b32.xlu0 %v1465, 127
      %v1693 = vpop.permute.xlu0 %1692
      %1694 = vrot.lane.b32.xlu0 %v1466, 127
      %v1695 = vpop.permute.xlu0 %1694
      %1696 = vrot.lane.b32.xlu0 %v1467, 127
      %v1697 = vpop.permute.xlu0 %1696
      %1698 = vrot.lane.b32.xlu0 %v1468, 127
      %v1699 = vpop.permute.xlu0 %1698
      %1700 = vrot.lane.b32.xlu0 %v1469, 127
      %v1701 = vpop.permute.xlu0 %1700
      %1702 = vrot.lane.b32.xlu0 %v1470, 127
      %v1703 = vpop.permute.xlu0 %1702
      %1704 = vrot.lane.b32.xlu0 %v1471, 127
      %v1705 = vpop.permute.xlu0 %1704
      %v1706 = vsel %vm1532, %v1667, %v1669
      %v1707 = vsel %vm1532, %v1669, %v1671
      %v1708 = vsel %vm1532, %v1671, %v1673
      %v1709 = vsel %vm1532, %v1673, %v1675
      %v1710 = vsel %vm1532, %v1677, %v1679
      %v1711 = vsel %vm1532, %v1679, %v1681
      %v1712 = vsel %vm1532, %v1681, %v1683
      %v1713 = vsel %vm1532, %v1683, %v1685
      %v1714 = vsel %vm1532, %v1687, %v1689
      %v1715 = vsel %vm1532, %v1689, %v1691
      %v1716 = vsel %vm1532, %v1691, %v1693
      %v1717 = vsel %vm1532, %v1693, %v1695
      %v1718 = vsel %vm1532, %v1697, %v1699
      %v1719 = vsel %vm1532, %v1699, %v1701
      %v1720 = vsel %vm1532, %v1701, %v1703
      %v1721 = vsel %vm1532, %v1703, %v1705
      %1742 = vrot.lane.b32.xlu0 %v1452, 126
      %v1743 = vpop.permute.xlu0 %1742
      %1744 = vrot.lane.b32.xlu0 %v1453, 126
      %v1745 = vpop.permute.xlu0 %1744
      %1746 = vrot.lane.b32.xlu0 %v1454, 126
      %v1747 = vpop.permute.xlu0 %1746
      %1748 = vrot.lane.b32.xlu0 %v1455, 126
      %v1749 = vpop.permute.xlu0 %1748
      %1750 = vrot.lane.b32.xlu0 %v1456, 126
      %v1751 = vpop.permute.xlu0 %1750
      %1752 = vrot.lane.b32.xlu0 %v1457, 126
      %v1753 = vpop.permute.xlu0 %1752
      %1754 = vrot.lane.b32.xlu0 %v1458, 126
      %v1755 = vpop.permute.xlu0 %1754
      %1756 = vrot.lane.b32.xlu0 %v1459, 126
      %v1757 = vpop.permute.xlu0 %1756
      %1758 = vrot.lane.b32.xlu0 %v1460, 126
      %v1759 = vpop.permute.xlu0 %1758
      %1760 = vrot.lane.b32.xlu0 %v1461, 126
      %v1761 = vpop.permute.xlu0 %1760
      %1762 = vrot.lane.b32.xlu0 %v1462, 126
      %v1763 = vpop.permute.xlu0 %1762
      %1764 = vrot.lane.b32.xlu0 %v1463, 126
      %v1765 = vpop.permute.xlu0 %1764
      %1766 = vrot.lane.b32.xlu0 %v1464, 126
      %v1767 = vpop.permute.xlu0 %1766
      %1768 = vrot.lane.b32.xlu0 %v1465, 126
      %v1769 = vpop.permute.xlu0 %1768
      %1770 = vrot.lane.b32.xlu0 %v1466, 126
      %v1771 = vpop.permute.xlu0 %1770
      %1772 = vrot.lane.b32.xlu0 %v1467, 126
      %v1773 = vpop.permute.xlu0 %1772
      %1774 = vrot.lane.b32.xlu0 %v1468, 126
      %v1775 = vpop.permute.xlu0 %1774
      %1776 = vrot.lane.b32.xlu0 %v1469, 126
      %v1777 = vpop.permute.xlu0 %1776
      %1778 = vrot.lane.b32.xlu0 %v1470, 126
      %v1779 = vpop.permute.xlu0 %1778
      %1780 = vrot.lane.b32.xlu0 %v1471, 126
      %v1781 = vpop.permute.xlu0 %1780
      %v1782 = vsel %vm1609, %v1743, %v1745
      %v1783 = vsel %vm1609, %v1745, %v1747
      %v1784 = vsel %vm1609, %v1747, %v1749
      %v1785 = vsel %vm1609, %v1749, %v1751
      %v1786 = vsel %vm1609, %v1753, %v1755
      %v1787 = vsel %vm1609, %v1755, %v1757
      %v1788 = vsel %vm1609, %v1757, %v1759
      %v1789 = vsel %vm1609, %v1759, %v1761
      %v1790 = vsel %vm1609, %v1763, %v1765
      %v1791 = vsel %vm1609, %v1765, %v1767
      %v1792 = vsel %vm1609, %v1767, %v1769
      %v1793 = vsel %vm1609, %v1769, %v1771
      %v1794 = vsel %vm1609, %v1773, %v1775
      %v1795 = vsel %vm1609, %v1775, %v1777
      %v1796 = vsel %vm1609, %v1777, %v1779
      %v1797 = vsel %vm1609, %v1779, %v1781
      %v1818 = vld [vmem:[%s3] sm:$0xff]
      %v1819 = vld [vmem:[%s3 + $0x8] sm:$0xff]
      %v1820 = vld [vmem:[%s3 + $0x10] sm:$0xff]
      %v1821 = vld [vmem:[%s3 + $0x18] sm:$0xff]
      %v1822 = vld [vmem:[%s3 + $0x20] sm:$0xff]
      %v1823 = vld [vmem:[%s3 + $0x28] sm:$0xff]
      %v1824 = vld [vmem:[%s3 + $0x30] sm:$0xff]
      %v1825 = vld [vmem:[%s3 + $0x38] sm:$0xff]
      %v1826 = vld [vmem:[%s3 + $0x40] sm:$0xff]
      %v1827 = vld [vmem:[%s3 + $0x48] sm:$0xff]
      %v1828 = vld [vmem:[%s3 + $0x50] sm:$0xff]
      %v1829 = vld [vmem:[%s3 + $0x58] sm:$0xff]
      %v1830 = vld [vmem:[%s3 + $0x60] sm:$0xff]
      %v1831 = vld [vmem:[%s3 + $0x68] sm:$0xff]
      %v1832 = vld [vmem:[%s3 + $0x70] sm:$0xff]
      %v1833 = vld [vmem:[%s3 + $0x78] sm:$0xff]
      %v1834 = vld [vmem:[%s4] sm:$0xff]
      %v1835 = vld [vmem:[%s4 + $0x8] sm:$0xff]
      %v1836 = vld [vmem:[%s4 + $0x10] sm:$0xff]
      %v1837 = vld [vmem:[%s4 + $0x18] sm:$0xff]
      %v1838 = vld [vmem:[%s4 + $0x20] sm:$0xff]
      %v1839 = vld [vmem:[%s4 + $0x28] sm:$0xff]
      %v1840 = vld [vmem:[%s4 + $0x30] sm:$0xff]
      %v1841 = vld [vmem:[%s4 + $0x38] sm:$0xff]
      %v1842 = vld [vmem:[%s4 + $0x40] sm:$0xff]
      %v1843 = vld [vmem:[%s4 + $0x48] sm:$0xff]
      %v1844 = vld [vmem:[%s4 + $0x50] sm:$0xff]
      %v1845 = vld [vmem:[%s4 + $0x58] sm:$0xff]
      %v1846 = vld [vmem:[%s4 + $0x60] sm:$0xff]
      %v1847 = vld [vmem:[%s4 + $0x68] sm:$0xff]
      %v1848 = vld [vmem:[%s4 + $0x70] sm:$0xff]
      %v1849 = vld [vmem:[%s4 + $0x78] sm:$0xff]
      %v1866 = vunpack.c.l.b16 %v1818
      %v1867 = vunpack.c.h.b16 %v1818
      %v1868 = vunpack.c.l.b16 %v1819
      %v1869 = vunpack.c.h.b16 %v1819
      %v1870 = vunpack.c.l.b16 %v1820
      %v1871 = vunpack.c.h.b16 %v1820
      %v1872 = vunpack.c.l.b16 %v1821
      %v1873 = vunpack.c.h.b16 %v1821
      %v1874 = vunpack.c.l.b16 %v1822
      %v1875 = vunpack.c.h.b16 %v1822
      %v1876 = vunpack.c.l.b16 %v1823
      %v1877 = vunpack.c.h.b16 %v1823
      %v1878 = vunpack.c.l.b16 %v1824
      %v1879 = vunpack.c.h.b16 %v1824
      %v1880 = vunpack.c.l.b16 %v1825
      %v1881 = vunpack.c.h.b16 %v1825
      %v1882 = vunpack.c.l.b16 %v1826
      %v1883 = vunpack.c.h.b16 %v1826
      %v1884 = vunpack.c.l.b16 %v1827
      %v1885 = vunpack.c.h.b16 %v1827
      %v1886 = vunpack.c.l.b16 %v1828
      %v1887 = vunpack.c.h.b16 %v1828
      %v1888 = vunpack.c.l.b16 %v1829
      %v1889 = vunpack.c.h.b16 %v1829
      %v1890 = vunpack.c.l.b16 %v1830
      %v1891 = vunpack.c.h.b16 %v1830
      %v1892 = vunpack.c.l.b16 %v1831
      %v1893 = vunpack.c.h.b16 %v1831
      %v1894 = vunpack.c.l.b16 %v1832
      %v1895 = vunpack.c.h.b16 %v1832
      %v1896 = vunpack.c.l.b16 %v1833
      %v1897 = vunpack.c.h.b16 %v1833
      %v1898 = vpack.c.b16 %v1868, %v1866
      %v1899 = vpack.c.b16 %v1869, %v1867
      %v1900 = vpack.c.b16 %v1872, %v1870
      %v1901 = vpack.c.b16 %v1873, %v1871
      %v1902 = vpack.c.b16 %v1876, %v1874
      %v1903 = vpack.c.b16 %v1877, %v1875
      %v1904 = vpack.c.b16 %v1880, %v1878
      %v1905 = vpack.c.b16 %v1881, %v1879
      %v1906 = vpack.c.b16 %v1884, %v1882
      %v1907 = vpack.c.b16 %v1885, %v1883
      %v1908 = vpack.c.b16 %v1888, %v1886
      %v1909 = vpack.c.b16 %v1889, %v1887
      %v1910 = vpack.c.b16 %v1892, %v1890
      %v1911 = vpack.c.b16 %v1893, %v1891
      %v1912 = vpack.c.b16 %v1896, %v1894
      %v1913 = vpack.c.b16 %v1897, %v1895
      %vm1922 = vcmask 523264
      %v1924 = vsel %vm1922, %v1899, 0
      %v1927 = vsel %vm1922, %v1901, 0
      %v1930 = vsel %vm1922, %v1903, 0
      %v1933 = vsel %vm1922, %v1905, 0
      %v1936 = vsel %vm1922, %v1907, 0
      %v1939 = vsel %vm1922, %v1909, 0
      %v1942 = vsel %vm1922, %v1911, 0
      %v1945 = vsel %vm1922, %v1913, 0
      %1947 = vmatprep.subr.bf16.mxu0 %v1719
      %1948 = vmatpush1.bf16.msra.mxu0 %v1718
      %1949 = vmatprep.subr.bf16.mxu0 %v1715
      %1950 = vmatpush1.bf16.msra.mxu0 %v1714
      %1951 = vmatprep.subr.bf16.mxu0 %v1711
      %1952 = vmatpush1.bf16.msra.mxu0 %v1710
      %1953 = vmatprep.subr.bf16.mxu0 %v1707
      %1954 = vmatpush1.bf16.msra.mxu0 %v1706
      %1955 = vmatprep.subr.bf16.mxu0 %v1468
      %1956 = vmatpush1.bf16.msra.mxu0 %v1467
      %1957 = vmatprep.subr.bf16.mxu0 %v1463
      %1958 = vmatpush1.bf16.msra.mxu0 %v1462
      %1959 = vmatprep.subr.bf16.mxu0 %v1458
      %1960 = vmatpush1.bf16.msra.mxu0 %v1457
      %1961 = vmatprep.subr.bf16.mxu0 %v1453
      %1962 = vmatpush1.bf16.msra.mxu0 %v1452
      %1963 = vmatprep.subr.bf16.mxu0 0
      %1964 = vmatpush2.bf16.msra.mxu0 0
      %1965 = vmatprep.subr.bf16.mxu0 0
      %1966 = vmatpush2.bf16.msra.mxu0 0
      %1967 = vmatprep.subr.bf16.mxu0 0
      %1968 = vmatpush2.bf16.msra.mxu0 0
      %1969 = vmatprep.subr.bf16.mxu0 0
      %1970 = vmatpush2.bf16.msra.mxu0 0
      %1971 = vmatprep.subr.bf16.mxu0 %v1795
      %1972 = vmatpush2.bf16.msra.mxu0 %v1794
      %1973 = vmatprep.subr.bf16.mxu0 %v1791
      %1974 = vmatpush2.bf16.msra.mxu0 %v1790
      %1975 = vmatprep.subr.bf16.mxu0 %v1787
      %1976 = vmatpush2.bf16.msra.mxu0 %v1786
      %1977 = vmatprep.subr.bf16.mxu0 %v1783
      %1978 = vmatpush2.bf16.msra.mxu0 %v1782
      %1979 = vmatprep.mubr.bf16.mxu0 %v1924
      %1980 = vmatmul.mubr.bf16.gmra.mxu0 %v1898
      %v1981 = vpop.f32.mrf.mxu0
      %v1982 = vadd.f32 0.0, %v1981
      %v1983 = vpop.f32.mrf.mxu0
      %v1984 = vadd.f32 0.0, %v1983
      %v1985 = vpop.f32.mrf.mxu0
      %v1986 = vadd.f32 0.0, %v1985
      %v1987 = vpop.f32.mrf.mxu0
      %v1988 = vadd.f32 0.0, %v1987
      %1989 = vmatprep.mubr.bf16.mxu0 %v1927
      %1990 = vmatmul.mubr.bf16.gmra.mxu0 %v1900
      %v1991 = vpop.f32.mrf.mxu0
      %v1992 = vadd.f32 0.0, %v1991
      %v1993 = vpop.f32.mrf.mxu0
      %v1994 = vadd.f32 0.0, %v1993
      %v1995 = vpop.f32.mrf.mxu0
      %v1996 = vadd.f32 0.0, %v1995
      %v1997 = vpop.f32.mrf.mxu0
      %v1998 = vadd.f32 0.0, %v1997
      %1999 = vmatprep.mubr.bf16.mxu0 %v1930
      %2000 = vmatmul.mubr.bf16.gmra.mxu0 %v1902
      %v2001 = vpop.f32.mrf.mxu0
      %v2002 = vadd.f32 0.0, %v2001
      %v2003 = vpop.f32.mrf.mxu0
      %v2004 = vadd.f32 0.0, %v2003
      %v2005 = vpop.f32.mrf.mxu0
      %v2006 = vadd.f32 0.0, %v2005
      %v2007 = vpop.f32.mrf.mxu0
      %v2008 = vadd.f32 0.0, %v2007
      %2009 = vmatprep.mubr.bf16.mxu0 %v1933
      %2010 = vmatmul.mubr.bf16.gmra.mxu0 %v1904
      %v2011 = vpop.f32.mrf.mxu0
      %v2012 = vadd.f32 0.0, %v2011
      %v2013 = vpop.f32.mrf.mxu0
      %v2014 = vadd.f32 0.0, %v2013
      %v2015 = vpop.f32.mrf.mxu0
      %v2016 = vadd.f32 0.0, %v2015
      %v2017 = vpop.f32.mrf.mxu0
      %v2018 = vadd.f32 0.0, %v2017
      %2019 = vmatprep.mubr.bf16.mxu0 %v1936
      %2020 = vmatmul.mubr.bf16.gmra.mxu0 %v1906
      %v2021 = vpop.f32.mrf.mxu0
      %v2022 = vadd.f32 0.0, %v2021
      %v2023 = vpop.f32.mrf.mxu0
      %v2024 = vadd.f32 0.0, %v2023
      %v2025 = vpop.f32.mrf.mxu0
      %v2026 = vadd.f32 0.0, %v2025
      %v2027 = vpop.f32.mrf.mxu0
      %v2028 = vadd.f32 0.0, %v2027
      %2029 = vmatprep.mubr.bf16.mxu0 %v1939
      %2030 = vmatmul.mubr.bf16.gmra.mxu0 %v1908
      %v2031 = vpop.f32.mrf.mxu0
      %v2032 = vadd.f32 0.0, %v2031
      %v2033 = vpop.f32.mrf.mxu0
      %v2034 = vadd.f32 0.0, %v2033
      %v2035 = vpop.f32.mrf.mxu0
      %v2036 = vadd.f32 0.0, %v2035
      %v2037 = vpop.f32.mrf.mxu0
      %v2038 = vadd.f32 0.0, %v2037
      %2039 = vmatprep.mubr.bf16.mxu0 %v1942
      %2040 = vmatmul.mubr.bf16.gmra.mxu0 %v1910
      %v2041 = vpop.f32.mrf.mxu0
      %v2042 = vadd.f32 0.0, %v2041
      %v2043 = vpop.f32.mrf.mxu0
      %v2044 = vadd.f32 0.0, %v2043
      %v2045 = vpop.f32.mrf.mxu0
      %v2046 = vadd.f32 0.0, %v2045
      %v2047 = vpop.f32.mrf.mxu0
      %v2048 = vadd.f32 0.0, %v2047
      %2049 = vmatprep.mubr.bf16.mxu0 %v1945
      %2050 = vmatmul.mubr.bf16.gmra.mxu0 %v1912
      %v2051 = vpop.f32.mrf.mxu0
      %v2052 = vadd.f32 0.0, %v2051
      %v2053 = vpop.f32.mrf.mxu0
      %v2054 = vadd.f32 0.0, %v2053
      %v2055 = vpop.f32.mrf.mxu0
      %v2056 = vadd.f32 0.0, %v2055
      %v2057 = vpop.f32.mrf.mxu0
      %v2058 = vadd.f32 0.0, %v2057
      %2059 = vdwg.mxu0
      %2060 = vmatprep.subr.bf16.mxu0 %v1721
      %2061 = vmatpush1.bf16.msra.mxu0 %v1720
      %2062 = vmatprep.subr.bf16.mxu0 %v1717
      %2063 = vmatpush1.bf16.msra.mxu0 %v1716
      %2064 = vmatprep.subr.bf16.mxu0 %v1713
      %2065 = vmatpush1.bf16.msra.mxu0 %v1712
      %2066 = vmatprep.subr.bf16.mxu0 %v1709
      %2067 = vmatpush1.bf16.msra.mxu0 %v1708
      %2068 = vmatprep.subr.bf16.mxu0 %v1470
      %2069 = vmatpush1.bf16.msra.mxu0 %v1469
      %2070 = vmatprep.subr.bf16.mxu0 %v1465
      %2071 = vmatpush1.bf16.msra.mxu0 %v1464
      %2072 = vmatprep.subr.bf16.mxu0 %v1460
      %2073 = vmatpush1.bf16.msra.mxu0 %v1459
      %2074 = vmatprep.subr.bf16.mxu0 %v1455
      %2075 = vmatpush1.bf16.msra.mxu0 %v1454
      %2076 = vmatprep.subr.bf16.mxu0 0
      %2077 = vmatpush2.bf16.msra.mxu0 0
      %2078 = vmatprep.subr.bf16.mxu0 0
      %2079 = vmatpush2.bf16.msra.mxu0 0
      %2080 = vmatprep.subr.bf16.mxu0 0
      %2081 = vmatpush2.bf16.msra.mxu0 0
      %2082 = vmatprep.subr.bf16.mxu0 0
      %2083 = vmatpush2.bf16.msra.mxu0 0
      %2084 = vmatprep.subr.bf16.mxu0 %v1797
      %2085 = vmatpush2.bf16.msra.mxu0 %v1796
      %2086 = vmatprep.subr.bf16.mxu0 %v1793
      %2087 = vmatpush2.bf16.msra.mxu0 %v1792
      %2088 = vmatprep.subr.bf16.mxu0 %v1789
      %2089 = vmatpush2.bf16.msra.mxu0 %v1788
      %2090 = vmatprep.subr.bf16.mxu0 %v1785
      %2091 = vmatpush2.bf16.msra.mxu0 %v1784
      %2092 = vmatprep.mubr.bf16.mxu0 %v1924
      %2093 = vmatmul.mubr.bf16.gmra.mxu0 %v1898
      %v2094 = vpop.f32.mrf.mxu0
      %v2095 = vadd.f32 0.0, %v2094
      %v2096 = vpop.f32.mrf.mxu0
      %v2097 = vadd.f32 0.0, %v2096
      %v2098 = vpop.f32.mrf.mxu0
      %v2099 = vadd.f32 0.0, %v2098
      %v2100 = vpop.f32.mrf.mxu0
      %v2101 = vadd.f32 0.0, %v2100
      %2102 = vmatprep.mubr.bf16.mxu0 %v1927
      %2103 = vmatmul.mubr.bf16.gmra.mxu0 %v1900
      %v2104 = vpop.f32.mrf.mxu0
      %v2105 = vadd.f32 0.0, %v2104
      %v2106 = vpop.f32.mrf.mxu0
      %v2107 = vadd.f32 0.0, %v2106
      %v2108 = vpop.f32.mrf.mxu0
      %v2109 = vadd.f32 0.0, %v2108
      %v2110 = vpop.f32.mrf.mxu0
      %v2111 = vadd.f32 0.0, %v2110
      %2112 = vmatprep.mubr.bf16.mxu0 %v1930
      %2113 = vmatmul.mubr.bf16.gmra.mxu0 %v1902
      %v2114 = vpop.f32.mrf.mxu0
      %v2115 = vadd.f32 0.0, %v2114
      %v2116 = vpop.f32.mrf.mxu0
      %v2117 = vadd.f32 0.0, %v2116
      %v2118 = vpop.f32.mrf.mxu0
      %v2119 = vadd.f32 0.0, %v2118
      %v2120 = vpop.f32.mrf.mxu0
      %v2121 = vadd.f32 0.0, %v2120
      %2122 = vmatprep.mubr.bf16.mxu0 %v1933
      %2123 = vmatmul.mubr.bf16.gmra.mxu0 %v1904
      %v2124 = vpop.f32.mrf.mxu0
      %v2125 = vadd.f32 0.0, %v2124
      %v2126 = vpop.f32.mrf.mxu0
      %v2127 = vadd.f32 0.0, %v2126
      %v2128 = vpop.f32.mrf.mxu0
      %v2129 = vadd.f32 0.0, %v2128
      %v2130 = vpop.f32.mrf.mxu0
      %v2131 = vadd.f32 0.0, %v2130
      %2132 = vmatprep.mubr.bf16.mxu0 %v1936
      %2133 = vmatmul.mubr.bf16.gmra.mxu0 %v1906
      %v2134 = vpop.f32.mrf.mxu0
      %v2135 = vadd.f32 0.0, %v2134
      %v2136 = vpop.f32.mrf.mxu0
      %v2137 = vadd.f32 0.0, %v2136
      %v2138 = vpop.f32.mrf.mxu0
      %v2139 = vadd.f32 0.0, %v2138
      %v2140 = vpop.f32.mrf.mxu0
      %v2141 = vadd.f32 0.0, %v2140
      %2142 = vmatprep.mubr.bf16.mxu0 %v1939
      %2143 = vmatmul.mubr.bf16.gmra.mxu0 %v1908
      %v2144 = vpop.f32.mrf.mxu0
      %v2145 = vadd.f32 0.0, %v2144
      %v2146 = vpop.f32.mrf.mxu0
      %v2147 = vadd.f32 0.0, %v2146
      %v2148 = vpop.f32.mrf.mxu0
      %v2149 = vadd.f32 0.0, %v2148
      %v2150 = vpop.f32.mrf.mxu0
      %v2151 = vadd.f32 0.0, %v2150
      %2152 = vmatprep.mubr.bf16.mxu0 %v1942
      %2153 = vmatmul.mubr.bf16.gmra.mxu0 %v1910
      %v2154 = vpop.f32.mrf.mxu0
      %v2155 = vadd.f32 0.0, %v2154
      %v2156 = vpop.f32.mrf.mxu0
      %v2157 = vadd.f32 0.0, %v2156
      %v2158 = vpop.f32.mrf.mxu0
      %v2159 = vadd.f32 0.0, %v2158
      %v2160 = vpop.f32.mrf.mxu0
      %v2161 = vadd.f32 0.0, %v2160
      %2162 = vmatprep.mubr.bf16.mxu0 %v1945
      %2163 = vmatmul.mubr.bf16.gmra.mxu0 %v1912
      %v2164 = vpop.f32.mrf.mxu0
      %v2165 = vadd.f32 0.0, %v2164
      %v2166 = vpop.f32.mrf.mxu0
      %v2167 = vadd.f32 0.0, %v2166
      %v2168 = vpop.f32.mrf.mxu0
      %v2169 = vadd.f32 0.0, %v2168
      %v2170 = vpop.f32.mrf.mxu0
      %v2171 = vadd.f32 0.0, %v2170
      %2172 = vdwg.mxu0
      %2173 = vmatprep.subr.bf16.mxu0 0
      %2174 = vmatpush1.bf16.msra.mxu0 %v1705
      %2175 = vmatprep.subr.bf16.mxu0 0
      %2176 = vmatpush1.bf16.msra.mxu0 %v1695
      %2177 = vmatprep.subr.bf16.mxu0 0
      %2178 = vmatpush1.bf16.msra.mxu0 %v1685
      %2179 = vmatprep.subr.bf16.mxu0 0
      %2180 = vmatpush1.bf16.msra.mxu0 %v1675
      %2181 = vmatprep.subr.bf16.mxu0 0
      %2182 = vmatpush1.bf16.msra.mxu0 %v1471
      %2183 = vmatprep.subr.bf16.mxu0 0
      %2184 = vmatpush1.bf16.msra.mxu0 %v1466
      %2185 = vmatprep.subr.bf16.mxu0 0
      %2186 = vmatpush1.bf16.msra.mxu0 %v1461
      %2187 = vmatprep.subr.bf16.mxu0 0
      %2188 = vmatpush1.bf16.msra.mxu0 %v1456
      %2189 = vmatprep.subr.bf16.mxu0 0
      %2190 = vmatpush2.bf16.msra.mxu0 0
      %2191 = vmatprep.subr.bf16.mxu0 0
      %2192 = vmatpush2.bf16.msra.mxu0 0
      %2193 = vmatprep.subr.bf16.mxu0 0
      %2194 = vmatpush2.bf16.msra.mxu0 0
      %2195 = vmatprep.subr.bf16.mxu0 0
      %2196 = vmatpush2.bf16.msra.mxu0 0
      %2197 = vmatprep.subr.bf16.mxu0 0
      %2198 = vmatpush2.bf16.msra.mxu0 %v1781
      %2199 = vmatprep.subr.bf16.mxu0 0
      %2200 = vmatpush2.bf16.msra.mxu0 %v1771
      %2201 = vmatprep.subr.bf16.mxu0 0
      %2202 = vmatpush2.bf16.msra.mxu0 %v1761
      %2203 = vmatprep.subr.bf16.mxu0 0
      %2204 = vmatpush2.bf16.msra.mxu0 %v1751
      %2205 = vmatprep.mubr.bf16.mxu0 %v1924
      %2206 = vmatmul.mubr.bf16.gmra.mxu0 %v1898
      %v2207 = vpop.f32.mrf.mxu0
      %v2208 = vadd.f32 0.0, %v2207
      %v2209 = vpop.f32.mrf.mxu0
      %v2210 = vpop.f32.mrf.mxu0
      %v2211 = vadd.f32 0.0, %v2210
      %v2212 = vpop.f32.mrf.mxu0
      %2213 = vmatprep.mubr.bf16.mxu0 %v1927
      %2214 = vmatmul.mubr.bf16.gmra.mxu0 %v1900
      %v2215 = vpop.f32.mrf.mxu0
      %v2216 = vadd.f32 0.0, %v2215
      %v2217 = vpop.f32.mrf.mxu0
      %v2218 = vpop.f32.mrf.mxu0
      %v2219 = vadd.f32 0.0, %v2218
      %v2220 = vpop.f32.mrf.mxu0
      %2221 = vmatprep.mubr.bf16.mxu0 %v1930
      %2222 = vmatmul.mubr.bf16.gmra.mxu0 %v1902
      %v2223 = vpop.f32.mrf.mxu0
      %v2224 = vadd.f32 0.0, %v2223
      %v2225 = vpop.f32.mrf.mxu0
      %v2226 = vpop.f32.mrf.mxu0
      %v2227 = vadd.f32 0.0, %v2226
      %v2228 = vpop.f32.mrf.mxu0
      %2229 = vmatprep.mubr.bf16.mxu0 %v1933
      %2230 = vmatmul.mubr.bf16.gmra.mxu0 %v1904
      %v2231 = vpop.f32.mrf.mxu0
      %v2232 = vadd.f32 0.0, %v2231
      %v2233 = vpop.f32.mrf.mxu0
      %v2234 = vpop.f32.mrf.mxu0
      %v2235 = vadd.f32 0.0, %v2234
      %v2236 = vpop.f32.mrf.mxu0
      %2237 = vmatprep.mubr.bf16.mxu0 %v1936
      %2238 = vmatmul.mubr.bf16.gmra.mxu0 %v1906
      %v2239 = vpop.f32.mrf.mxu0
      %v2240 = vadd.f32 0.0, %v2239
      %v2241 = vpop.f32.mrf.mxu0
      %v2242 = vpop.f32.mrf.mxu0
      %v2243 = vadd.f32 0.0, %v2242
      %v2244 = vpop.f32.mrf.mxu0
      %2245 = vmatprep.mubr.bf16.mxu0 %v1939
      %2246 = vmatmul.mubr.bf16.gmra.mxu0 %v1908
      %v2247 = vpop.f32.mrf.mxu0
      %v2248 = vadd.f32 0.0, %v2247
      %v2249 = vpop.f32.mrf.mxu0
      %v2250 = vpop.f32.mrf.mxu0
      %v2251 = vadd.f32 0.0, %v2250
      %v2252 = vpop.f32.mrf.mxu0
      %2253 = vmatprep.mubr.bf16.mxu0 %v1942
      %2254 = vmatmul.mubr.bf16.gmra.mxu0 %v1910
      %v2255 = vpop.f32.mrf.mxu0
      %v2256 = vadd.f32 0.0, %v2255
      %v2257 = vpop.f32.mrf.mxu0
      %v2258 = vpop.f32.mrf.mxu0
      %v2259 = vadd.f32 0.0, %v2258
      %v2260 = vpop.f32.mrf.mxu0
      %2261 = vmatprep.mubr.bf16.mxu0 %v1945
      %2262 = vmatmul.mubr.bf16.gmra.mxu0 %v1912
      %v2263 = vpop.f32.mrf.mxu0
      %v2264 = vadd.f32 0.0, %v2263
      %v2265 = vpop.f32.mrf.mxu0
      %v2266 = vpop.f32.mrf.mxu0
      %v2267 = vadd.f32 0.0, %v2266
      %v2268 = vpop.f32.mrf.mxu0
      %2269 = vdwg.mxu0
      %2270 = vmatprep.subr.bf16.mxu0 %v1546
      %2271 = vmatpush1.bf16.msra.mxu0 %v1545
      %2272 = vmatprep.subr.bf16.mxu0 %v1542
      %2273 = vmatpush1.bf16.msra.mxu0 %v1541
      %2274 = vmatprep.subr.bf16.mxu0 %v1538
      %2275 = vmatpush1.bf16.msra.mxu0 %v1537
      %2276 = vmatprep.subr.bf16.mxu0 %v1534
      %2277 = vmatpush1.bf16.msra.mxu0 %v1533
      %2278 = vmatprep.subr.bf16.mxu0 %v1368
      %2279 = vmatpush1.bf16.msra.mxu0 %v1367
      %2280 = vmatprep.subr.bf16.mxu0 %v1363
      %2281 = vmatpush1.bf16.msra.mxu0 %v1362
      %2282 = vmatprep.subr.bf16.mxu0 %v1358
      %2283 = vmatpush1.bf16.msra.mxu0 %v1357
      %2284 = vmatprep.subr.bf16.mxu0 %v1353
      %2285 = vmatpush1.bf16.msra.mxu0 %v1352
      %2286 = vmatprep.subr.bf16.mxu0 0
      %2287 = vmatpush2.bf16.msra.mxu0 0
      %2288 = vmatprep.subr.bf16.mxu0 0
      %2289 = vmatpush2.bf16.msra.mxu0 0
      %2290 = vmatprep.subr.bf16.mxu0 0
      %2291 = vmatpush2.bf16.msra.mxu0 0
      %2292 = vmatprep.subr.bf16.mxu0 0
      %2293 = vmatpush2.bf16.msra.mxu0 0
      %2294 = vmatprep.subr.bf16.mxu0 %v1623
      %2295 = vmatpush2.bf16.msra.mxu0 %v1622
      %2296 = vmatprep.subr.bf16.mxu0 %v1619
      %2297 = vmatpush2.bf16.msra.mxu0 %v1618
      %2298 = vmatprep.subr.bf16.mxu0 %v1615
      %2299 = vmatpush2.bf16.msra.mxu0 %v1614
      %2300 = vmatprep.subr.bf16.mxu0 %v1611
      %2301 = vmatpush2.bf16.msra.mxu0 %v1610
      %2302 = vmatprep.mubr.bf16.mxu0 %v1924
      %2303 = vmatmul.mubr.bf16.gmra.mxu0 %v1898
      %v2304 = vpop.f32.mrf.mxu0
      %v2305 = vadd.f32 %v1982, %v2304
      %v2306 = vpop.f32.mrf.mxu0
      %v2307 = vadd.f32 %v1984, %v2306
      %v2308 = vpop.f32.mrf.mxu0
      %v2309 = vadd.f32 %v1986, %v2308
      %v2310 = vpop.f32.mrf.mxu0
      %v2311 = vadd.f32 %v1988, %v2310
      %2312 = vmatprep.mubr.bf16.mxu0 %v1927
      %2313 = vmatmul.mubr.bf16.gmra.mxu0 %v1900
      %v2314 = vpop.f32.mrf.mxu0
      %v2315 = vadd.f32 %v1992, %v2314
      %v2316 = vpop.f32.mrf.mxu0
      %v2317 = vadd.f32 %v1994, %v2316
      %v2318 = vpop.f32.mrf.mxu0
      %v2319 = vadd.f32 %v1996, %v2318
      %v2320 = vpop.f32.mrf.mxu0
      %v2321 = vadd.f32 %v1998, %v2320
      %2322 = vmatprep.mubr.bf16.mxu0 %v1930
      %2323 = vmatmul.mubr.bf16.gmra.mxu0 %v1902
      %v2324 = vpop.f32.mrf.mxu0
      %v2325 = vadd.f32 %v2002, %v2324
      %v2326 = vpop.f32.mrf.mxu0
      %v2327 = vadd.f32 %v2004, %v2326
      %v2328 = vpop.f32.mrf.mxu0
      %v2329 = vadd.f32 %v2006, %v2328
      %v2330 = vpop.f32.mrf.mxu0
      %v2331 = vadd.f32 %v2008, %v2330
      %2332 = vmatprep.mubr.bf16.mxu0 %v1933
      %2333 = vmatmul.mubr.bf16.gmra.mxu0 %v1904
      %v2334 = vpop.f32.mrf.mxu0
      %v2335 = vadd.f32 %v2012, %v2334
      %v2336 = vpop.f32.mrf.mxu0
      %v2337 = vadd.f32 %v2014, %v2336
      %v2338 = vpop.f32.mrf.mxu0
      %v2339 = vadd.f32 %v2016, %v2338
      %v2340 = vpop.f32.mrf.mxu0
      %v2341 = vadd.f32 %v2018, %v2340
      %2342 = vmatprep.mubr.bf16.mxu0 %v1936
      %2343 = vmatmul.mubr.bf16.gmra.mxu0 %v1906
      %v2344 = vpop.f32.mrf.mxu0
      %v2345 = vadd.f32 %v2022, %v2344
      %v2346 = vpop.f32.mrf.mxu0
      %v2347 = vadd.f32 %v2024, %v2346
      %v2348 = vpop.f32.mrf.mxu0
      %v2349 = vadd.f32 %v2026, %v2348
      %v2350 = vpop.f32.mrf.mxu0
      %v2351 = vadd.f32 %v2028, %v2350
      %2352 = vmatprep.mubr.bf16.mxu0 %v1939
      %2353 = vmatmul.mubr.bf16.gmra.mxu0 %v1908
      %v2354 = vpop.f32.mrf.mxu0
      %v2355 = vadd.f32 %v2032, %v2354
      %v2356 = vpop.f32.mrf.mxu0
      %v2357 = vadd.f32 %v2034, %v2356
      %v2358 = vpop.f32.mrf.mxu0
      %v2359 = vadd.f32 %v2036, %v2358
      %v2360 = vpop.f32.mrf.mxu0
      %v2361 = vadd.f32 %v2038, %v2360
      %2362 = vmatprep.mubr.bf16.mxu0 %v1942
      %2363 = vmatmul.mubr.bf16.gmra.mxu0 %v1910
      %v2364 = vpop.f32.mrf.mxu0
      %v2365 = vadd.f32 %v2042, %v2364
      %v2366 = vpop.f32.mrf.mxu0
      %v2367 = vadd.f32 %v2044, %v2366
      %v2368 = vpop.f32.mrf.mxu0
      %v2369 = vadd.f32 %v2046, %v2368
      %v2370 = vpop.f32.mrf.mxu0
      %v2371 = vadd.f32 %v2048, %v2370
      %2372 = vmatprep.mubr.bf16.mxu0 %v1945
      %2373 = vmatmul.mubr.bf16.gmra.mxu0 %v1912
      %v2374 = vpop.f32.mrf.mxu0
      %v2375 = vadd.f32 %v2052, %v2374
      %v2376 = vpop.f32.mrf.mxu0
      %v2377 = vadd.f32 %v2054, %v2376
      %v2378 = vpop.f32.mrf.mxu0
      %v2379 = vadd.f32 %v2056, %v2378
      %v2380 = vpop.f32.mrf.mxu0
      %v2381 = vadd.f32 %v2058, %v2380
      %2382 = vdwg.mxu0
      %2383 = vmatprep.subr.bf16.mxu0 %v1548
      %2384 = vmatpush1.bf16.msra.mxu0 %v1547
      %2385 = vmatprep.subr.bf16.mxu0 %v1544
      %2386 = vmatpush1.bf16.msra.mxu0 %v1543
      %2387 = vmatprep.subr.bf16.mxu0 %v1540
      %2388 = vmatpush1.bf16.msra.mxu0 %v1539
      %2389 = vmatprep.subr.bf16.mxu0 %v1536
      %2390 = vmatpush1.bf16.msra.mxu0 %v1535
      %2391 = vmatprep.subr.bf16.mxu0 %v1370
      %2392 = vmatpush1.bf16.msra.mxu0 %v1369
      %2393 = vmatprep.subr.bf16.mxu0 %v1365
      %2394 = vmatpush1.bf16.msra.mxu0 %v1364
      %2395 = vmatprep.subr.bf16.mxu0 %v1360
      %2396 = vmatpush1.bf16.msra.mxu0 %v1359
      %2397 = vmatprep.subr.bf16.mxu0 %v1355
      %2398 = vmatpush1.bf16.msra.mxu0 %v1354
      %2399 = vmatprep.subr.bf16.mxu0 0
      %2400 = vmatpush2.bf16.msra.mxu0 0
      %2401 = vmatprep.subr.bf16.mxu0 0
      %2402 = vmatpush2.bf16.msra.mxu0 0
      %2403 = vmatprep.subr.bf16.mxu0 0
      %2404 = vmatpush2.bf16.msra.mxu0 0
      %2405 = vmatprep.subr.bf16.mxu0 0
      %2406 = vmatpush2.bf16.msra.mxu0 0
      %2407 = vmatprep.subr.bf16.mxu0 %v1625
      %2408 = vmatpush2.bf16.msra.mxu0 %v1624
      %2409 = vmatprep.subr.bf16.mxu0 %v1621
      %2410 = vmatpush2.bf16.msra.mxu0 %v1620
      %2411 = vmatprep.subr.bf16.mxu0 %v1617
      %2412 = vmatpush2.bf16.msra.mxu0 %v1616
      %2413 = vmatprep.subr.bf16.mxu0 %v1613
      %2414 = vmatpush2.bf16.msra.mxu0 %v1612
      %2415 = vmatprep.mubr.bf16.mxu0 %v1924
      %2416 = vmatmul.mubr.bf16.gmra.mxu0 %v1898
      %v2417 = vpop.f32.mrf.mxu0
      %v2418 = vadd.f32 %v2095, %v2417
      %v2419 = vpop.f32.mrf.mxu0
      %v2420 = vadd.f32 %v2097, %v2419
      %v2421 = vpop.f32.mrf.mxu0
      %v2422 = vadd.f32 %v2099, %v2421
      %v2423 = vpop.f32.mrf.mxu0
      %v2424 = vadd.f32 %v2101, %v2423
      %2425 = vmatprep.mubr.bf16.mxu0 %v1927
      %2426 = vmatmul.mubr.bf16.gmra.mxu0 %v1900
      %v2427 = vpop.f32.mrf.mxu0
      %v2428 = vadd.f32 %v2105, %v2427
      %v2429 = vpop.f32.mrf.mxu0
      %v2430 = vadd.f32 %v2107, %v2429
      %v2431 = vpop.f32.mrf.mxu0
      %v2432 = vadd.f32 %v2109, %v2431
      %v2433 = vpop.f32.mrf.mxu0
      %v2434 = vadd.f32 %v2111, %v2433
      %2435 = vmatprep.mubr.bf16.mxu0 %v1930
      %2436 = vmatmul.mubr.bf16.gmra.mxu0 %v1902
      %v2437 = vpop.f32.mrf.mxu0
      %v2438 = vadd.f32 %v2115, %v2437
      %v2439 = vpop.f32.mrf.mxu0
      %v2440 = vadd.f32 %v2117, %v2439
      %v2441 = vpop.f32.mrf.mxu0
      %v2442 = vadd.f32 %v2119, %v2441
      %v2443 = vpop.f32.mrf.mxu0
      %v2444 = vadd.f32 %v2121, %v2443
      %2445 = vmatprep.mubr.bf16.mxu0 %v1933
      %2446 = vmatmul.mubr.bf16.gmra.mxu0 %v1904
      %v2447 = vpop.f32.mrf.mxu0
      %v2448 = vadd.f32 %v2125, %v2447
      %v2449 = vpop.f32.mrf.mxu0
      %v2450 = vadd.f32 %v2127, %v2449
      %v2451 = vpop.f32.mrf.mxu0
      %v2452 = vadd.f32 %v2129, %v2451
      %v2453 = vpop.f32.mrf.mxu0
      %v2454 = vadd.f32 %v2131, %v2453
      %2455 = vmatprep.mubr.bf16.mxu0 %v1936
      %2456 = vmatmul.mubr.bf16.gmra.mxu0 %v1906
      %v2457 = vpop.f32.mrf.mxu0
      %v2458 = vadd.f32 %v2135, %v2457
      %v2459 = vpop.f32.mrf.mxu0
      %v2460 = vadd.f32 %v2137, %v2459
      %v2461 = vpop.f32.mrf.mxu0
      %v2462 = vadd.f32 %v2139, %v2461
      %v2463 = vpop.f32.mrf.mxu0
      %v2464 = vadd.f32 %v2141, %v2463
      %2465 = vmatprep.mubr.bf16.mxu0 %v1939
      %2466 = vmatmul.mubr.bf16.gmra.mxu0 %v1908
      %v2467 = vpop.f32.mrf.mxu0
      %v2468 = vadd.f32 %v2145, %v2467
      %v2469 = vpop.f32.mrf.mxu0
      %v2470 = vadd.f32 %v2147, %v2469
      %v2471 = vpop.f32.mrf.mxu0
      %v2472 = vadd.f32 %v2149, %v2471
      %v2473 = vpop.f32.mrf.mxu0
      %v2474 = vadd.f32 %v2151, %v2473
      %2475 = vmatprep.mubr.bf16.mxu0 %v1942
      %2476 = vmatmul.mubr.bf16.gmra.mxu0 %v1910
      %v2477 = vpop.f32.mrf.mxu0
      %v2478 = vadd.f32 %v2155, %v2477
      %v2479 = vpop.f32.mrf.mxu0
      %v2480 = vadd.f32 %v2157, %v2479
      %v2481 = vpop.f32.mrf.mxu0
      %v2482 = vadd.f32 %v2159, %v2481
      %v2483 = vpop.f32.mrf.mxu0
      %v2484 = vadd.f32 %v2161, %v2483
      %2485 = vmatprep.mubr.bf16.mxu0 %v1945
      %2486 = vmatmul.mubr.bf16.gmra.mxu0 %v1912
      %v2487 = vpop.f32.mrf.mxu0
      %v2488 = vadd.f32 %v2165, %v2487
      %v2489 = vpop.f32.mrf.mxu0
      %v2490 = vadd.f32 %v2167, %v2489
      %v2491 = vpop.f32.mrf.mxu0
      %v2492 = vadd.f32 %v2169, %v2491
      %v2493 = vpop.f32.mrf.mxu0
      %v2494 = vadd.f32 %v2171, %v2493
      %2495 = vdwg.mxu0
      %2496 = vmatprep.subr.bf16.mxu0 0
      %2497 = vmatpush1.bf16.msra.mxu0 %v1531
      %2498 = vmatprep.subr.bf16.mxu0 0
      %2499 = vmatpush1.bf16.msra.mxu0 %v1521
      %2500 = vmatprep.subr.bf16.mxu0 0
      %2501 = vmatpush1.bf16.msra.mxu0 %v1511
      %2502 = vmatprep.subr.bf16.mxu0 0
      %2503 = vmatpush1.bf16.msra.mxu0 %v1501
      %2504 = vmatprep.subr.bf16.mxu0 0
      %2505 = vmatpush1.bf16.msra.mxu0 %v1371
      %2506 = vmatprep.subr.bf16.mxu0 0
      %2507 = vmatpush1.bf16.msra.mxu0 %v1366
      %2508 = vmatprep.subr.bf16.mxu0 0
      %2509 = vmatpush1.bf16.msra.mxu0 %v1361
      %2510 = vmatprep.subr.bf16.mxu0 0
      %2511 = vmatpush1.bf16.msra.mxu0 %v1356
      %2512 = vmatprep.subr.bf16.mxu0 0
      %2513 = vmatpush2.bf16.msra.mxu0 0
      %2514 = vmatprep.subr.bf16.mxu0 0
      %2515 = vmatpush2.bf16.msra.mxu0 0
      %2516 = vmatprep.subr.bf16.mxu0 0
      %2517 = vmatpush2.bf16.msra.mxu0 0
      %2518 = vmatprep.subr.bf16.mxu0 0
      %2519 = vmatpush2.bf16.msra.mxu0 0
      %2520 = vmatprep.subr.bf16.mxu0 0
      %2521 = vmatpush2.bf16.msra.mxu0 %v1608
      %2522 = vmatprep.subr.bf16.mxu0 0
      %2523 = vmatpush2.bf16.msra.mxu0 %v1598
      %2524 = vmatprep.subr.bf16.mxu0 0
      %2525 = vmatpush2.bf16.msra.mxu0 %v1588
      %2526 = vmatprep.subr.bf16.mxu0 0
      %2527 = vmatpush2.bf16.msra.mxu0 %v1578
      %2528 = vmatprep.mubr.bf16.mxu0 %v1924
      %2529 = vmatmul.mubr.bf16.gmra.mxu0 %v1898
      %v2530 = vpop.f32.mrf.mxu0
      %v2531 = vadd.f32 %v2208, %v2530
      %v2532 = vpop.f32.mrf.mxu0
      %v2533 = vpop.f32.mrf.mxu0
      %v2534 = vadd.f32 %v2211, %v2533
      %v2535 = vpop.f32.mrf.mxu0
      %2536 = vmatprep.mubr.bf16.mxu0 %v1927
      %2537 = vmatmul.mubr.bf16.gmra.mxu0 %v1900
      %v2538 = vpop.f32.mrf.mxu0
      %v2539 = vadd.f32 %v2216, %v2538
      %v2540 = vpop.f32.mrf.mxu0
      %v2541 = vpop.f32.mrf.mxu0
      %v2542 = vadd.f32 %v2219, %v2541
      %v2543 = vpop.f32.mrf.mxu0
      %2544 = vmatprep.mubr.bf16.mxu0 %v1930
      %2545 = vmatmul.mubr.bf16.gmra.mxu0 %v1902
      %v2546 = vpop.f32.mrf.mxu0
      %v2547 = vadd.f32 %v2224, %v2546
      %v2548 = vpop.f32.mrf.mxu0
      %v2549 = vpop.f32.mrf.mxu0
      %v2550 = vadd.f32 %v2227, %v2549
      %v2551 = vpop.f32.mrf.mxu0
      %2552 = vmatprep.mubr.bf16.mxu0 %v1933
      %2553 = vmatmul.mubr.bf16.gmra.mxu0 %v1904
      %v2554 = vpop.f32.mrf.mxu0
      %v2555 = vadd.f32 %v2232, %v2554
      %v2556 = vpop.f32.mrf.mxu0
      %v2557 = vpop.f32.mrf.mxu0
      %v2558 = vadd.f32 %v2235, %v2557
      %v2559 = vpop.f32.mrf.mxu0
      %2560 = vmatprep.mubr.bf16.mxu0 %v1936
      %2561 = vmatmul.mubr.bf16.gmra.mxu0 %v1906
      %v2562 = vpop.f32.mrf.mxu0
      %v2563 = vadd.f32 %v2240, %v2562
      %v2564 = vpop.f32.mrf.mxu0
      %v2565 = vpop.f32.mrf.mxu0
      %v2566 = vadd.f32 %v2243, %v2565
      %v2567 = vpop.f32.mrf.mxu0
      %2568 = vmatprep.mubr.bf16.mxu0 %v1939
      %2569 = vmatmul.mubr.bf16.gmra.mxu0 %v1908
      %v2570 = vpop.f32.mrf.mxu0
      %v2571 = vadd.f32 %v2248, %v2570
      %v2572 = vpop.f32.mrf.mxu0
      %v2573 = vpop.f32.mrf.mxu0
      %v2574 = vadd.f32 %v2251, %v2573
      %v2575 = vpop.f32.mrf.mxu0
      %2576 = vmatprep.mubr.bf16.mxu0 %v1942
      %2577 = vmatmul.mubr.bf16.gmra.mxu0 %v1910
      %v2578 = vpop.f32.mrf.mxu0
      %v2579 = vadd.f32 %v2256, %v2578
      %v2580 = vpop.f32.mrf.mxu0
      %v2581 = vpop.f32.mrf.mxu0
      %v2582 = vadd.f32 %v2259, %v2581
      %v2583 = vpop.f32.mrf.mxu0
      %2584 = vmatprep.mubr.bf16.mxu0 %v1945
      %2585 = vmatmul.mubr.bf16.gmra.mxu0 %v1912
      %v2586 = vpop.f32.mrf.mxu0
      %v2587 = vadd.f32 %v2264, %v2586
      %v2588 = vpop.f32.mrf.mxu0
      %v2589 = vpop.f32.mrf.mxu0
      %v2590 = vadd.f32 %v2267, %v2589
      %v2591 = vpop.f32.mrf.mxu0
      %2592 = vdwg.mxu0
      %v2609 = vunpack.c.l.b16 %v1834
      %v2610 = vunpack.c.h.b16 %v1834
      %v2611 = vunpack.c.l.b16 %v1835
      %v2612 = vunpack.c.h.b16 %v1835
      %v2613 = vunpack.c.l.b16 %v1836
      %v2614 = vunpack.c.h.b16 %v1836
      %v2615 = vunpack.c.l.b16 %v1837
      %v2616 = vunpack.c.h.b16 %v1837
      %v2617 = vunpack.c.l.b16 %v1838
      %v2618 = vunpack.c.h.b16 %v1838
      %v2619 = vunpack.c.l.b16 %v1839
      %v2620 = vunpack.c.h.b16 %v1839
      %v2621 = vunpack.c.l.b16 %v1840
      %v2622 = vunpack.c.h.b16 %v1840
      %v2623 = vunpack.c.l.b16 %v1841
      %v2624 = vunpack.c.h.b16 %v1841
      %v2625 = vunpack.c.l.b16 %v1842
      %v2626 = vunpack.c.h.b16 %v1842
      %v2627 = vunpack.c.l.b16 %v1843
      %v2628 = vunpack.c.h.b16 %v1843
      %v2629 = vunpack.c.l.b16 %v1844
      %v2630 = vunpack.c.h.b16 %v1844
      %v2631 = vunpack.c.l.b16 %v1845
      %v2632 = vunpack.c.h.b16 %v1845
      %v2633 = vunpack.c.l.b16 %v1846
      %v2634 = vunpack.c.h.b16 %v1846
      %v2635 = vunpack.c.l.b16 %v1847
      %v2636 = vunpack.c.h.b16 %v1847
      %v2637 = vunpack.c.l.b16 %v1848
      %v2638 = vunpack.c.h.b16 %v1848
      %v2639 = vunpack.c.l.b16 %v1849
      %v2640 = vunpack.c.h.b16 %v1849
      %v2641 = vpack.c.b16 %v2611, %v2609
      %v2642 = vpack.c.b16 %v2612, %v2610
      %v2643 = vpack.c.b16 %v2615, %v2613
      %v2644 = vpack.c.b16 %v2616, %v2614
      %v2645 = vpack.c.b16 %v2619, %v2617
      %v2646 = vpack.c.b16 %v2620, %v2618
      %v2647 = vpack.c.b16 %v2623, %v2621
      %v2648 = vpack.c.b16 %v2624, %v2622
      %v2649 = vpack.c.b16 %v2627, %v2625
      %v2650 = vpack.c.b16 %v2628, %v2626
      %v2651 = vpack.c.b16 %v2631, %v2629
      %v2652 = vpack.c.b16 %v2632, %v2630
      %v2653 = vpack.c.b16 %v2635, %v2633
      %v2654 = vpack.c.b16 %v2636, %v2634
      %v2655 = vpack.c.b16 %v2639, %v2637
      %v2656 = vpack.c.b16 %v2640, %v2638
      %v2666 = vsel %vm1922, %v2642, 0
      %v2669 = vsel %vm1922, %v2644, 0
      %v2672 = vsel %vm1922, %v2646, 0
      %v2675 = vsel %vm1922, %v2648, 0
      %v2678 = vsel %vm1922, %v2650, 0
      %v2681 = vsel %vm1922, %v2652, 0
      %v2684 = vsel %vm1922, %v2654, 0
      %v2687 = vsel %vm1922, %v2656, 0
      %2689 = vmatprep.subr.bf16.mxu0 %v1546
      %2690 = vmatpush1.bf16.msra.mxu0 %v1545
      %2691 = vmatprep.subr.bf16.mxu0 %v1542
      %2692 = vmatpush1.bf16.msra.mxu0 %v1541
      %2693 = vmatprep.subr.bf16.mxu0 %v1538
      %2694 = vmatpush1.bf16.msra.mxu0 %v1537
      %2695 = vmatprep.subr.bf16.mxu0 %v1534
      %2696 = vmatpush1.bf16.msra.mxu0 %v1533
      %2697 = vmatprep.subr.bf16.mxu0 %v1368
      %2698 = vmatpush1.bf16.msra.mxu0 %v1367
      %2699 = vmatprep.subr.bf16.mxu0 %v1363
      %2700 = vmatpush1.bf16.msra.mxu0 %v1362
      %2701 = vmatprep.subr.bf16.mxu0 %v1358
      %2702 = vmatpush1.bf16.msra.mxu0 %v1357
      %2703 = vmatprep.subr.bf16.mxu0 %v1353
      %2704 = vmatpush1.bf16.msra.mxu0 %v1352
      %2705 = vmatprep.subr.bf16.mxu0 0
      %2706 = vmatpush2.bf16.msra.mxu0 0
      %2707 = vmatprep.subr.bf16.mxu0 0
      %2708 = vmatpush2.bf16.msra.mxu0 0
      %2709 = vmatprep.subr.bf16.mxu0 0
      %2710 = vmatpush2.bf16.msra.mxu0 0
      %2711 = vmatprep.subr.bf16.mxu0 0
      %2712 = vmatpush2.bf16.msra.mxu0 0
      %2713 = vmatprep.subr.bf16.mxu0 %v1623
      %2714 = vmatpush2.bf16.msra.mxu0 %v1622
      %2715 = vmatprep.subr.bf16.mxu0 %v1619
      %2716 = vmatpush2.bf16.msra.mxu0 %v1618
      %2717 = vmatprep.subr.bf16.mxu0 %v1615
      %2718 = vmatpush2.bf16.msra.mxu0 %v1614
      %2719 = vmatprep.subr.bf16.mxu0 %v1611
      %2720 = vmatpush2.bf16.msra.mxu0 %v1610
      %2721 = vmatprep.mubr.bf16.mxu0 %v2666
      %2722 = vmatmul.mubr.bf16.gmra.mxu0 %v2641
      %v2723 = vpop.f32.mrf.mxu0
      %v2724 = vadd.f32 0.0, %v2723
      %v2725 = vpop.f32.mrf.mxu0
      %v2726 = vadd.f32 0.0, %v2725
      %v2727 = vpop.f32.mrf.mxu0
      %v2728 = vadd.f32 0.0, %v2727
      %v2729 = vpop.f32.mrf.mxu0
      %v2730 = vadd.f32 0.0, %v2729
      %2731 = vmatprep.mubr.bf16.mxu0 %v2669
      %2732 = vmatmul.mubr.bf16.gmra.mxu0 %v2643
      %v2733 = vpop.f32.mrf.mxu0
      %v2734 = vadd.f32 0.0, %v2733
      %v2735 = vpop.f32.mrf.mxu0
      %v2736 = vadd.f32 0.0, %v2735
      %v2737 = vpop.f32.mrf.mxu0
      %v2738 = vadd.f32 0.0, %v2737
      %v2739 = vpop.f32.mrf.mxu0
      %v2740 = vadd.f32 0.0, %v2739
      %2741 = vmatprep.mubr.bf16.mxu0 %v2672
      %2742 = vmatmul.mubr.bf16.gmra.mxu0 %v2645
      %v2743 = vpop.f32.mrf.mxu0
      %v2744 = vadd.f32 0.0, %v2743
      %v2745 = vpop.f32.mrf.mxu0
      %v2746 = vadd.f32 0.0, %v2745
      %v2747 = vpop.f32.mrf.mxu0
      %v2748 = vadd.f32 0.0, %v2747
      %v2749 = vpop.f32.mrf.mxu0
      %v2750 = vadd.f32 0.0, %v2749
      %2751 = vmatprep.mubr.bf16.mxu0 %v2675
      %2752 = vmatmul.mubr.bf16.gmra.mxu0 %v2647
      %v2753 = vpop.f32.mrf.mxu0
      %v2754 = vadd.f32 0.0, %v2753
      %v2755 = vpop.f32.mrf.mxu0
      %v2756 = vadd.f32 0.0, %v2755
      %v2757 = vpop.f32.mrf.mxu0
      %v2758 = vadd.f32 0.0, %v2757
      %v2759 = vpop.f32.mrf.mxu0
      %v2760 = vadd.f32 0.0, %v2759
      %2761 = vmatprep.mubr.bf16.mxu0 %v2678
      %2762 = vmatmul.mubr.bf16.gmra.mxu0 %v2649
      %v2763 = vpop.f32.mrf.mxu0
      %v2764 = vadd.f32 0.0, %v2763
      %v2765 = vpop.f32.mrf.mxu0
      %v2766 = vadd.f32 0.0, %v2765
      %v2767 = vpop.f32.mrf.mxu0
      %v2768 = vadd.f32 0.0, %v2767
      %v2769 = vpop.f32.mrf.mxu0
      %v2770 = vadd.f32 0.0, %v2769
      %2771 = vmatprep.mubr.bf16.mxu0 %v2681
      %2772 = vmatmul.mubr.bf16.gmra.mxu0 %v2651
      %v2773 = vpop.f32.mrf.mxu0
      %v2774 = vadd.f32 0.0, %v2773
      %v2775 = vpop.f32.mrf.mxu0
      %v2776 = vadd.f32 0.0, %v2775
      %v2777 = vpop.f32.mrf.mxu0
      %v2778 = vadd.f32 0.0, %v2777
      %v2779 = vpop.f32.mrf.mxu0
      %v2780 = vadd.f32 0.0, %v2779
      %2781 = vmatprep.mubr.bf16.mxu0 %v2684
      %2782 = vmatmul.mubr.bf16.gmra.mxu0 %v2653
      %v2783 = vpop.f32.mrf.mxu0
      %v2784 = vadd.f32 0.0, %v2783
      %v2785 = vpop.f32.mrf.mxu0
      %v2786 = vadd.f32 0.0, %v2785
      %v2787 = vpop.f32.mrf.mxu0
      %v2788 = vadd.f32 0.0, %v2787
      %v2789 = vpop.f32.mrf.mxu0
      %v2790 = vadd.f32 0.0, %v2789
      %2791 = vmatprep.mubr.bf16.mxu0 %v2687
      %2792 = vmatmul.mubr.bf16.gmra.mxu0 %v2655
      %v2793 = vpop.f32.mrf.mxu0
      %v2794 = vadd.f32 0.0, %v2793
      %v2795 = vpop.f32.mrf.mxu0
      %v2796 = vadd.f32 0.0, %v2795
      %v2797 = vpop.f32.mrf.mxu0
      %v2798 = vadd.f32 0.0, %v2797
      %v2799 = vpop.f32.mrf.mxu0
      %v2800 = vadd.f32 0.0, %v2799
      %2801 = vdwg.mxu0
      %2802 = vmatprep.subr.bf16.mxu0 %v1548
      %2803 = vmatpush1.bf16.msra.mxu0 %v1547
      %2804 = vmatprep.subr.bf16.mxu0 %v1544
      %2805 = vmatpush1.bf16.msra.mxu0 %v1543
      %2806 = vmatprep.subr.bf16.mxu0 %v1540
      %2807 = vmatpush1.bf16.msra.mxu0 %v1539
      %2808 = vmatprep.subr.bf16.mxu0 %v1536
      %2809 = vmatpush1.bf16.msra.mxu0 %v1535
      %2810 = vmatprep.subr.bf16.mxu0 %v1370
      %2811 = vmatpush1.bf16.msra.mxu0 %v1369
      %2812 = vmatprep.subr.bf16.mxu0 %v1365
      %2813 = vmatpush1.bf16.msra.mxu0 %v1364
      %2814 = vmatprep.subr.bf16.mxu0 %v1360
      %2815 = vmatpush1.bf16.msra.mxu0 %v1359
      %2816 = vmatprep.subr.bf16.mxu0 %v1355
      %2817 = vmatpush1.bf16.msra.mxu0 %v1354
      %2818 = vmatprep.subr.bf16.mxu0 0
      %2819 = vmatpush2.bf16.msra.mxu0 0
      %2820 = vmatprep.subr.bf16.mxu0 0
      %2821 = vmatpush2.bf16.msra.mxu0 0
      %2822 = vmatprep.subr.bf16.mxu0 0
      %2823 = vmatpush2.bf16.msra.mxu0 0
      %2824 = vmatprep.subr.bf16.mxu0 0
      %2825 = vmatpush2.bf16.msra.mxu0 0
      %2826 = vmatprep.subr.bf16.mxu0 %v1625
      %2827 = vmatpush2.bf16.msra.mxu0 %v1624
      %2828 = vmatprep.subr.bf16.mxu0 %v1621
      %2829 = vmatpush2.bf16.msra.mxu0 %v1620
      %2830 = vmatprep.subr.bf16.mxu0 %v1617
      %2831 = vmatpush2.bf16.msra.mxu0 %v1616
      %2832 = vmatprep.subr.bf16.mxu0 %v1613
      %2833 = vmatpush2.bf16.msra.mxu0 %v1612
      %2834 = vmatprep.mubr.bf16.mxu0 %v2666
      %2835 = vmatmul.mubr.bf16.gmra.mxu0 %v2641
      %v2836 = vpop.f32.mrf.mxu0
      %v2837 = vadd.f32 0.0, %v2836
      %v2838 = vpop.f32.mrf.mxu0
      %v2839 = vadd.f32 0.0, %v2838
      %v2840 = vpop.f32.mrf.mxu0
      %v2841 = vadd.f32 0.0, %v2840
      %v2842 = vpop.f32.mrf.mxu0
      %v2843 = vadd.f32 0.0, %v2842
      %2844 = vmatprep.mubr.bf16.mxu0 %v2669
      %2845 = vmatmul.mubr.bf16.gmra.mxu0 %v2643
      %v2846 = vpop.f32.mrf.mxu0
      %v2847 = vadd.f32 0.0, %v2846
      %v2848 = vpop.f32.mrf.mxu0
      %v2849 = vadd.f32 0.0, %v2848
      %v2850 = vpop.f32.mrf.mxu0
      %v2851 = vadd.f32 0.0, %v2850
      %v2852 = vpop.f32.mrf.mxu0
      %v2853 = vadd.f32 0.0, %v2852
      %2854 = vmatprep.mubr.bf16.mxu0 %v2672
      %2855 = vmatmul.mubr.bf16.gmra.mxu0 %v2645
      %v2856 = vpop.f32.mrf.mxu0
      %v2857 = vadd.f32 0.0, %v2856
      %v2858 = vpop.f32.mrf.mxu0
      %v2859 = vadd.f32 0.0, %v2858
      %v2860 = vpop.f32.mrf.mxu0
      %v2861 = vadd.f32 0.0, %v2860
      %v2862 = vpop.f32.mrf.mxu0
      %v2863 = vadd.f32 0.0, %v2862
      %2864 = vmatprep.mubr.bf16.mxu0 %v2675
      %2865 = vmatmul.mubr.bf16.gmra.mxu0 %v2647
      %v2866 = vpop.f32.mrf.mxu0
      %v2867 = vadd.f32 0.0, %v2866
      %v2868 = vpop.f32.mrf.mxu0
      %v2869 = vadd.f32 0.0, %v2868
      %v2870 = vpop.f32.mrf.mxu0
      %v2871 = vadd.f32 0.0, %v2870
      %v2872 = vpop.f32.mrf.mxu0
      %v2873 = vadd.f32 0.0, %v2872
      %2874 = vmatprep.mubr.bf16.mxu0 %v2678
      %2875 = vmatmul.mubr.bf16.gmra.mxu0 %v2649
      %v2876 = vpop.f32.mrf.mxu0
      %v2877 = vadd.f32 0.0, %v2876
      %v2878 = vpop.f32.mrf.mxu0
      %v2879 = vadd.f32 0.0, %v2878
      %v2880 = vpop.f32.mrf.mxu0
      %v2881 = vadd.f32 0.0, %v2880
      %v2882 = vpop.f32.mrf.mxu0
      %v2883 = vadd.f32 0.0, %v2882
      %2884 = vmatprep.mubr.bf16.mxu0 %v2681
      %2885 = vmatmul.mubr.bf16.gmra.mxu0 %v2651
      %v2886 = vpop.f32.mrf.mxu0
      %v2887 = vadd.f32 0.0, %v2886
      %v2888 = vpop.f32.mrf.mxu0
      %v2889 = vadd.f32 0.0, %v2888
      %v2890 = vpop.f32.mrf.mxu0
      %v2891 = vadd.f32 0.0, %v2890
      %v2892 = vpop.f32.mrf.mxu0
      %v2893 = vadd.f32 0.0, %v2892
      %2894 = vmatprep.mubr.bf16.mxu0 %v2684
      %2895 = vmatmul.mubr.bf16.gmra.mxu0 %v2653
      %v2896 = vpop.f32.mrf.mxu0
      %v2897 = vadd.f32 0.0, %v2896
      %v2898 = vpop.f32.mrf.mxu0
      %v2899 = vadd.f32 0.0, %v2898
      %v2900 = vpop.f32.mrf.mxu0
      %v2901 = vadd.f32 0.0, %v2900
      %v2902 = vpop.f32.mrf.mxu0
      %v2903 = vadd.f32 0.0, %v2902
      %2904 = vmatprep.mubr.bf16.mxu0 %v2687
      %2905 = vmatmul.mubr.bf16.gmra.mxu0 %v2655
      %v2906 = vpop.f32.mrf.mxu0
      %v2907 = vadd.f32 0.0, %v2906
      %v2908 = vpop.f32.mrf.mxu0
      %v2909 = vadd.f32 0.0, %v2908
      %v2910 = vpop.f32.mrf.mxu0
      %v2911 = vadd.f32 0.0, %v2910
      %v2912 = vpop.f32.mrf.mxu0
      %v2913 = vadd.f32 0.0, %v2912
      %2914 = vdwg.mxu0
      %2915 = vmatprep.subr.bf16.mxu0 0
      %2916 = vmatpush1.bf16.msra.mxu0 %v1531
      %2917 = vmatprep.subr.bf16.mxu0 0
      %2918 = vmatpush1.bf16.msra.mxu0 %v1521
      %2919 = vmatprep.subr.bf16.mxu0 0
      %2920 = vmatpush1.bf16.msra.mxu0 %v1511
      %2921 = vmatprep.subr.bf16.mxu0 0
      %2922 = vmatpush1.bf16.msra.mxu0 %v1501
      %2923 = vmatprep.subr.bf16.mxu0 0
      %2924 = vmatpush1.bf16.msra.mxu0 %v1371
      %2925 = vmatprep.subr.bf16.mxu0 0
      %2926 = vmatpush1.bf16.msra.mxu0 %v1366
      %2927 = vmatprep.subr.bf16.mxu0 0
      %2928 = vmatpush1.bf16.msra.mxu0 %v1361
      %2929 = vmatprep.subr.bf16.mxu0 0
      %2930 = vmatpush1.bf16.msra.mxu0 %v1356
      %2931 = vmatprep.subr.bf16.mxu0 0
      %2932 = vmatpush2.bf16.msra.mxu0 0
      %2933 = vmatprep.subr.bf16.mxu0 0
      %2934 = vmatpush2.bf16.msra.mxu0 0
      %2935 = vmatprep.subr.bf16.mxu0 0
      %2936 = vmatpush2.bf16.msra.mxu0 0
      %2937 = vmatprep.subr.bf16.mxu0 0
      %2938 = vmatpush2.bf16.msra.mxu0 0
      %2939 = vmatprep.subr.bf16.mxu0 0
      %2940 = vmatpush2.bf16.msra.mxu0 %v1608
      %2941 = vmatprep.subr.bf16.mxu0 0
      %2942 = vmatpush2.bf16.msra.mxu0 %v1598
      %2943 = vmatprep.subr.bf16.mxu0 0
      %2944 = vmatpush2.bf16.msra.mxu0 %v1588
      %2945 = vmatprep.subr.bf16.mxu0 0
      %2946 = vmatpush2.bf16.msra.mxu0 %v1578
      %2947 = vmatprep.mubr.bf16.mxu0 %v2666
      %2948 = vmatmul.mubr.bf16.gmra.mxu0 %v2641
      %v2949 = vpop.f32.mrf.mxu0
      %v2950 = vadd.f32 0.0, %v2949
      %v2951 = vpop.f32.mrf.mxu0
      %v2952 = vpop.f32.mrf.mxu0
      %v2953 = vadd.f32 0.0, %v2952
      %v2954 = vpop.f32.mrf.mxu0
      %2955 = vmatprep.mubr.bf16.mxu0 %v2669
      %2956 = vmatmul.mubr.bf16.gmra.mxu0 %v2643
      %v2957 = vpop.f32.mrf.mxu0
      %v2958 = vadd.f32 0.0, %v2957
      %v2959 = vpop.f32.mrf.mxu0
      %v2960 = vpop.f32.mrf.mxu0
      %v2961 = vadd.f32 0.0, %v2960
      %v2962 = vpop.f32.mrf.mxu0
      %2963 = vmatprep.mubr.bf16.mxu0 %v2672
      %2964 = vmatmul.mubr.bf16.gmra.mxu0 %v2645
      %v2965 = vpop.f32.mrf.mxu0
      %v2966 = vadd.f32 0.0, %v2965
      %v2967 = vpop.f32.mrf.mxu0
      %v2968 = vpop.f32.mrf.mxu0
      %v2969 = vadd.f32 0.0, %v2968
      %v2970 = vpop.f32.mrf.mxu0
      %2971 = vmatprep.mubr.bf16.mxu0 %v2675
      %2972 = vmatmul.mubr.bf16.gmra.mxu0 %v2647
      %v2973 = vpop.f32.mrf.mxu0
      %v2974 = vadd.f32 0.0, %v2973
      %v2975 = vpop.f32.mrf.mxu0
      %v2976 = vpop.f32.mrf.mxu0
      %v2977 = vadd.f32 0.0, %v2976
      %v2978 = vpop.f32.mrf.mxu0
      %2979 = vmatprep.mubr.bf16.mxu0 %v2678
      %2980 = vmatmul.mubr.bf16.gmra.mxu0 %v2649
      %v2981 = vpop.f32.mrf.mxu0
      %v2982 = vadd.f32 0.0, %v2981
      %v2983 = vpop.f32.mrf.mxu0
      %v2984 = vpop.f32.mrf.mxu0
      %v2985 = vadd.f32 0.0, %v2984
      %v2986 = vpop.f32.mrf.mxu0
      %2987 = vmatprep.mubr.bf16.mxu0 %v2681
      %2988 = vmatmul.mubr.bf16.gmra.mxu0 %v2651
      %v2989 = vpop.f32.mrf.mxu0
      %v2990 = vadd.f32 0.0, %v2989
      %v2991 = vpop.f32.mrf.mxu0
      %v2992 = vpop.f32.mrf.mxu0
      %v2993 = vadd.f32 0.0, %v2992
      %v2994 = vpop.f32.mrf.mxu0
      %2995 = vmatprep.mubr.bf16.mxu0 %v2684
      %2996 = vmatmul.mubr.bf16.gmra.mxu0 %v2653
      %v2997 = vpop.f32.mrf.mxu0
      %v2998 = vadd.f32 0.0, %v2997
      %v2999 = vpop.f32.mrf.mxu0
      %v3000 = vpop.f32.mrf.mxu0
      %v3001 = vadd.f32 0.0, %v3000
      %v3002 = vpop.f32.mrf.mxu0
      %3003 = vmatprep.mubr.bf16.mxu0 %v2687
      %3004 = vmatmul.mubr.bf16.gmra.mxu0 %v2655
      %v3005 = vpop.f32.mrf.mxu0
      %v3006 = vadd.f32 0.0, %v3005
      %v3007 = vpop.f32.mrf.mxu0
      %v3008 = vpop.f32.mrf.mxu0
      %v3009 = vadd.f32 0.0, %v3008
      %v3010 = vpop.f32.mrf.mxu0
      %3011 = vdwg.mxu0
      %v3012 = vadd.f32 %v2305, %v2724
      %v3013 = vadd.f32 %v2307, %v2726
      %v3014 = vadd.f32 %v2418, %v2837
      %v3015 = vadd.f32 %v2420, %v2839
      %v3016 = vadd.f32 %v2531, %v2950
      %v3017 = vadd.f32 %v2309, %v2728
      %v3018 = vadd.f32 %v2311, %v2730
      %v3019 = vadd.f32 %v2422, %v2841
      %v3020 = vadd.f32 %v2424, %v2843
      %v3021 = vadd.f32 %v2534, %v2953
      %v3022 = vadd.f32 %v2315, %v2734
      %v3023 = vadd.f32 %v2317, %v2736
      %v3024 = vadd.f32 %v2428, %v2847
      %v3025 = vadd.f32 %v2430, %v2849
      %v3026 = vadd.f32 %v2539, %v2958
      %v3027 = vadd.f32 %v2319, %v2738
      %v3028 = vadd.f32 %v2321, %v2740
      %v3029 = vadd.f32 %v2432, %v2851
      %v3030 = vadd.f32 %v2434, %v2853
      %v3031 = vadd.f32 %v2542, %v2961
      %v3032 = vadd.f32 %v2325, %v2744
      %v3033 = vadd.f32 %v2327, %v2746
      %v3034 = vadd.f32 %v2438, %v2857
      %v3035 = vadd.f32 %v2440, %v2859
      %v3036 = vadd.f32 %v2547, %v2966
      %v3037 = vadd.f32 %v2329, %v2748
      %v3038 = vadd.f32 %v2331, %v2750
      %v3039 = vadd.f32 %v2442, %v2861
      %v3040 = vadd.f32 %v2444, %v2863
      %v3041 = vadd.f32 %v2550, %v2969
      %v3042 = vadd.f32 %v2335, %v2754
      %v3043 = vadd.f32 %v2337, %v2756
      %v3044 = vadd.f32 %v2448, %v2867
      %v3045 = vadd.f32 %v2450, %v2869
      %v3046 = vadd.f32 %v2555, %v2974
      %v3047 = vadd.f32 %v2339, %v2758
      %v3048 = vadd.f32 %v2341, %v2760
      %v3049 = vadd.f32 %v2452, %v2871
      %v3050 = vadd.f32 %v2454, %v2873
      %v3051 = vadd.f32 %v2558, %v2977
      %v3052 = vadd.f32 %v2345, %v2764
      %v3053 = vadd.f32 %v2347, %v2766
      %v3054 = vadd.f32 %v2458, %v2877
      %v3055 = vadd.f32 %v2460, %v2879
      %v3056 = vadd.f32 %v2563, %v2982
      %v3057 = vadd.f32 %v2349, %v2768
      %v3058 = vadd.f32 %v2351, %v2770
      %v3059 = vadd.f32 %v2462, %v2881
      %v3060 = vadd.f32 %v2464, %v2883
      %v3061 = vadd.f32 %v2566, %v2985
      %v3062 = vadd.f32 %v2355, %v2774
      %v3063 = vadd.f32 %v2357, %v2776
      %v3064 = vadd.f32 %v2468, %v2887
      %v3065 = vadd.f32 %v2470, %v2889
      %v3066 = vadd.f32 %v2571, %v2990
      %v3067 = vadd.f32 %v2359, %v2778
      %v3068 = vadd.f32 %v2361, %v2780
      %v3069 = vadd.f32 %v2472, %v2891
      %v3070 = vadd.f32 %v2474, %v2893
      %v3071 = vadd.f32 %v2574, %v2993
      %v3072 = vadd.f32 %v2365, %v2784
      %v3073 = vadd.f32 %v2367, %v2786
      %v3074 = vadd.f32 %v2478, %v2897
      %v3075 = vadd.f32 %v2480, %v2899
      %v3076 = vadd.f32 %v2579, %v2998
      %v3077 = vadd.f32 %v2369, %v2788
      %v3078 = vadd.f32 %v2371, %v2790
      %v3079 = vadd.f32 %v2482, %v2901
      %v3080 = vadd.f32 %v2484, %v2903
      %v3081 = vadd.f32 %v2582, %v3001
      %v3082 = vadd.f32 %v2375, %v2794
      %v3083 = vadd.f32 %v2377, %v2796
      %v3084 = vadd.f32 %v2488, %v2907
      %v3085 = vadd.f32 %v2490, %v2909
      %v3086 = vadd.f32 %v2587, %v3006
      %v3087 = vadd.f32 %v2379, %v2798
      %v3088 = vadd.f32 %v2381, %v2800
      %v3089 = vadd.f32 %v2492, %v2911
      %v3090 = vadd.f32 %v2494, %v2913
      %v3091 = vadd.f32 %v2590, %v3009
      %v3092 = vld [vmem:[%s5] sm:$0xff]
      %v3093 = vld [vmem:[%s5 + $0x8] sm:$0xff]
      %v3094 = vld [vmem:[%s5 + $0x10] sm:$0xff]
      %v3095 = vld [vmem:[%s5 + $0x18] sm:$0xff]
      %v3096 = vld [vmem:[%s5 + $0x20] sm:$0xff]
      %v3097 = vld [vmem:[%s5 + $0x28] sm:$0xff]
      %v3098 = vld [vmem:[%s5 + $0x30] sm:$0xff]
      %v3099 = vld [vmem:[%s5 + $0x38] sm:$0xff]
      %v3100 = vld [vmem:[%s5 + $0x40] sm:$0xff]
      %v3101 = vld [vmem:[%s5 + $0x48] sm:$0xff]
      %v3102 = vld [vmem:[%s5 + $0x50] sm:$0xff]
      %v3103 = vld [vmem:[%s5 + $0x58] sm:$0xff]
      %v3104 = vld [vmem:[%s5 + $0x60] sm:$0xff]
      %v3105 = vld [vmem:[%s5 + $0x68] sm:$0xff]
      %v3106 = vld [vmem:[%s5 + $0x70] sm:$0xff]
      %v3107 = vld [vmem:[%s5 + $0x78] sm:$0xff]
      %3109 = vset.pattern.permute.xlu0 0
      %3110 = vperm.xlu0 %3109, %v3092
      %v3111 = vpop.permute.xlu0 %3110
      %3114 = vset.pattern.permute.xlu0 0
      %3115 = vperm.xlu0 %3114, %v3093
      %v3116 = vpop.permute.xlu0 %3115
      %3119 = vset.pattern.permute.xlu0 0
      %3120 = vperm.xlu0 %3119, %v3094
      %v3121 = vpop.permute.xlu0 %3120
      %3124 = vset.pattern.permute.xlu0 0
      %3125 = vperm.xlu0 %3124, %v3095
      %v3126 = vpop.permute.xlu0 %3125
      %3129 = vset.pattern.permute.xlu0 0
      %3130 = vperm.xlu0 %3129, %v3096
      %v3131 = vpop.permute.xlu0 %3130
      %3134 = vset.pattern.permute.xlu0 0
      %3135 = vperm.xlu0 %3134, %v3097
      %v3136 = vpop.permute.xlu0 %3135
      %3139 = vset.pattern.permute.xlu0 0
      %3140 = vperm.xlu0 %3139, %v3098
      %v3141 = vpop.permute.xlu0 %3140
      %3144 = vset.pattern.permute.xlu0 0
      %3145 = vperm.xlu0 %3144, %v3099
      %v3146 = vpop.permute.xlu0 %3145
      %3149 = vset.pattern.permute.xlu0 0
      %3150 = vperm.xlu0 %3149, %v3100
      %v3151 = vpop.permute.xlu0 %3150
      %3154 = vset.pattern.permute.xlu0 0
      %3155 = vperm.xlu0 %3154, %v3101
      %v3156 = vpop.permute.xlu0 %3155
      %3159 = vset.pattern.permute.xlu0 0
      %3160 = vperm.xlu0 %3159, %v3102
      %v3161 = vpop.permute.xlu0 %3160
      %3164 = vset.pattern.permute.xlu0 0
      %3165 = vperm.xlu0 %3164, %v3103
      %v3166 = vpop.permute.xlu0 %3165
      %3169 = vset.pattern.permute.xlu0 0
      %3170 = vperm.xlu0 %3169, %v3104
      %v3171 = vpop.permute.xlu0 %3170
      %3174 = vset.pattern.permute.xlu0 0
      %3175 = vperm.xlu0 %3174, %v3105
      %v3176 = vpop.permute.xlu0 %3175
      %3179 = vset.pattern.permute.xlu0 0
      %3180 = vperm.xlu0 %3179, %v3106
      %v3181 = vpop.permute.xlu0 %3180
      %3184 = vset.pattern.permute.xlu0 0
      %3185 = vperm.xlu0 %3184, %v3107
      %v3186 = vpop.permute.xlu0 %3185
      %v3188 = vadd.f32 %v3012, %v3111
      %v3189 = vadd.f32 %v3013, %v3111
      %v3190 = vadd.f32 %v3014, %v3111
      %v3191 = vadd.f32 %v3015, %v3111
      %v3192 = vadd.f32 %v3016, %v3111
      %v3193 = vadd.f32 %v3017, %v3116
      %v3194 = vadd.f32 %v3018, %v3116
      %v3195 = vadd.f32 %v3019, %v3116
      %v3196 = vadd.f32 %v3020, %v3116
      %v3197 = vadd.f32 %v3021, %v3116
      %v3198 = vadd.f32 %v3022, %v3121
      %v3199 = vadd.f32 %v3023, %v3121
      %v3200 = vadd.f32 %v3024, %v3121
      %v3201 = vadd.f32 %v3025, %v3121
      %v3202 = vadd.f32 %v3026, %v3121
      %v3203 = vadd.f32 %v3027, %v3126
      %v3204 = vadd.f32 %v3028, %v3126
      %v3205 = vadd.f32 %v3029, %v3126
      %v3206 = vadd.f32 %v3030, %v3126
      %v3207 = vadd.f32 %v3031, %v3126
      %v3208 = vadd.f32 %v3032, %v3131
      %v3209 = vadd.f32 %v3033, %v3131
      %v3210 = vadd.f32 %v3034, %v3131
      %v3211 = vadd.f32 %v3035, %v3131
      %v3212 = vadd.f32 %v3036, %v3131
      %v3213 = vadd.f32 %v3037, %v3136
      %v3214 = vadd.f32 %v3038, %v3136
      %v3215 = vadd.f32 %v3039, %v3136
      %v3216 = vadd.f32 %v3040, %v3136
      %v3217 = vadd.f32 %v3041, %v3136
      %v3218 = vadd.f32 %v3042, %v3141
      %v3219 = vadd.f32 %v3043, %v3141
      %v3220 = vadd.f32 %v3044, %v3141
      %v3221 = vadd.f32 %v3045, %v3141
      %v3222 = vadd.f32 %v3046, %v3141
      %v3223 = vadd.f32 %v3047, %v3146
      %v3224 = vadd.f32 %v3048, %v3146
      %v3225 = vadd.f32 %v3049, %v3146
      %v3226 = vadd.f32 %v3050, %v3146
      %v3227 = vadd.f32 %v3051, %v3146
      %v3228 = vadd.f32 %v3052, %v3151
      %v3229 = vadd.f32 %v3053, %v3151
      %v3230 = vadd.f32 %v3054, %v3151
      %v3231 = vadd.f32 %v3055, %v3151
      %v3232 = vadd.f32 %v3056, %v3151
      %v3233 = vadd.f32 %v3057, %v3156
      %v3234 = vadd.f32 %v3058, %v3156
      %v3235 = vadd.f32 %v3059, %v3156
      %v3236 = vadd.f32 %v3060, %v3156
      %v3237 = vadd.f32 %v3061, %v3156
      %v3238 = vadd.f32 %v3062, %v3161
      %v3239 = vadd.f32 %v3063, %v3161
      %v3240 = vadd.f32 %v3064, %v3161
      %v3241 = vadd.f32 %v3065, %v3161
      %v3242 = vadd.f32 %v3066, %v3161
      %v3243 = vadd.f32 %v3067, %v3166
      %v3244 = vadd.f32 %v3068, %v3166
      %v3245 = vadd.f32 %v3069, %v3166
      %v3246 = vadd.f32 %v3070, %v3166
      %v3247 = vadd.f32 %v3071, %v3166
      %v3248 = vadd.f32 %v3072, %v3171
      %v3249 = vadd.f32 %v3073, %v3171
      %v3250 = vadd.f32 %v3074, %v3171
      %v3251 = vadd.f32 %v3075, %v3171
      %v3252 = vadd.f32 %v3076, %v3171
      %v3253 = vadd.f32 %v3077, %v3176
      %v3254 = vadd.f32 %v3078, %v3176
      %v3255 = vadd.f32 %v3079, %v3176
      %v3256 = vadd.f32 %v3080, %v3176
      %v3257 = vadd.f32 %v3081, %v3176
      %v3258 = vadd.f32 %v3082, %v3181
      %v3259 = vadd.f32 %v3083, %v3181
      %v3260 = vadd.f32 %v3084, %v3181
      %v3261 = vadd.f32 %v3085, %v3181
      %v3262 = vadd.f32 %v3086, %v3181
      %v3263 = vadd.f32 %v3087, %v3186
      %v3264 = vadd.f32 %v3088, %v3186
      %v3265 = vadd.f32 %v3089, %v3186
      %v3266 = vadd.f32 %v3090, %v3186
      %v3267 = vadd.f32 %v3091, %v3186
      %v3268 = vmax.f32 %v3188, 0.0
      %v3269 = vmax.f32 %v3189, 0.0
      %v3270 = vmax.f32 %v3190, 0.0
      %v3271 = vmax.f32 %v3191, 0.0
      %v3272 = vmax.f32 %v3192, 0.0
      %v3273 = vmax.f32 %v3193, 0.0
      %v3274 = vmax.f32 %v3194, 0.0
      %v3275 = vmax.f32 %v3195, 0.0
      %v3276 = vmax.f32 %v3196, 0.0
      %v3277 = vmax.f32 %v3197, 0.0
      %v3278 = vmax.f32 %v3198, 0.0
      %v3279 = vmax.f32 %v3199, 0.0
      %v3280 = vmax.f32 %v3200, 0.0
      %v3281 = vmax.f32 %v3201, 0.0
      %v3282 = vmax.f32 %v3202, 0.0
      %v3283 = vmax.f32 %v3203, 0.0
      %v3284 = vmax.f32 %v3204, 0.0
      %v3285 = vmax.f32 %v3205, 0.0
      %v3286 = vmax.f32 %v3206, 0.0
      %v3287 = vmax.f32 %v3207, 0.0
      %v3288 = vmax.f32 %v3208, 0.0
      %v3289 = vmax.f32 %v3209, 0.0
      %v3290 = vmax.f32 %v3210, 0.0
      %v3291 = vmax.f32 %v3211, 0.0
      %v3292 = vmax.f32 %v3212, 0.0
      %v3293 = vmax.f32 %v3213, 0.0
      %v3294 = vmax.f32 %v3214, 0.0
      %v3295 = vmax.f32 %v3215, 0.0
      %v3296 = vmax.f32 %v3216, 0.0
      %v3297 = vmax.f32 %v3217, 0.0
      %v3298 = vmax.f32 %v3218, 0.0
      %v3299 = vmax.f32 %v3219, 0.0
      %v3300 = vmax.f32 %v3220, 0.0
      %v3301 = vmax.f32 %v3221, 0.0
      %v3302 = vmax.f32 %v3222, 0.0
      %v3303 = vmax.f32 %v3223, 0.0
      %v3304 = vmax.f32 %v3224, 0.0
      %v3305 = vmax.f32 %v3225, 0.0
      %v3306 = vmax.f32 %v3226, 0.0
      %v3307 = vmax.f32 %v3227, 0.0
      %v3308 = vmax.f32 %v3228, 0.0
      %v3309 = vmax.f32 %v3229, 0.0
      %v3310 = vmax.f32 %v3230, 0.0
      %v3311 = vmax.f32 %v3231, 0.0
      %v3312 = vmax.f32 %v3232, 0.0
      %v3313 = vmax.f32 %v3233, 0.0
      %v3314 = vmax.f32 %v3234, 0.0
      %v3315 = vmax.f32 %v3235, 0.0
      %v3316 = vmax.f32 %v3236, 0.0
      %v3317 = vmax.f32 %v3237, 0.0
      %v3318 = vmax.f32 %v3238, 0.0
      %v3319 = vmax.f32 %v3239, 0.0
      %v3320 = vmax.f32 %v3240, 0.0
      %v3321 = vmax.f32 %v3241, 0.0
      %v3322 = vmax.f32 %v3242, 0.0
      %v3323 = vmax.f32 %v3243, 0.0
      %v3324 = vmax.f32 %v3244, 0.0
      %v3325 = vmax.f32 %v3245, 0.0
      %v3326 = vmax.f32 %v3246, 0.0
      %v3327 = vmax.f32 %v3247, 0.0
      %v3328 = vmax.f32 %v3248, 0.0
      %v3329 = vmax.f32 %v3249, 0.0
      %v3330 = vmax.f32 %v3250, 0.0
      %v3331 = vmax.f32 %v3251, 0.0
      %v3332 = vmax.f32 %v3252, 0.0
      %v3333 = vmax.f32 %v3253, 0.0
      %v3334 = vmax.f32 %v3254, 0.0
      %v3335 = vmax.f32 %v3255, 0.0
      %v3336 = vmax.f32 %v3256, 0.0
      %v3337 = vmax.f32 %v3257, 0.0
      %v3338 = vmax.f32 %v3258, 0.0
      %v3339 = vmax.f32 %v3259, 0.0
      %v3340 = vmax.f32 %v3260, 0.0
      %v3341 = vmax.f32 %v3261, 0.0
      %v3342 = vmax.f32 %v3262, 0.0
      %v3343 = vmax.f32 %v3263, 0.0
      %v3344 = vmax.f32 %v3264, 0.0
      %v3345 = vmax.f32 %v3265, 0.0
      %v3346 = vmax.f32 %v3266, 0.0
      %v3347 = vmax.f32 %v3267, 0.0
      %s3348 = ssub.s32 %s420, 2
      %v3349 = vstv %s3348
      %v3350 = vadd.s32 %v3349, %v1276
      %v3351 = vadd.s32 %v3349, %v1277
      %v3352 = vadd.s32 %v3349, %v1278
      %v3353 = vadd.s32 %v3349, %v1279
      %v3354 = vadd.s32 %v3349, %v1280
      %vm3355 = vcmp.ge.s32.totalorder %v3350, 0
      %vm3356 = vcmp.ge.s32.totalorder %v3351, 0
      %vm3357 = vcmp.ge.s32.totalorder %v3352, 0
      %vm3358 = vcmp.ge.s32.totalorder %v3353, 0
      %vm3359 = vcmp.ge.s32.totalorder %v3354, 0
      %vm3360 = vcmp.lt.s32.totalorder %v3350, 1500
      %vm3361 = vcmp.lt.s32.totalorder %v3351, 1500
      %vm3362 = vcmp.lt.s32.totalorder %v3352, 1500
      %vm3363 = vcmp.lt.s32.totalorder %v3353, 1500
      %vm3364 = vcmp.lt.s32.totalorder %v3354, 1500
      %vm3365 = vmand %vm3355, %vm3360
      %vm3366 = vmand %vm3356, %vm3361
      %vm3367 = vmand %vm3357, %vm3362
      %vm3368 = vmand %vm3358, %vm3363
      %vm3369 = vmand %vm3359, %vm3364
      %v3370 = vsel %vm3365, 1, 0
      %v3371 = vsel %vm3366, 1, 0
      %v3372 = vsel %vm3367, 1, 0
      %v3373 = vsel %vm3368, 1, 0
      %v3374 = vsel %vm3369, 1, 0
      %vm3375 = vcmp.eq.s32.totalorder %v3370, 1
      %vm3376 = vcmp.eq.s32.totalorder %v3371, 1
      %vm3377 = vcmp.eq.s32.totalorder %v3372, 1
      %vm3378 = vcmp.eq.s32.totalorder %v3373, 1
      %vm3379 = vcmp.eq.s32.totalorder %v3374, 1
      %v3380 = vsel %vm3375, %v3268, 0.0
      %v3381 = vsel %vm3376, %v3269, 0.0
      %v3382 = vsel %vm3377, %v3270, 0.0
      %v3383 = vsel %vm3378, %v3271, 0.0
      %v3384 = vsel %vm3379, %v3272, 0.0
      %v3385 = vsel %vm3375, %v3273, 0.0
      %v3386 = vsel %vm3376, %v3274, 0.0
      %v3387 = vsel %vm3377, %v3275, 0.0
      %v3388 = vsel %vm3378, %v3276, 0.0
      %v3389 = vsel %vm3379, %v3277, 0.0
      %v3390 = vsel %vm3375, %v3278, 0.0
      %v3391 = vsel %vm3376, %v3279, 0.0
      %v3392 = vsel %vm3377, %v3280, 0.0
      %v3393 = vsel %vm3378, %v3281, 0.0
      %v3394 = vsel %vm3379, %v3282, 0.0
      %v3395 = vsel %vm3375, %v3283, 0.0
      %v3396 = vsel %vm3376, %v3284, 0.0
      %v3397 = vsel %vm3377, %v3285, 0.0
      %v3398 = vsel %vm3378, %v3286, 0.0
      %v3399 = vsel %vm3379, %v3287, 0.0
      %v3400 = vsel %vm3375, %v3288, 0.0
      %v3401 = vsel %vm3376, %v3289, 0.0
      %v3402 = vsel %vm3377, %v3290, 0.0
      %v3403 = vsel %vm3378, %v3291, 0.0
      %v3404 = vsel %vm3379, %v3292, 0.0
      %v3405 = vsel %vm3375, %v3293, 0.0
      %v3406 = vsel %vm3376, %v3294, 0.0
      %v3407 = vsel %vm3377, %v3295, 0.0
      %v3408 = vsel %vm3378, %v3296, 0.0
      %v3409 = vsel %vm3379, %v3297, 0.0
      %v3410 = vsel %vm3375, %v3298, 0.0
      %v3411 = vsel %vm3376, %v3299, 0.0
      %v3412 = vsel %vm3377, %v3300, 0.0
      %v3413 = vsel %vm3378, %v3301, 0.0
      %v3414 = vsel %vm3379, %v3302, 0.0
      %v3415 = vsel %vm3375, %v3303, 0.0
      %v3416 = vsel %vm3376, %v3304, 0.0
      %v3417 = vsel %vm3377, %v3305, 0.0
      %v3418 = vsel %vm3378, %v3306, 0.0
      %v3419 = vsel %vm3379, %v3307, 0.0
      %v3420 = vsel %vm3375, %v3308, 0.0
      %v3421 = vsel %vm3376, %v3309, 0.0
      %v3422 = vsel %vm3377, %v3310, 0.0
      %v3423 = vsel %vm3378, %v3311, 0.0
      %v3424 = vsel %vm3379, %v3312, 0.0
      %v3425 = vsel %vm3375, %v3313, 0.0
      %v3426 = vsel %vm3376, %v3314, 0.0
      %v3427 = vsel %vm3377, %v3315, 0.0
      %v3428 = vsel %vm3378, %v3316, 0.0
      %v3429 = vsel %vm3379, %v3317, 0.0
      %v3430 = vsel %vm3375, %v3318, 0.0
      %v3431 = vsel %vm3376, %v3319, 0.0
      %v3432 = vsel %vm3377, %v3320, 0.0
      %v3433 = vsel %vm3378, %v3321, 0.0
      %v3434 = vsel %vm3379, %v3322, 0.0
      %v3435 = vsel %vm3375, %v3323, 0.0
      %v3436 = vsel %vm3376, %v3324, 0.0
      %v3437 = vsel %vm3377, %v3325, 0.0
      %v3438 = vsel %vm3378, %v3326, 0.0
      %v3439 = vsel %vm3379, %v3327, 0.0
      %v3440 = vsel %vm3375, %v3328, 0.0
      %v3441 = vsel %vm3376, %v3329, 0.0
      %v3442 = vsel %vm3377, %v3330, 0.0
      %v3443 = vsel %vm3378, %v3331, 0.0
      %v3444 = vsel %vm3379, %v3332, 0.0
      %v3445 = vsel %vm3375, %v3333, 0.0
      %v3446 = vsel %vm3376, %v3334, 0.0
      %v3447 = vsel %vm3377, %v3335, 0.0
      %v3448 = vsel %vm3378, %v3336, 0.0
      %v3449 = vsel %vm3379, %v3337, 0.0
      %v3450 = vsel %vm3375, %v3338, 0.0
      %v3451 = vsel %vm3376, %v3339, 0.0
      %v3452 = vsel %vm3377, %v3340, 0.0
      %v3453 = vsel %vm3378, %v3341, 0.0
      %v3454 = vsel %vm3379, %v3342, 0.0
      %v3455 = vsel %vm3375, %v3343, 0.0
      %v3456 = vsel %vm3376, %v3344, 0.0
      %v3457 = vsel %vm3377, %v3345, 0.0
      %v3458 = vsel %vm3378, %v3346, 0.0
      %v3459 = vsel %vm3379, %v3347, 0.0
      %v3460 = vpack.c.bf16 %v3385, %v3380
      %v3461 = vpack.c.bf16 %v3386, %v3381
      %v3462 = vpack.c.bf16 %v3387, %v3382
      %v3463 = vpack.c.bf16 %v3388, %v3383
      %v3464 = vpack.c.bf16 %v3389, %v3384
      %v3465 = vpack.c.bf16 %v3395, %v3390
      %v3466 = vpack.c.bf16 %v3396, %v3391
      %v3467 = vpack.c.bf16 %v3397, %v3392
      %v3468 = vpack.c.bf16 %v3398, %v3393
      %v3469 = vpack.c.bf16 %v3399, %v3394
      %v3470 = vpack.c.bf16 %v3405, %v3400
      %v3471 = vpack.c.bf16 %v3406, %v3401
      %v3472 = vpack.c.bf16 %v3407, %v3402
      %v3473 = vpack.c.bf16 %v3408, %v3403
      %v3474 = vpack.c.bf16 %v3409, %v3404
      %v3475 = vpack.c.bf16 %v3415, %v3410
      %v3476 = vpack.c.bf16 %v3416, %v3411
      %v3477 = vpack.c.bf16 %v3417, %v3412
      %v3478 = vpack.c.bf16 %v3418, %v3413
      %v3479 = vpack.c.bf16 %v3419, %v3414
      %v3480 = vpack.c.bf16 %v3425, %v3420
      %v3481 = vpack.c.bf16 %v3426, %v3421
      %v3482 = vpack.c.bf16 %v3427, %v3422
      %v3483 = vpack.c.bf16 %v3428, %v3423
      %v3484 = vpack.c.bf16 %v3429, %v3424
      %v3485 = vpack.c.bf16 %v3435, %v3430
      %v3486 = vpack.c.bf16 %v3436, %v3431
      %v3487 = vpack.c.bf16 %v3437, %v3432
      %v3488 = vpack.c.bf16 %v3438, %v3433
      %v3489 = vpack.c.bf16 %v3439, %v3434
      %v3490 = vpack.c.bf16 %v3445, %v3440
      %v3491 = vpack.c.bf16 %v3446, %v3441
      %v3492 = vpack.c.bf16 %v3447, %v3442
      %v3493 = vpack.c.bf16 %v3448, %v3443
      %v3494 = vpack.c.bf16 %v3449, %v3444
      %v3495 = vpack.c.bf16 %v3455, %v3450
      %v3496 = vpack.c.bf16 %v3456, %v3451
      %v3497 = vpack.c.bf16 %v3457, %v3452
      %v3498 = vpack.c.bf16 %v3458, %v3453
      %v3499 = vpack.c.bf16 %v3459, %v3454
      %v3500 = vunpack.c.l.bf16 %v3460
      %v3501 = vunpack.c.l.bf16 %v3461
      %v3502 = vunpack.c.l.bf16 %v3462
      %v3503 = vunpack.c.l.bf16 %v3463
      %v3504 = vunpack.c.l.bf16 %v3464
      %v3505 = vunpack.c.h.bf16 %v3460
      %v3506 = vunpack.c.h.bf16 %v3461
      %v3507 = vunpack.c.h.bf16 %v3462
      %v3508 = vunpack.c.h.bf16 %v3463
      %v3509 = vunpack.c.h.bf16 %v3464
      %v3510 = vunpack.c.l.bf16 %v3465
      %v3511 = vunpack.c.l.bf16 %v3466
      %v3512 = vunpack.c.l.bf16 %v3467
      %v3513 = vunpack.c.l.bf16 %v3468
      %v3514 = vunpack.c.l.bf16 %v3469
      %v3515 = vunpack.c.h.bf16 %v3465
      %v3516 = vunpack.c.h.bf16 %v3466
      %v3517 = vunpack.c.h.bf16 %v3467
      %v3518 = vunpack.c.h.bf16 %v3468
      %v3519 = vunpack.c.h.bf16 %v3469
      %v3520 = vunpack.c.l.bf16 %v3470
      %v3521 = vunpack.c.l.bf16 %v3471
      %v3522 = vunpack.c.l.bf16 %v3472
      %v3523 = vunpack.c.l.bf16 %v3473
      %v3524 = vunpack.c.l.bf16 %v3474
      %v3525 = vunpack.c.h.bf16 %v3470
      %v3526 = vunpack.c.h.bf16 %v3471
      %v3527 = vunpack.c.h.bf16 %v3472
      %v3528 = vunpack.c.h.bf16 %v3473
      %v3529 = vunpack.c.h.bf16 %v3474
      %v3530 = vunpack.c.l.bf16 %v3475
      %v3531 = vunpack.c.l.bf16 %v3476
      %v3532 = vunpack.c.l.bf16 %v3477
      %v3533 = vunpack.c.l.bf16 %v3478
      %v3534 = vunpack.c.l.bf16 %v3479
      %v3535 = vunpack.c.h.bf16 %v3475
      %v3536 = vunpack.c.h.bf16 %v3476
      %v3537 = vunpack.c.h.bf16 %v3477
      %v3538 = vunpack.c.h.bf16 %v3478
      %v3539 = vunpack.c.h.bf16 %v3479
      %v3540 = vunpack.c.l.bf16 %v3480
      %v3541 = vunpack.c.l.bf16 %v3481
      %v3542 = vunpack.c.l.bf16 %v3482
      %v3543 = vunpack.c.l.bf16 %v3483
      %v3544 = vunpack.c.l.bf16 %v3484
      %v3545 = vunpack.c.h.bf16 %v3480
      %v3546 = vunpack.c.h.bf16 %v3481
      %v3547 = vunpack.c.h.bf16 %v3482
      %v3548 = vunpack.c.h.bf16 %v3483
      %v3549 = vunpack.c.h.bf16 %v3484
      %v3550 = vunpack.c.l.bf16 %v3485
      %v3551 = vunpack.c.l.bf16 %v3486
      %v3552 = vunpack.c.l.bf16 %v3487
      %v3553 = vunpack.c.l.bf16 %v3488
      %v3554 = vunpack.c.l.bf16 %v3489
      %v3555 = vunpack.c.h.bf16 %v3485
      %v3556 = vunpack.c.h.bf16 %v3486
      %v3557 = vunpack.c.h.bf16 %v3487
      %v3558 = vunpack.c.h.bf16 %v3488
      %v3559 = vunpack.c.h.bf16 %v3489
      %v3560 = vunpack.c.l.bf16 %v3490
      %v3561 = vunpack.c.l.bf16 %v3491
      %v3562 = vunpack.c.l.bf16 %v3492
      %v3563 = vunpack.c.l.bf16 %v3493
      %v3564 = vunpack.c.l.bf16 %v3494
      %v3565 = vunpack.c.h.bf16 %v3490
      %v3566 = vunpack.c.h.bf16 %v3491
      %v3567 = vunpack.c.h.bf16 %v3492
      %v3568 = vunpack.c.h.bf16 %v3493
      %v3569 = vunpack.c.h.bf16 %v3494
      %v3570 = vunpack.c.l.bf16 %v3495
      %v3571 = vunpack.c.l.bf16 %v3496
      %v3572 = vunpack.c.l.bf16 %v3497
      %v3573 = vunpack.c.l.bf16 %v3498
      %v3574 = vunpack.c.l.bf16 %v3499
      %v3575 = vunpack.c.h.bf16 %v3495
      %v3576 = vunpack.c.h.bf16 %v3496
      %v3577 = vunpack.c.h.bf16 %v3497
      %v3578 = vunpack.c.h.bf16 %v3498
      %v3579 = vunpack.c.h.bf16 %v3499
      %v3580 = vsub.f32 %v3380, %v3500
      %v3581 = vsub.f32 %v3381, %v3501
      %v3582 = vsub.f32 %v3382, %v3502
      %v3583 = vsub.f32 %v3383, %v3503
      %v3584 = vsub.f32 %v3384, %v3504
      %v3585 = vsub.f32 %v3385, %v3505
      %v3586 = vsub.f32 %v3386, %v3506
      %v3587 = vsub.f32 %v3387, %v3507
      %v3588 = vsub.f32 %v3388, %v3508
      %v3589 = vsub.f32 %v3389, %v3509
      %v3590 = vsub.f32 %v3390, %v3510
      %v3591 = vsub.f32 %v3391, %v3511
      %v3592 = vsub.f32 %v3392, %v3512
      %v3593 = vsub.f32 %v3393, %v3513
      %v3594 = vsub.f32 %v3394, %v3514
      %v3595 = vsub.f32 %v3395, %v3515
      %v3596 = vsub.f32 %v3396, %v3516
      %v3597 = vsub.f32 %v3397, %v3517
      %v3598 = vsub.f32 %v3398, %v3518
      %v3599 = vsub.f32 %v3399, %v3519
      %v3600 = vsub.f32 %v3400, %v3520
      %v3601 = vsub.f32 %v3401, %v3521
      %v3602 = vsub.f32 %v3402, %v3522
      %v3603 = vsub.f32 %v3403, %v3523
      %v3604 = vsub.f32 %v3404, %v3524
      %v3605 = vsub.f32 %v3405, %v3525
      %v3606 = vsub.f32 %v3406, %v3526
      %v3607 = vsub.f32 %v3407, %v3527
      %v3608 = vsub.f32 %v3408, %v3528
      %v3609 = vsub.f32 %v3409, %v3529
      %v3610 = vsub.f32 %v3410, %v3530
      %v3611 = vsub.f32 %v3411, %v3531
      %v3612 = vsub.f32 %v3412, %v3532
      %v3613 = vsub.f32 %v3413, %v3533
      %v3614 = vsub.f32 %v3414, %v3534
      %v3615 = vsub.f32 %v3415, %v3535
      %v3616 = vsub.f32 %v3416, %v3536
      %v3617 = vsub.f32 %v3417, %v3537
      %v3618 = vsub.f32 %v3418, %v3538
      %v3619 = vsub.f32 %v3419, %v3539
      %v3620 = vsub.f32 %v3420, %v3540
      %v3621 = vsub.f32 %v3421, %v3541
      %v3622 = vsub.f32 %v3422, %v3542
      %v3623 = vsub.f32 %v3423, %v3543
      %v3624 = vsub.f32 %v3424, %v3544
      %v3625 = vsub.f32 %v3425, %v3545
      %v3626 = vsub.f32 %v3426, %v3546
      %v3627 = vsub.f32 %v3427, %v3547
      %v3628 = vsub.f32 %v3428, %v3548
      %v3629 = vsub.f32 %v3429, %v3549
      %v3630 = vsub.f32 %v3430, %v3550
      %v3631 = vsub.f32 %v3431, %v3551
      %v3632 = vsub.f32 %v3432, %v3552
      %v3633 = vsub.f32 %v3433, %v3553
      %v3634 = vsub.f32 %v3434, %v3554
      %v3635 = vsub.f32 %v3435, %v3555
      %v3636 = vsub.f32 %v3436, %v3556
      %v3637 = vsub.f32 %v3437, %v3557
      %v3638 = vsub.f32 %v3438, %v3558
      %v3639 = vsub.f32 %v3439, %v3559
      %v3640 = vsub.f32 %v3440, %v3560
      %v3641 = vsub.f32 %v3441, %v3561
      %v3642 = vsub.f32 %v3442, %v3562
      %v3643 = vsub.f32 %v3443, %v3563
      %v3644 = vsub.f32 %v3444, %v3564
      %v3645 = vsub.f32 %v3445, %v3565
      %v3646 = vsub.f32 %v3446, %v3566
      %v3647 = vsub.f32 %v3447, %v3567
      %v3648 = vsub.f32 %v3448, %v3568
      %v3649 = vsub.f32 %v3449, %v3569
      %v3650 = vsub.f32 %v3450, %v3570
      %v3651 = vsub.f32 %v3451, %v3571
      %v3652 = vsub.f32 %v3452, %v3572
      %v3653 = vsub.f32 %v3453, %v3573
      %v3654 = vsub.f32 %v3454, %v3574
      %v3655 = vsub.f32 %v3455, %v3575
      %v3656 = vsub.f32 %v3456, %v3576
      %v3657 = vsub.f32 %v3457, %v3577
      %v3658 = vsub.f32 %v3458, %v3578
      %v3659 = vsub.f32 %v3459, %v3579
      %v3660 = vpack.c.bf16 %v3585, %v3580
      %v3661 = vpack.c.bf16 %v3586, %v3581
      %v3662 = vpack.c.bf16 %v3587, %v3582
      %v3663 = vpack.c.bf16 %v3588, %v3583
      %v3664 = vpack.c.bf16 %v3589, %v3584
      %v3665 = vpack.c.bf16 %v3595, %v3590
      %v3666 = vpack.c.bf16 %v3596, %v3591
      %v3667 = vpack.c.bf16 %v3597, %v3592
      %v3668 = vpack.c.bf16 %v3598, %v3593
      %v3669 = vpack.c.bf16 %v3599, %v3594
      %v3670 = vpack.c.bf16 %v3605, %v3600
      %v3671 = vpack.c.bf16 %v3606, %v3601
      %v3672 = vpack.c.bf16 %v3607, %v3602
      %v3673 = vpack.c.bf16 %v3608, %v3603
      %v3674 = vpack.c.bf16 %v3609, %v3604
      %v3675 = vpack.c.bf16 %v3615, %v3610
      %v3676 = vpack.c.bf16 %v3616, %v3611
      %v3677 = vpack.c.bf16 %v3617, %v3612
      %v3678 = vpack.c.bf16 %v3618, %v3613
      %v3679 = vpack.c.bf16 %v3619, %v3614
      %v3680 = vpack.c.bf16 %v3625, %v3620
      %v3681 = vpack.c.bf16 %v3626, %v3621
      %v3682 = vpack.c.bf16 %v3627, %v3622
      %v3683 = vpack.c.bf16 %v3628, %v3623
      %v3684 = vpack.c.bf16 %v3629, %v3624
      %v3685 = vpack.c.bf16 %v3635, %v3630
      %v3686 = vpack.c.bf16 %v3636, %v3631
      %v3687 = vpack.c.bf16 %v3637, %v3632
      %v3688 = vpack.c.bf16 %v3638, %v3633
      %v3689 = vpack.c.bf16 %v3639, %v3634
      %v3690 = vpack.c.bf16 %v3645, %v3640
      %v3691 = vpack.c.bf16 %v3646, %v3641
      %v3692 = vpack.c.bf16 %v3647, %v3642
      %v3693 = vpack.c.bf16 %v3648, %v3643
      %v3694 = vpack.c.bf16 %v3649, %v3644
      %v3695 = vpack.c.bf16 %v3655, %v3650
      %v3696 = vpack.c.bf16 %v3656, %v3651
      %v3697 = vpack.c.bf16 %v3657, %v3652
      %v3698 = vpack.c.bf16 %v3658, %v3653
      %v3699 = vpack.c.bf16 %v3659, %v3654
      %3740 = vrot.lane.b32.xlu0 %v3460, 127
      %v3741 = vpop.permute.xlu0 %3740
      %3742 = vrot.lane.b32.xlu0 %v3461, 127
      %v3743 = vpop.permute.xlu0 %3742
      %3744 = vrot.lane.b32.xlu0 %v3462, 127
      %v3745 = vpop.permute.xlu0 %3744
      %3746 = vrot.lane.b32.xlu0 %v3463, 127
      %v3747 = vpop.permute.xlu0 %3746
      %3748 = vrot.lane.b32.xlu0 %v3464, 127
      %v3749 = vpop.permute.xlu0 %3748
      %3750 = vrot.lane.b32.xlu0 %v3465, 127
      %v3751 = vpop.permute.xlu0 %3750
      %3752 = vrot.lane.b32.xlu0 %v3466, 127
      %v3753 = vpop.permute.xlu0 %3752
      %3754 = vrot.lane.b32.xlu0 %v3467, 127
      %v3755 = vpop.permute.xlu0 %3754
      %3756 = vrot.lane.b32.xlu0 %v3468, 127
      %v3757 = vpop.permute.xlu0 %3756
      %3758 = vrot.lane.b32.xlu0 %v3469, 127
      %v3759 = vpop.permute.xlu0 %3758
      %3760 = vrot.lane.b32.xlu0 %v3470, 127
      %v3761 = vpop.permute.xlu0 %3760
      %3762 = vrot.lane.b32.xlu0 %v3471, 127
      %v3763 = vpop.permute.xlu0 %3762
      %3764 = vrot.lane.b32.xlu0 %v3472, 127
      %v3765 = vpop.permute.xlu0 %3764
      %3766 = vrot.lane.b32.xlu0 %v3473, 127
      %v3767 = vpop.permute.xlu0 %3766
      %3768 = vrot.lane.b32.xlu0 %v3474, 127
      %v3769 = vpop.permute.xlu0 %3768
      %3770 = vrot.lane.b32.xlu0 %v3475, 127
      %v3771 = vpop.permute.xlu0 %3770
      %3772 = vrot.lane.b32.xlu0 %v3476, 127
      %v3773 = vpop.permute.xlu0 %3772
      %3774 = vrot.lane.b32.xlu0 %v3477, 127
      %v3775 = vpop.permute.xlu0 %3774
      %3776 = vrot.lane.b32.xlu0 %v3478, 127
      %v3777 = vpop.permute.xlu0 %3776
      %3778 = vrot.lane.b32.xlu0 %v3479, 127
      %v3779 = vpop.permute.xlu0 %3778
      %3780 = vrot.lane.b32.xlu0 %v3480, 127
      %v3781 = vpop.permute.xlu0 %3780
      %3782 = vrot.lane.b32.xlu0 %v3481, 127
      %v3783 = vpop.permute.xlu0 %3782
      %3784 = vrot.lane.b32.xlu0 %v3482, 127
      %v3785 = vpop.permute.xlu0 %3784
      %3786 = vrot.lane.b32.xlu0 %v3483, 127
      %v3787 = vpop.permute.xlu0 %3786
      %3788 = vrot.lane.b32.xlu0 %v3484, 127
      %v3789 = vpop.permute.xlu0 %3788
      %3790 = vrot.lane.b32.xlu0 %v3485, 127
      %v3791 = vpop.permute.xlu0 %3790
      %3792 = vrot.lane.b32.xlu0 %v3486, 127
      %v3793 = vpop.permute.xlu0 %3792
      %3794 = vrot.lane.b32.xlu0 %v3487, 127
      %v3795 = vpop.permute.xlu0 %3794
      %3796 = vrot.lane.b32.xlu0 %v3488, 127
      %v3797 = vpop.permute.xlu0 %3796
      %3798 = vrot.lane.b32.xlu0 %v3489, 127
      %v3799 = vpop.permute.xlu0 %3798
      %3800 = vrot.lane.b32.xlu0 %v3490, 127
      %v3801 = vpop.permute.xlu0 %3800
      %3802 = vrot.lane.b32.xlu0 %v3491, 127
      %v3803 = vpop.permute.xlu0 %3802
      %3804 = vrot.lane.b32.xlu0 %v3492, 127
      %v3805 = vpop.permute.xlu0 %3804
      %3806 = vrot.lane.b32.xlu0 %v3493, 127
      %v3807 = vpop.permute.xlu0 %3806
      %3808 = vrot.lane.b32.xlu0 %v3494, 127
      %v3809 = vpop.permute.xlu0 %3808
      %3810 = vrot.lane.b32.xlu0 %v3495, 127
      %v3811 = vpop.permute.xlu0 %3810
      %3812 = vrot.lane.b32.xlu0 %v3496, 127
      %v3813 = vpop.permute.xlu0 %3812
      %3814 = vrot.lane.b32.xlu0 %v3497, 127
      %v3815 = vpop.permute.xlu0 %3814
      %3816 = vrot.lane.b32.xlu0 %v3498, 127
      %v3817 = vpop.permute.xlu0 %3816
      %3818 = vrot.lane.b32.xlu0 %v3499, 127
      %v3819 = vpop.permute.xlu0 %3818
      %v3820 = vsel %vm1532, %v3741, %v3743
      %v3821 = vsel %vm1532, %v3743, %v3745
      %v3822 = vsel %vm1532, %v3745, %v3747
      %v3823 = vsel %vm1532, %v3747, %v3749
      %v3824 = vsel %vm1532, %v3751, %v3753
      %v3825 = vsel %vm1532, %v3753, %v3755
      %v3826 = vsel %vm1532, %v3755, %v3757
      %v3827 = vsel %vm1532, %v3757, %v3759
      %v3828 = vsel %vm1532, %v3761, %v3763
      %v3829 = vsel %vm1532, %v3763, %v3765
      %v3830 = vsel %vm1532, %v3765, %v3767
      %v3831 = vsel %vm1532, %v3767, %v3769
      %v3832 = vsel %vm1532, %v3771, %v3773
      %v3833 = vsel %vm1532, %v3773, %v3775
      %v3834 = vsel %vm1532, %v3775, %v3777
      %v3835 = vsel %vm1532, %v3777, %v3779
      %v3836 = vsel %vm1532, %v3781, %v3783
      %v3837 = vsel %vm1532, %v3783, %v3785
      %v3838 = vsel %vm1532, %v3785, %v3787
      %v3839 = vsel %vm1532, %v3787, %v3789
      %v3840 = vsel %vm1532, %v3791, %v3793
      %v3841 = vsel %vm1532, %v3793, %v3795
      %v3842 = vsel %vm1532, %v3795, %v3797
      %v3843 = vsel %vm1532, %v3797, %v3799
      %v3844 = vsel %vm1532, %v3801, %v3803
      %v3845 = vsel %vm1532, %v3803, %v3805
      %v3846 = vsel %vm1532, %v3805, %v3807
      %v3847 = vsel %vm1532, %v3807, %v3809
      %v3848 = vsel %vm1532, %v3811, %v3813
      %v3849 = vsel %vm1532, %v3813, %v3815
      %v3850 = vsel %vm1532, %v3815, %v3817
      %v3851 = vsel %vm1532, %v3817, %v3819
      %3892 = vrot.lane.b32.xlu0 %v3460, 126
      %v3893 = vpop.permute.xlu0 %3892
      %3894 = vrot.lane.b32.xlu0 %v3461, 126
      %v3895 = vpop.permute.xlu0 %3894
      %3896 = vrot.lane.b32.xlu0 %v3462, 126
      %v3897 = vpop.permute.xlu0 %3896
      %3898 = vrot.lane.b32.xlu0 %v3463, 126
      %v3899 = vpop.permute.xlu0 %3898
      %3900 = vrot.lane.b32.xlu0 %v3464, 126
      %v3901 = vpop.permute.xlu0 %3900
      %3902 = vrot.lane.b32.xlu0 %v3465, 126
      %v3903 = vpop.permute.xlu0 %3902
      %3904 = vrot.lane.b32.xlu0 %v3466, 126
      %v3905 = vpop.permute.xlu0 %3904
      %3906 = vrot.lane.b32.xlu0 %v3467, 126
      %v3907 = vpop.permute.xlu0 %3906
      %3908 = vrot.lane.b32.xlu0 %v3468, 126
      %v3909 = vpop.permute.xlu0 %3908
      %3910 = vrot.lane.b32.xlu0 %v3469, 126
      %v3911 = vpop.permute.xlu0 %3910
      %3912 = vrot.lane.b32.xlu0 %v3470, 126
      %v3913 = vpop.permute.xlu0 %3912
      %3914 = vrot.lane.b32.xlu0 %v3471, 126
      %v3915 = vpop.permute.xlu0 %3914
      %3916 = vrot.lane.b32.xlu0 %v3472, 126
      %v3917 = vpop.permute.xlu0 %3916
      %3918 = vrot.lane.b32.xlu0 %v3473, 126
      %v3919 = vpop.permute.xlu0 %3918
      %3920 = vrot.lane.b32.xlu0 %v3474, 126
      %v3921 = vpop.permute.xlu0 %3920
      %3922 = vrot.lane.b32.xlu0 %v3475, 126
      %v3923 = vpop.permute.xlu0 %3922
      %3924 = vrot.lane.b32.xlu0 %v3476, 126
      %v3925 = vpop.permute.xlu0 %3924
      %3926 = vrot.lane.b32.xlu0 %v3477, 126
      %v3927 = vpop.permute.xlu0 %3926
      %3928 = vrot.lane.b32.xlu0 %v3478, 126
      %v3929 = vpop.permute.xlu0 %3928
      %3930 = vrot.lane.b32.xlu0 %v3479, 126
      %v3931 = vpop.permute.xlu0 %3930
      %3932 = vrot.lane.b32.xlu0 %v3480, 126
      %v3933 = vpop.permute.xlu0 %3932
      %3934 = vrot.lane.b32.xlu0 %v3481, 126
      %v3935 = vpop.permute.xlu0 %3934
      %3936 = vrot.lane.b32.xlu0 %v3482, 126
      %v3937 = vpop.permute.xlu0 %3936
      %3938 = vrot.lane.b32.xlu0 %v3483, 126
      %v3939 = vpop.permute.xlu0 %3938
      %3940 = vrot.lane.b32.xlu0 %v3484, 126
      %v3941 = vpop.permute.xlu0 %3940
      %3942 = vrot.lane.b32.xlu0 %v3485, 126
      %v3943 = vpop.permute.xlu0 %3942
      %3944 = vrot.lane.b32.xlu0 %v3486, 126
      %v3945 = vpop.permute.xlu0 %3944
      %3946 = vrot.lane.b32.xlu0 %v3487, 126
      %v3947 = vpop.permute.xlu0 %3946
      %3948 = vrot.lane.b32.xlu0 %v3488, 126
      %v3949 = vpop.permute.xlu0 %3948
      %3950 = vrot.lane.b32.xlu0 %v3489, 126
      %v3951 = vpop.permute.xlu0 %3950
      %3952 = vrot.lane.b32.xlu0 %v3490, 126
      %v3953 = vpop.permute.xlu0 %3952
      %3954 = vrot.lane.b32.xlu0 %v3491, 126
      %v3955 = vpop.permute.xlu0 %3954
      %3956 = vrot.lane.b32.xlu0 %v3492, 126
      %v3957 = vpop.permute.xlu0 %3956
      %3958 = vrot.lane.b32.xlu0 %v3493, 126
      %v3959 = vpop.permute.xlu0 %3958
      %3960 = vrot.lane.b32.xlu0 %v3494, 126
      %v3961 = vpop.permute.xlu0 %3960
      %3962 = vrot.lane.b32.xlu0 %v3495, 126
      %v3963 = vpop.permute.xlu0 %3962
      %3964 = vrot.lane.b32.xlu0 %v3496, 126
      %v3965 = vpop.permute.xlu0 %3964
      %3966 = vrot.lane.b32.xlu0 %v3497, 126
      %v3967 = vpop.permute.xlu0 %3966
      %3968 = vrot.lane.b32.xlu0 %v3498, 126
      %v3969 = vpop.permute.xlu0 %3968
      %3970 = vrot.lane.b32.xlu0 %v3499, 126
      %v3971 = vpop.permute.xlu0 %3970
      %v3972 = vsel %vm1609, %v3893, %v3895
      %v3973 = vsel %vm1609, %v3895, %v3897
      %v3974 = vsel %vm1609, %v3897, %v3899
      %v3975 = vsel %vm1609, %v3899, %v3901
      %v3976 = vsel %vm1609, %v3903, %v3905
      %v3977 = vsel %vm1609, %v3905, %v3907
      %v3978 = vsel %vm1609, %v3907, %v3909
      %v3979 = vsel %vm1609, %v3909, %v3911
      %v3980 = vsel %vm1609, %v3913, %v3915
      %v3981 = vsel %vm1609, %v3915, %v3917
      %v3982 = vsel %vm1609, %v3917, %v3919
      %v3983 = vsel %vm1609, %v3919, %v3921
      %v3984 = vsel %vm1609, %v3923, %v3925
      %v3985 = vsel %vm1609, %v3925, %v3927
      %v3986 = vsel %vm1609, %v3927, %v3929
      %v3987 = vsel %vm1609, %v3929, %v3931
      %v3988 = vsel %vm1609, %v3933, %v3935
      %v3989 = vsel %vm1609, %v3935, %v3937
      %v3990 = vsel %vm1609, %v3937, %v3939
      %v3991 = vsel %vm1609, %v3939, %v3941
      %v3992 = vsel %vm1609, %v3943, %v3945
      %v3993 = vsel %vm1609, %v3945, %v3947
      %v3994 = vsel %vm1609, %v3947, %v3949
      %v3995 = vsel %vm1609, %v3949, %v3951
      %v3996 = vsel %vm1609, %v3953, %v3955
      %v3997 = vsel %vm1609, %v3955, %v3957
      %v3998 = vsel %vm1609, %v3957, %v3959
      %v3999 = vsel %vm1609, %v3959, %v3961
      %v4000 = vsel %vm1609, %v3963, %v3965
      %v4001 = vsel %vm1609, %v3965, %v3967
      %v4002 = vsel %vm1609, %v3967, %v3969
      %v4003 = vsel %vm1609, %v3969, %v3971
      %4084 = vrot.lane.b32.xlu0 %v3660, 127
      %v4085 = vpop.permute.xlu0 %4084
      %4086 = vrot.lane.b32.xlu0 %v3661, 127
      %v4087 = vpop.permute.xlu0 %4086
      %4088 = vrot.lane.b32.xlu0 %v3662, 127
      %v4089 = vpop.permute.xlu0 %4088
      %4090 = vrot.lane.b32.xlu0 %v3663, 127
      %v4091 = vpop.permute.xlu0 %4090
      %4092 = vrot.lane.b32.xlu0 %v3664, 127
      %v4093 = vpop.permute.xlu0 %4092
      %4094 = vrot.lane.b32.xlu0 %v3665, 127
      %v4095 = vpop.permute.xlu0 %4094
      %4096 = vrot.lane.b32.xlu0 %v3666, 127
      %v4097 = vpop.permute.xlu0 %4096
      %4098 = vrot.lane.b32.xlu0 %v3667, 127
      %v4099 = vpop.permute.xlu0 %4098
      %4100 = vrot.lane.b32.xlu0 %v3668, 127
      %v4101 = vpop.permute.xlu0 %4100
      %4102 = vrot.lane.b32.xlu0 %v3669, 127
      %v4103 = vpop.permute.xlu0 %4102
      %4104 = vrot.lane.b32.xlu0 %v3670, 127
      %v4105 = vpop.permute.xlu0 %4104
      %4106 = vrot.lane.b32.xlu0 %v3671, 127
      %v4107 = vpop.permute.xlu0 %4106
      %4108 = vrot.lane.b32.xlu0 %v3672, 127
      %v4109 = vpop.permute.xlu0 %4108
      %4110 = vrot.lane.b32.xlu0 %v3673, 127
      %v4111 = vpop.permute.xlu0 %4110
      %4112 = vrot.lane.b32.xlu0 %v3674, 127
      %v4113 = vpop.permute.xlu0 %4112
      %4114 = vrot.lane.b32.xlu0 %v3675, 127
      %v4115 = vpop.permute.xlu0 %4114
      %4116 = vrot.lane.b32.xlu0 %v3676, 127
      %v4117 = vpop.permute.xlu0 %4116
      %4118 = vrot.lane.b32.xlu0 %v3677, 127
      %v4119 = vpop.permute.xlu0 %4118
      %4120 = vrot.lane.b32.xlu0 %v3678, 127
      %v4121 = vpop.permute.xlu0 %4120
      %4122 = vrot.lane.b32.xlu0 %v3679, 127
      %v4123 = vpop.permute.xlu0 %4122
      %4124 = vrot.lane.b32.xlu0 %v3680, 127
      %v4125 = vpop.permute.xlu0 %4124
      %4126 = vrot.lane.b32.xlu0 %v3681, 127
      %v4127 = vpop.permute.xlu0 %4126
      %4128 = vrot.lane.b32.xlu0 %v3682, 127
      %v4129 = vpop.permute.xlu0 %4128
      %4130 = vrot.lane.b32.xlu0 %v3683, 127
      %v4131 = vpop.permute.xlu0 %4130
      %4132 = vrot.lane.b32.xlu0 %v3684, 127
      %v4133 = vpop.permute.xlu0 %4132
      %4134 = vrot.lane.b32.xlu0 %v3685, 127
      %v4135 = vpop.permute.xlu0 %4134
      %4136 = vrot.lane.b32.xlu0 %v3686, 127
      %v4137 = vpop.permute.xlu0 %4136
      %4138 = vrot.lane.b32.xlu0 %v3687, 127
      %v4139 = vpop.permute.xlu0 %4138
      %4140 = vrot.lane.b32.xlu0 %v3688, 127
      %v4141 = vpop.permute.xlu0 %4140
      %4142 = vrot.lane.b32.xlu0 %v3689, 127
      %v4143 = vpop.permute.xlu0 %4142
      %4144 = vrot.lane.b32.xlu0 %v3690, 127
      %v4145 = vpop.permute.xlu0 %4144
      %4146 = vrot.lane.b32.xlu0 %v3691, 127
      %v4147 = vpop.permute.xlu0 %4146
      %4148 = vrot.lane.b32.xlu0 %v3692, 127
      %v4149 = vpop.permute.xlu0 %4148
      %4150 = vrot.lane.b32.xlu0 %v3693, 127
      %v4151 = vpop.permute.xlu0 %4150
      %4152 = vrot.lane.b32.xlu0 %v3694, 127
      %v4153 = vpop.permute.xlu0 %4152
      %4154 = vrot.lane.b32.xlu0 %v3695, 127
      %v4155 = vpop.permute.xlu0 %4154
      %4156 = vrot.lane.b32.xlu0 %v3696, 127
      %v4157 = vpop.permute.xlu0 %4156
      %4158 = vrot.lane.b32.xlu0 %v3697, 127
      %v4159 = vpop.permute.xlu0 %4158
      %4160 = vrot.lane.b32.xlu0 %v3698, 127
      %v4161 = vpop.permute.xlu0 %4160
      %4162 = vrot.lane.b32.xlu0 %v3699, 127
      %v4163 = vpop.permute.xlu0 %4162
      %v4164 = vsel %vm1532, %v4085, %v4087
      %v4165 = vsel %vm1532, %v4087, %v4089
      %v4166 = vsel %vm1532, %v4089, %v4091
      %v4167 = vsel %vm1532, %v4091, %v4093
      %v4168 = vsel %vm1532, %v4095, %v4097
      %v4169 = vsel %vm1532, %v4097, %v4099
      %v4170 = vsel %vm1532, %v4099, %v4101
      %v4171 = vsel %vm1532, %v4101, %v4103
      %v4172 = vsel %vm1532, %v4105, %v4107
      %v4173 = vsel %vm1532, %v4107, %v4109
      %v4174 = vsel %vm1532, %v4109, %v4111
      %v4175 = vsel %vm1532, %v4111, %v4113
      %v4176 = vsel %vm1532, %v4115, %v4117
      %v4177 = vsel %vm1532, %v4117, %v4119
      %v4178 = vsel %vm1532, %v4119, %v4121
      %v4179 = vsel %vm1532, %v4121, %v4123
      %v4180 = vsel %vm1532, %v4125, %v4127
      %v4181 = vsel %vm1532, %v4127, %v4129
      %v4182 = vsel %vm1532, %v4129, %v4131
      %v4183 = vsel %vm1532, %v4131, %v4133
      %v4184 = vsel %vm1532, %v4135, %v4137
      %v4185 = vsel %vm1532, %v4137, %v4139
      %v4186 = vsel %vm1532, %v4139, %v4141
      %v4187 = vsel %vm1532, %v4141, %v4143
      %v4188 = vsel %vm1532, %v4145, %v4147
      %v4189 = vsel %vm1532, %v4147, %v4149
      %v4190 = vsel %vm1532, %v4149, %v4151
      %v4191 = vsel %vm1532, %v4151, %v4153
      %v4192 = vsel %vm1532, %v4155, %v4157
      %v4193 = vsel %vm1532, %v4157, %v4159
      %v4194 = vsel %vm1532, %v4159, %v4161
      %v4195 = vsel %vm1532, %v4161, %v4163
      %4236 = vrot.lane.b32.xlu0 %v3660, 126
      %v4237 = vpop.permute.xlu0 %4236
      %4238 = vrot.lane.b32.xlu0 %v3661, 126
      %v4239 = vpop.permute.xlu0 %4238
      %4240 = vrot.lane.b32.xlu0 %v3662, 126
      %v4241 = vpop.permute.xlu0 %4240
      %4242 = vrot.lane.b32.xlu0 %v3663, 126
      %v4243 = vpop.permute.xlu0 %4242
      %4244 = vrot.lane.b32.xlu0 %v3664, 126
      %v4245 = vpop.permute.xlu0 %4244
      %4246 = vrot.lane.b32.xlu0 %v3665, 126
      %v4247 = vpop.permute.xlu0 %4246
      %4248 = vrot.lane.b32.xlu0 %v3666, 126
      %v4249 = vpop.permute.xlu0 %4248
      %4250 = vrot.lane.b32.xlu0 %v3667, 126
      %v4251 = vpop.permute.xlu0 %4250
      %4252 = vrot.lane.b32.xlu0 %v3668, 126
      %v4253 = vpop.permute.xlu0 %4252
      %4254 = vrot.lane.b32.xlu0 %v3669, 126
      %v4255 = vpop.permute.xlu0 %4254
      %4256 = vrot.lane.b32.xlu0 %v3670, 126
      %v4257 = vpop.permute.xlu0 %4256
      %4258 = vrot.lane.b32.xlu0 %v3671, 126
      %v4259 = vpop.permute.xlu0 %4258
      %4260 = vrot.lane.b32.xlu0 %v3672, 126
      %v4261 = vpop.permute.xlu0 %4260
      %4262 = vrot.lane.b32.xlu0 %v3673, 126
      %v4263 = vpop.permute.xlu0 %4262
      %4264 = vrot.lane.b32.xlu0 %v3674, 126
      %v4265 = vpop.permute.xlu0 %4264
      %4266 = vrot.lane.b32.xlu0 %v3675, 126
      %v4267 = vpop.permute.xlu0 %4266
      %4268 = vrot.lane.b32.xlu0 %v3676, 126
      %v4269 = vpop.permute.xlu0 %4268
      %4270 = vrot.lane.b32.xlu0 %v3677, 126
      %v4271 = vpop.permute.xlu0 %4270
      %4272 = vrot.lane.b32.xlu0 %v3678, 126
      %v4273 = vpop.permute.xlu0 %4272
      %4274 = vrot.lane.b32.xlu0 %v3679, 126
      %v4275 = vpop.permute.xlu0 %4274
      %4276 = vrot.lane.b32.xlu0 %v3680, 126
      %v4277 = vpop.permute.xlu0 %4276
      %4278 = vrot.lane.b32.xlu0 %v3681, 126
      %v4279 = vpop.permute.xlu0 %4278
      %4280 = vrot.lane.b32.xlu0 %v3682, 126
      %v4281 = vpop.permute.xlu0 %4280
      %4282 = vrot.lane.b32.xlu0 %v3683, 126
      %v4283 = vpop.permute.xlu0 %4282
      %4284 = vrot.lane.b32.xlu0 %v3684, 126
      %v4285 = vpop.permute.xlu0 %4284
      %4286 = vrot.lane.b32.xlu0 %v3685, 126
      %v4287 = vpop.permute.xlu0 %4286
      %4288 = vrot.lane.b32.xlu0 %v3686, 126
      %v4289 = vpop.permute.xlu0 %4288
      %4290 = vrot.lane.b32.xlu0 %v3687, 126
      %v4291 = vpop.permute.xlu0 %4290
      %4292 = vrot.lane.b32.xlu0 %v3688, 126
      %v4293 = vpop.permute.xlu0 %4292
      %4294 = vrot.lane.b32.xlu0 %v3689, 126
      %v4295 = vpop.permute.xlu0 %4294
      %4296 = vrot.lane.b32.xlu0 %v3690, 126
      %v4297 = vpop.permute.xlu0 %4296
      %4298 = vrot.lane.b32.xlu0 %v3691, 126
      %v4299 = vpop.permute.xlu0 %4298
      %4300 = vrot.lane.b32.xlu0 %v3692, 126
      %v4301 = vpop.permute.xlu0 %4300
      %4302 = vrot.lane.b32.xlu0 %v3693, 126
      %v4303 = vpop.permute.xlu0 %4302
      %4304 = vrot.lane.b32.xlu0 %v3694, 126
      %v4305 = vpop.permute.xlu0 %4304
      %4306 = vrot.lane.b32.xlu0 %v3695, 126
      %v4307 = vpop.permute.xlu0 %4306
      %4308 = vrot.lane.b32.xlu0 %v3696, 126
      %v4309 = vpop.permute.xlu0 %4308
      %4310 = vrot.lane.b32.xlu0 %v3697, 126
      %v4311 = vpop.permute.xlu0 %4310
      %4312 = vrot.lane.b32.xlu0 %v3698, 126
      %v4313 = vpop.permute.xlu0 %4312
      %4314 = vrot.lane.b32.xlu0 %v3699, 126
      %v4315 = vpop.permute.xlu0 %4314
      %v4316 = vsel %vm1609, %v4237, %v4239
      %v4317 = vsel %vm1609, %v4239, %v4241
      %v4318 = vsel %vm1609, %v4241, %v4243
      %v4319 = vsel %vm1609, %v4243, %v4245
      %v4320 = vsel %vm1609, %v4247, %v4249
      %v4321 = vsel %vm1609, %v4249, %v4251
      %v4322 = vsel %vm1609, %v4251, %v4253
      %v4323 = vsel %vm1609, %v4253, %v4255
      %v4324 = vsel %vm1609, %v4257, %v4259
      %v4325 = vsel %vm1609, %v4259, %v4261
      %v4326 = vsel %vm1609, %v4261, %v4263
      %v4327 = vsel %vm1609, %v4263, %v4265
      %v4328 = vsel %vm1609, %v4267, %v4269
      %v4329 = vsel %vm1609, %v4269, %v4271
      %v4330 = vsel %vm1609, %v4271, %v4273
      %v4331 = vsel %vm1609, %v4273, %v4275
      %v4332 = vsel %vm1609, %v4277, %v4279
      %v4333 = vsel %vm1609, %v4279, %v4281
      %v4334 = vsel %vm1609, %v4281, %v4283
      %v4335 = vsel %vm1609, %v4283, %v4285
      %v4336 = vsel %vm1609, %v4287, %v4289
      %v4337 = vsel %vm1609, %v4289, %v4291
      %v4338 = vsel %vm1609, %v4291, %v4293
      %v4339 = vsel %vm1609, %v4293, %v4295
      %v4340 = vsel %vm1609, %v4297, %v4299
      %v4341 = vsel %vm1609, %v4299, %v4301
      %v4342 = vsel %vm1609, %v4301, %v4303
      %v4343 = vsel %vm1609, %v4303, %v4305
      %v4344 = vsel %vm1609, %v4307, %v4309
      %v4345 = vsel %vm1609, %v4309, %v4311
      %v4346 = vsel %vm1609, %v4311, %v4313
      %v4347 = vsel %vm1609, %v4313, %v4315
      %v4388 = vld [vmem:[%s6] sm:$0xff]
      %v4389 = vld [vmem:[%s6 + $0x8] sm:$0xf]
      %v4390 = vld [vmem:[%s6 + $0xc] sm:$0xff]
      %v4391 = vld [vmem:[%s6 + $0x14] sm:$0xf]
      %v4392 = vld [vmem:[%s6 + $0x18] sm:$0xff]
      %v4393 = vld [vmem:[%s6 + $0x20] sm:$0xf]
      %v4394 = vld [vmem:[%s6 + $0x24] sm:$0xff]
      %v4395 = vld [vmem:[%s6 + $0x2c] sm:$0xf]
      %v4396 = vld [vmem:[%s6 + $0x30] sm:$0xff]
      %v4397 = vld [vmem:[%s6 + $0x38] sm:$0xf]
      %v4398 = vld [vmem:[%s6 + $0x3c] sm:$0xff]
      %v4399 = vld [vmem:[%s6 + $0x44] sm:$0xf]
      %v4400 = vld [vmem:[%s6 + $0x48] sm:$0xff]
      %v4401 = vld [vmem:[%s6 + $0x50] sm:$0xf]
      %v4402 = vld [vmem:[%s6 + $0x54] sm:$0xff]
      %v4403 = vld [vmem:[%s6 + $0x5c] sm:$0xf]
      %v4404 = vld [vmem:[%s7] sm:$0xff]
      %v4405 = vld [vmem:[%s7 + $0x8] sm:$0xf]
      %v4406 = vld [vmem:[%s7 + $0xc] sm:$0xff]
      %v4407 = vld [vmem:[%s7 + $0x14] sm:$0xf]
      %v4408 = vld [vmem:[%s7 + $0x18] sm:$0xff]
      %v4409 = vld [vmem:[%s7 + $0x20] sm:$0xf]
      %v4410 = vld [vmem:[%s7 + $0x24] sm:$0xff]
      %v4411 = vld [vmem:[%s7 + $0x2c] sm:$0xf]
      %v4412 = vld [vmem:[%s7 + $0x30] sm:$0xff]
      %v4413 = vld [vmem:[%s7 + $0x38] sm:$0xf]
      %v4414 = vld [vmem:[%s7 + $0x3c] sm:$0xff]
      %v4415 = vld [vmem:[%s7 + $0x44] sm:$0xf]
      %v4416 = vld [vmem:[%s7 + $0x48] sm:$0xff]
      %v4417 = vld [vmem:[%s7 + $0x50] sm:$0xf]
      %v4418 = vld [vmem:[%s7 + $0x54] sm:$0xff]
      %v4419 = vld [vmem:[%s7 + $0x5c] sm:$0xf]
      %v4436 = vunpack.c.l.b16 %v4388
      %v4437 = vunpack.c.h.b16 %v4388
      %v4438 = vunpack.c.l.b16 %v4389
      %v4439 = vunpack.c.l.b16 %v4390
      %v4440 = vunpack.c.h.b16 %v4390
      %v4441 = vunpack.c.l.b16 %v4391
      %v4442 = vunpack.c.l.b16 %v4392
      %v4443 = vunpack.c.h.b16 %v4392
      %v4444 = vunpack.c.l.b16 %v4393
      %v4445 = vunpack.c.l.b16 %v4394
      %v4446 = vunpack.c.h.b16 %v4394
      %v4447 = vunpack.c.l.b16 %v4395
      %v4448 = vunpack.c.l.b16 %v4396
      %v4449 = vunpack.c.h.b16 %v4396
      %v4450 = vunpack.c.l.b16 %v4397
      %v4451 = vunpack.c.l.b16 %v4398
      %v4452 = vunpack.c.h.b16 %v4398
      %v4453 = vunpack.c.l.b16 %v4399
      %v4454 = vunpack.c.l.b16 %v4400
      %v4455 = vunpack.c.h.b16 %v4400
      %v4456 = vunpack.c.l.b16 %v4401
      %v4457 = vunpack.c.l.b16 %v4402
      %v4458 = vunpack.c.h.b16 %v4402
      %v4459 = vunpack.c.l.b16 %v4403
      %v4460 = vpack.c.b16 %v4439, %v4436
      %v4461 = vpack.c.b16 %v4440, %v4437
      %v4462 = vpack.c.b16 %v4441, %v4438
      %v4463 = vpack.c.b16 %v4445, %v4442
      %v4464 = vpack.c.b16 %v4446, %v4443
      %v4465 = vpack.c.b16 %v4447, %v4444
      %v4466 = vpack.c.b16 %v4451, %v4448
      %v4467 = vpack.c.b16 %v4452, %v4449
      %v4468 = vpack.c.b16 %v4453, %v4450
      %v4469 = vpack.c.b16 %v4457, %v4454
      %v4470 = vpack.c.b16 %v4458, %v4455
      %v4471 = vpack.c.b16 %v4459, %v4456
      %4484 = vmatprep.subr.bf16.mxu0 %v3696
      %4485 = vmatpush1.bf16.msra.mxu0 %v3695
      %4486 = vmatprep.subr.bf16.mxu0 %v3691
      %4487 = vmatpush1.bf16.msra.mxu0 %v3690
      %4488 = vmatprep.subr.bf16.mxu0 %v3686
      %4489 = vmatpush1.bf16.msra.mxu0 %v3685
      %4490 = vmatprep.subr.bf16.mxu0 %v3681
      %4491 = vmatpush1.bf16.msra.mxu0 %v3680
      %4492 = vmatprep.subr.bf16.mxu0 %v3676
      %4493 = vmatpush1.bf16.msra.mxu0 %v3675
      %4494 = vmatprep.subr.bf16.mxu0 %v3671
      %4495 = vmatpush1.bf16.msra.mxu0 %v3670
      %4496 = vmatprep.subr.bf16.mxu0 %v3666
      %4497 = vmatpush1.bf16.msra.mxu0 %v3665
      %4498 = vmatprep.subr.bf16.mxu0 %v3661
      %4499 = vmatpush1.bf16.msra.mxu0 %v3660
      %4500 = vmatprep.subr.bf16.mxu0 %v4193
      %4501 = vmatpush2.bf16.msra.mxu0 %v4192
      %4502 = vmatprep.subr.bf16.mxu0 %v4189
      %4503 = vmatpush2.bf16.msra.mxu0 %v4188
      %4504 = vmatprep.subr.bf16.mxu0 %v4185
      %4505 = vmatpush2.bf16.msra.mxu0 %v4184
      %4506 = vmatprep.subr.bf16.mxu0 %v4181
      %4507 = vmatpush2.bf16.msra.mxu0 %v4180
      %4508 = vmatprep.subr.bf16.mxu0 %v4177
      %4509 = vmatpush2.bf16.msra.mxu0 %v4176
      %4510 = vmatprep.subr.bf16.mxu0 %v4173
      %4511 = vmatpush2.bf16.msra.mxu0 %v4172
      %4512 = vmatprep.subr.bf16.mxu0 %v4169
      %4513 = vmatpush2.bf16.msra.mxu0 %v4168
      %4514 = vmatprep.subr.bf16.mxu0 %v4165
      %4515 = vmatpush2.bf16.msra.mxu0 %v4164
      %4516 = vmatprep.mubr.bf16.mxu0 %v4461
      %4517 = vmatmul.mubr.bf16.gmra.mxu0 %v4460
      %v4518 = vpop.f32.mrf.mxu0
      %v4519 = vadd.f32 0.0, %v4518
      %v4520 = vpop.f32.mrf.mxu0
      %v4521 = vadd.f32 0.0, %v4520
      %v4522 = vpop.f32.mrf.mxu0
      %v4523 = vadd.f32 0.0, %v4522
      %v4524 = vpop.f32.mrf.mxu0
      %v4525 = vadd.f32 0.0, %v4524
      %4526 = vmatprep.mubr.bf16.mxu0 %v4464
      %4527 = vmatmul.mubr.bf16.gmra.mxu0 %v4463
      %v4528 = vpop.f32.mrf.mxu0
      %v4529 = vadd.f32 0.0, %v4528
      %v4530 = vpop.f32.mrf.mxu0
      %v4531 = vadd.f32 0.0, %v4530
      %v4532 = vpop.f32.mrf.mxu0
      %v4533 = vadd.f32 0.0, %v4532
      %v4534 = vpop.f32.mrf.mxu0
      %v4535 = vadd.f32 0.0, %v4534
      %4536 = vmatprep.mubr.bf16.mxu0 %v4467
      %4537 = vmatmul.mubr.bf16.gmra.mxu0 %v4466
      %v4538 = vpop.f32.mrf.mxu0
      %v4539 = vadd.f32 0.0, %v4538
      %v4540 = vpop.f32.mrf.mxu0
      %v4541 = vadd.f32 0.0, %v4540
      %v4542 = vpop.f32.mrf.mxu0
      %v4543 = vadd.f32 0.0, %v4542
      %v4544 = vpop.f32.mrf.mxu0
      %v4545 = vadd.f32 0.0, %v4544
      %4546 = vmatprep.mubr.bf16.mxu0 %v4470
      %4547 = vmatmul.mubr.bf16.gmra.mxu0 %v4469
      %v4548 = vpop.f32.mrf.mxu0
      %v4549 = vadd.f32 0.0, %v4548
      %v4550 = vpop.f32.mrf.mxu0
      %v4551 = vadd.f32 0.0, %v4550
      %v4552 = vpop.f32.mrf.mxu0
      %v4553 = vadd.f32 0.0, %v4552
      %v4554 = vpop.f32.mrf.mxu0
      %v4555 = vadd.f32 0.0, %v4554
      %4556 = vdwg.mxu0
      %4557 = vmatprep.subr.bf16.mxu0 %v4345
      %4558 = vmatpush1.bf16.msra.mxu0 %v4344
      %4559 = vmatprep.subr.bf16.mxu0 %v4341
      %4560 = vmatpush1.bf16.msra.mxu0 %v4340
      %4561 = vmatprep.subr.bf16.mxu0 %v4337
      %4562 = vmatpush1.bf16.msra.mxu0 %v4336
      %4563 = vmatprep.subr.bf16.mxu0 %v4333
      %4564 = vmatpush1.bf16.msra.mxu0 %v4332
      %4565 = vmatprep.subr.bf16.mxu0 %v4329
      %4566 = vmatpush1.bf16.msra.mxu0 %v4328
      %4567 = vmatprep.subr.bf16.mxu0 %v4325
      %4568 = vmatpush1.bf16.msra.mxu0 %v4324
      %4569 = vmatprep.subr.bf16.mxu0 %v4321
      %4570 = vmatpush1.bf16.msra.mxu0 %v4320
      %4571 = vmatprep.subr.bf16.mxu0 %v4317
      %4572 = vmatpush1.bf16.msra.mxu0 %v4316
      %4573 = vmatprep.subr.bf16.mxu0 0
      %4574 = vmatpush2.bf16.msra.mxu0 0
      %4575 = vmatprep.subr.bf16.mxu0 0
      %4576 = vmatpush2.bf16.msra.mxu0 0
      %4577 = vmatprep.subr.bf16.mxu0 0
      %4578 = vmatpush2.bf16.msra.mxu0 0
      %4579 = vmatprep.subr.bf16.mxu0 0
      %4580 = vmatpush2.bf16.msra.mxu0 0
      %4581 = vmatprep.subr.bf16.mxu0 0
      %4582 = vmatpush2.bf16.msra.mxu0 0
      %4583 = vmatprep.subr.bf16.mxu0 0
      %4584 = vmatpush2.bf16.msra.mxu0 0
      %4585 = vmatprep.subr.bf16.mxu0 0
      %4586 = vmatpush2.bf16.msra.mxu0 0
      %4587 = vmatprep.subr.bf16.mxu0 0
      %4588 = vmatpush2.bf16.msra.mxu0 0
      %4589 = vmatprep.mubr.bf16.mxu0 0
      %4590 = vmatmul.mubr.bf16.gmra.mxu0 %v4462
      %v4591 = vpop.f32.mrf.mxu0
      %v4592 = vadd.f32 %v4519, %v4591
      %v4593 = vpop.f32.mrf.mxu0
      %v4594 = vadd.f32 %v4521, %v4593
      %v4595 = vpop.f32.mrf.mxu0
      %v4596 = vadd.f32 %v4523, %v4595
      %v4597 = vpop.f32.mrf.mxu0
      %v4598 = vadd.f32 %v4525, %v4597
      %4599 = vmatprep.mubr.bf16.mxu0 0
      %4600 = vmatmul.mubr.bf16.gmra.mxu0 %v4465
      %v4601 = vpop.f32.mrf.mxu0
      %v4602 = vadd.f32 %v4529, %v4601
      %v4603 = vpop.f32.mrf.mxu0
      %v4604 = vadd.f32 %v4531, %v4603
      %v4605 = vpop.f32.mrf.mxu0
      %v4606 = vadd.f32 %v4533, %v4605
      %v4607 = vpop.f32.mrf.mxu0
      %v4608 = vadd.f32 %v4535, %v4607
      %4609 = vmatprep.mubr.bf16.mxu0 0
      %4610 = vmatmul.mubr.bf16.gmra.mxu0 %v4468
      %v4611 = vpop.f32.mrf.mxu0
      %v4612 = vadd.f32 %v4539, %v4611
      %v4613 = vpop.f32.mrf.mxu0
      %v4614 = vadd.f32 %v4541, %v4613
      %v4615 = vpop.f32.mrf.mxu0
      %v4616 = vadd.f32 %v4543, %v4615
      %v4617 = vpop.f32.mrf.mxu0
      %v4618 = vadd.f32 %v4545, %v4617
      %4619 = vmatprep.mubr.bf16.mxu0 0
      %4620 = vmatmul.mubr.bf16.gmra.mxu0 %v4471
      %v4621 = vpop.f32.mrf.mxu0
      %v4622 = vadd.f32 %v4549, %v4621
      %v4623 = vpop.f32.mrf.mxu0
      %v4624 = vadd.f32 %v4551, %v4623
      %v4625 = vpop.f32.mrf.mxu0
      %v4626 = vadd.f32 %v4553, %v4625
      %v4627 = vpop.f32.mrf.mxu0
      %v4628 = vadd.f32 %v4555, %v4627
      %4629 = vdwg.mxu0
      %4630 = vmatprep.subr.bf16.mxu0 %v3698
      %4631 = vmatpush1.bf16.msra.mxu0 %v3697
      %4632 = vmatprep.subr.bf16.mxu0 %v3693
      %4633 = vmatpush1.bf16.msra.mxu0 %v3692
      %4634 = vmatprep.subr.bf16.mxu0 %v3688
      %4635 = vmatpush1.bf16.msra.mxu0 %v3687
      %4636 = vmatprep.subr.bf16.mxu0 %v3683
      %4637 = vmatpush1.bf16.msra.mxu0 %v3682
      %4638 = vmatprep.subr.bf16.mxu0 %v3678
      %4639 = vmatpush1.bf16.msra.mxu0 %v3677
      %4640 = vmatprep.subr.bf16.mxu0 %v3673
      %4641 = vmatpush1.bf16.msra.mxu0 %v3672
      %4642 = vmatprep.subr.bf16.mxu0 %v3668
      %4643 = vmatpush1.bf16.msra.mxu0 %v3667
      %4644 = vmatprep.subr.bf16.mxu0 %v3663
      %4645 = vmatpush1.bf16.msra.mxu0 %v3662
      %4646 = vmatprep.subr.bf16.mxu0 %v4195
      %4647 = vmatpush2.bf16.msra.mxu0 %v4194
      %4648 = vmatprep.subr.bf16.mxu0 %v4191
      %4649 = vmatpush2.bf16.msra.mxu0 %v4190
      %4650 = vmatprep.subr.bf16.mxu0 %v4187
      %4651 = vmatpush2.bf16.msra.mxu0 %v4186
      %4652 = vmatprep.subr.bf16.mxu0 %v4183
      %4653 = vmatpush2.bf16.msra.mxu0 %v4182
      %4654 = vmatprep.subr.bf16.mxu0 %v4179
      %4655 = vmatpush2.bf16.msra.mxu0 %v4178
      %4656 = vmatprep.subr.bf16.mxu0 %v4175
      %4657 = vmatpush2.bf16.msra.mxu0 %v4174
      %4658 = vmatprep.subr.bf16.mxu0 %v4171
      %4659 = vmatpush2.bf16.msra.mxu0 %v4170
      %4660 = vmatprep.subr.bf16.mxu0 %v4167
      %4661 = vmatpush2.bf16.msra.mxu0 %v4166
      %4662 = vmatprep.mubr.bf16.mxu0 %v4461
      %4663 = vmatmul.mubr.bf16.gmra.mxu0 %v4460
      %v4664 = vpop.f32.mrf.mxu0
      %v4665 = vadd.f32 0.0, %v4664
      %v4666 = vpop.f32.mrf.mxu0
      %v4667 = vadd.f32 0.0, %v4666
      %v4668 = vpop.f32.mrf.mxu0
      %v4669 = vadd.f32 0.0, %v4668
      %v4670 = vpop.f32.mrf.mxu0
      %v4671 = vadd.f32 0.0, %v4670
      %4672 = vmatprep.mubr.bf16.mxu0 %v4464
      %4673 = vmatmul.mubr.bf16.gmra.mxu0 %v4463
      %v4674 = vpop.f32.mrf.mxu0
      %v4675 = vadd.f32 0.0, %v4674
      %v4676 = vpop.f32.mrf.mxu0
      %v4677 = vadd.f32 0.0, %v4676
      %v4678 = vpop.f32.mrf.mxu0
      %v4679 = vadd.f32 0.0, %v4678
      %v4680 = vpop.f32.mrf.mxu0
      %v4681 = vadd.f32 0.0, %v4680
      %4682 = vmatprep.mubr.bf16.mxu0 %v4467
      %4683 = vmatmul.mubr.bf16.gmra.mxu0 %v4466
      %v4684 = vpop.f32.mrf.mxu0
      %v4685 = vadd.f32 0.0, %v4684
      %v4686 = vpop.f32.mrf.mxu0
      %v4687 = vadd.f32 0.0, %v4686
      %v4688 = vpop.f32.mrf.mxu0
      %v4689 = vadd.f32 0.0, %v4688
      %v4690 = vpop.f32.mrf.mxu0
      %v4691 = vadd.f32 0.0, %v4690
      %4692 = vmatprep.mubr.bf16.mxu0 %v4470
      %4693 = vmatmul.mubr.bf16.gmra.mxu0 %v4469
      %v4694 = vpop.f32.mrf.mxu0
      %v4695 = vadd.f32 0.0, %v4694
      %v4696 = vpop.f32.mrf.mxu0
      %v4697 = vadd.f32 0.0, %v4696
      %v4698 = vpop.f32.mrf.mxu0
      %v4699 = vadd.f32 0.0, %v4698
      %v4700 = vpop.f32.mrf.mxu0
      %v4701 = vadd.f32 0.0, %v4700
      %4702 = vdwg.mxu0
      %4703 = vmatprep.subr.bf16.mxu0 %v4347
      %4704 = vmatpush1.bf16.msra.mxu0 %v4346
      %4705 = vmatprep.subr.bf16.mxu0 %v4343
      %4706 = vmatpush1.bf16.msra.mxu0 %v4342
      %4707 = vmatprep.subr.bf16.mxu0 %v4339
      %4708 = vmatpush1.bf16.msra.mxu0 %v4338
      %4709 = vmatprep.subr.bf16.mxu0 %v4335
      %4710 = vmatpush1.bf16.msra.mxu0 %v4334
      %4711 = vmatprep.subr.bf16.mxu0 %v4331
      %4712 = vmatpush1.bf16.msra.mxu0 %v4330
      %4713 = vmatprep.subr.bf16.mxu0 %v4327
      %4714 = vmatpush1.bf16.msra.mxu0 %v4326
      %4715 = vmatprep.subr.bf16.mxu0 %v4323
      %4716 = vmatpush1.bf16.msra.mxu0 %v4322
      %4717 = vmatprep.subr.bf16.mxu0 %v4319
      %4718 = vmatpush1.bf16.msra.mxu0 %v4318
      %4719 = vmatprep.subr.bf16.mxu0 0
      %4720 = vmatpush2.bf16.msra.mxu0 0
      %4721 = vmatprep.subr.bf16.mxu0 0
      %4722 = vmatpush2.bf16.msra.mxu0 0
      %4723 = vmatprep.subr.bf16.mxu0 0
      %4724 = vmatpush2.bf16.msra.mxu0 0
      %4725 = vmatprep.subr.bf16.mxu0 0
      %4726 = vmatpush2.bf16.msra.mxu0 0
      %4727 = vmatprep.subr.bf16.mxu0 0
      %4728 = vmatpush2.bf16.msra.mxu0 0
      %4729 = vmatprep.subr.bf16.mxu0 0
      %4730 = vmatpush2.bf16.msra.mxu0 0
      %4731 = vmatprep.subr.bf16.mxu0 0
      %4732 = vmatpush2.bf16.msra.mxu0 0
      %4733 = vmatprep.subr.bf16.mxu0 0
      %4734 = vmatpush2.bf16.msra.mxu0 0
      %4735 = vmatprep.mubr.bf16.mxu0 0
      %4736 = vmatmul.mubr.bf16.gmra.mxu0 %v4462
      %v4737 = vpop.f32.mrf.mxu0
      %v4738 = vadd.f32 %v4665, %v4737
      %v4739 = vpop.f32.mrf.mxu0
      %v4740 = vadd.f32 %v4667, %v4739
      %v4741 = vpop.f32.mrf.mxu0
      %v4742 = vadd.f32 %v4669, %v4741
      %v4743 = vpop.f32.mrf.mxu0
      %v4744 = vadd.f32 %v4671, %v4743
      %4745 = vmatprep.mubr.bf16.mxu0 0
      %4746 = vmatmul.mubr.bf16.gmra.mxu0 %v4465
      %v4747 = vpop.f32.mrf.mxu0
      %v4748 = vadd.f32 %v4675, %v4747
      %v4749 = vpop.f32.mrf.mxu0
      %v4750 = vadd.f32 %v4677, %v4749
      %v4751 = vpop.f32.mrf.mxu0
      %v4752 = vadd.f32 %v4679, %v4751
      %v4753 = vpop.f32.mrf.mxu0
      %v4754 = vadd.f32 %v4681, %v4753
      %4755 = vmatprep.mubr.bf16.mxu0 0
      %4756 = vmatmul.mubr.bf16.gmra.mxu0 %v4468
      %v4757 = vpop.f32.mrf.mxu0
      %v4758 = vadd.f32 %v4685, %v4757
      %v4759 = vpop.f32.mrf.mxu0
      %v4760 = vadd.f32 %v4687, %v4759
      %v4761 = vpop.f32.mrf.mxu0
      %v4762 = vadd.f32 %v4689, %v4761
      %v4763 = vpop.f32.mrf.mxu0
      %v4764 = vadd.f32 %v4691, %v4763
      %4765 = vmatprep.mubr.bf16.mxu0 0
      %4766 = vmatmul.mubr.bf16.gmra.mxu0 %v4471
      %v4767 = vpop.f32.mrf.mxu0
      %v4768 = vadd.f32 %v4695, %v4767
      %v4769 = vpop.f32.mrf.mxu0
      %v4770 = vadd.f32 %v4697, %v4769
      %v4771 = vpop.f32.mrf.mxu0
      %v4772 = vadd.f32 %v4699, %v4771
      %v4773 = vpop.f32.mrf.mxu0
      %v4774 = vadd.f32 %v4701, %v4773
      %4775 = vdwg.mxu0
      %4776 = vmatprep.subr.bf16.mxu0 0
      %4777 = vmatpush1.bf16.msra.mxu0 %v3699
      %4778 = vmatprep.subr.bf16.mxu0 0
      %4779 = vmatpush1.bf16.msra.mxu0 %v3694
      %4780 = vmatprep.subr.bf16.mxu0 0
      %4781 = vmatpush1.bf16.msra.mxu0 %v3689
      %4782 = vmatprep.subr.bf16.mxu0 0
      %4783 = vmatpush1.bf16.msra.mxu0 %v3684
      %4784 = vmatprep.subr.bf16.mxu0 0
      %4785 = vmatpush1.bf16.msra.mxu0 %v3679
      %4786 = vmatprep.subr.bf16.mxu0 0
      %4787 = vmatpush1.bf16.msra.mxu0 %v3674
      %4788 = vmatprep.subr.bf16.mxu0 0
      %4789 = vmatpush1.bf16.msra.mxu0 %v3669
      %4790 = vmatprep.subr.bf16.mxu0 0
      %4791 = vmatpush1.bf16.msra.mxu0 %v3664
      %4792 = vmatprep.subr.bf16.mxu0 0
      %4793 = vmatpush2.bf16.msra.mxu0 %v4163
      %4794 = vmatprep.subr.bf16.mxu0 0
      %4795 = vmatpush2.bf16.msra.mxu0 %v4153
      %4796 = vmatprep.subr.bf16.mxu0 0
      %4797 = vmatpush2.bf16.msra.mxu0 %v4143
      %4798 = vmatprep.subr.bf16.mxu0 0
      %4799 = vmatpush2.bf16.msra.mxu0 %v4133
      %4800 = vmatprep.subr.bf16.mxu0 0
      %4801 = vmatpush2.bf16.msra.mxu0 %v4123
      %4802 = vmatprep.subr.bf16.mxu0 0
      %4803 = vmatpush2.bf16.msra.mxu0 %v4113
      %4804 = vmatprep.subr.bf16.mxu0 0
      %4805 = vmatpush2.bf16.msra.mxu0 %v4103
      %4806 = vmatprep.subr.bf16.mxu0 0
      %4807 = vmatpush2.bf16.msra.mxu0 %v4093
      %4808 = vmatprep.mubr.bf16.mxu0 %v4461
      %4809 = vmatmul.mubr.bf16.gmra.mxu0 %v4460
      %v4810 = vpop.f32.mrf.mxu0
      %v4811 = vadd.f32 0.0, %v4810
      %v4812 = vpop.f32.mrf.mxu0
      %v4813 = vpop.f32.mrf.mxu0
      %v4814 = vadd.f32 0.0, %v4813
      %v4815 = vpop.f32.mrf.mxu0
      %4816 = vmatprep.mubr.bf16.mxu0 %v4464
      %4817 = vmatmul.mubr.bf16.gmra.mxu0 %v4463
      %v4818 = vpop.f32.mrf.mxu0
      %v4819 = vadd.f32 0.0, %v4818
      %v4820 = vpop.f32.mrf.mxu0
      %v4821 = vpop.f32.mrf.mxu0
      %v4822 = vadd.f32 0.0, %v4821
      %v4823 = vpop.f32.mrf.mxu0
      %4824 = vmatprep.mubr.bf16.mxu0 %v4467
      %4825 = vmatmul.mubr.bf16.gmra.mxu0 %v4466
      %v4826 = vpop.f32.mrf.mxu0
      %v4827 = vadd.f32 0.0, %v4826
      %v4828 = vpop.f32.mrf.mxu0
      %v4829 = vpop.f32.mrf.mxu0
      %v4830 = vadd.f32 0.0, %v4829
      %v4831 = vpop.f32.mrf.mxu0
      %4832 = vmatprep.mubr.bf16.mxu0 %v4470
      %4833 = vmatmul.mubr.bf16.gmra.mxu0 %v4469
      %v4834 = vpop.f32.mrf.mxu0
      %v4835 = vadd.f32 0.0, %v4834
      %v4836 = vpop.f32.mrf.mxu0
      %v4837 = vpop.f32.mrf.mxu0
      %v4838 = vadd.f32 0.0, %v4837
      %v4839 = vpop.f32.mrf.mxu0
      %4840 = vdwg.mxu0
      %4841 = vmatprep.subr.bf16.mxu0 0
      %4842 = vmatpush1.bf16.msra.mxu0 %v4315
      %4843 = vmatprep.subr.bf16.mxu0 0
      %4844 = vmatpush1.bf16.msra.mxu0 %v4305
      %4845 = vmatprep.subr.bf16.mxu0 0
      %4846 = vmatpush1.bf16.msra.mxu0 %v4295
      %4847 = vmatprep.subr.bf16.mxu0 0
      %4848 = vmatpush1.bf16.msra.mxu0 %v4285
      %4849 = vmatprep.subr.bf16.mxu0 0
      %4850 = vmatpush1.bf16.msra.mxu0 %v4275
      %4851 = vmatprep.subr.bf16.mxu0 0
      %4852 = vmatpush1.bf16.msra.mxu0 %v4265
      %4853 = vmatprep.subr.bf16.mxu0 0
      %4854 = vmatpush1.bf16.msra.mxu0 %v4255
      %4855 = vmatprep.subr.bf16.mxu0 0
      %4856 = vmatpush1.bf16.msra.mxu0 %v4245
      %4857 = vmatprep.subr.bf16.mxu0 0
      %4858 = vmatpush2.bf16.msra.mxu0 0
      %4859 = vmatprep.subr.bf16.mxu0 0
      %4860 = vmatpush2.bf16.msra.mxu0 0
      %4861 = vmatprep.subr.bf16.mxu0 0
      %4862 = vmatpush2.bf16.msra.mxu0 0
      %4863 = vmatprep.subr.bf16.mxu0 0
      %4864 = vmatpush2.bf16.msra.mxu0 0
      %4865 = vmatprep.subr.bf16.mxu0 0
      %4866 = vmatpush2.bf16.msra.mxu0 0
      %4867 = vmatprep.subr.bf16.mxu0 0
      %4868 = vmatpush2.bf16.msra.mxu0 0
      %4869 = vmatprep.subr.bf16.mxu0 0
      %4870 = vmatpush2.bf16.msra.mxu0 0
      %4871 = vmatprep.subr.bf16.mxu0 0
      %4872 = vmatpush2.bf16.msra.mxu0 0
      %4873 = vmatprep.mubr.bf16.mxu0 0
      %4874 = vmatmul.mubr.bf16.gmra.mxu0 %v4462
      %v4875 = vpop.f32.mrf.mxu0
      %v4876 = vadd.f32 %v4811, %v4875
      %v4877 = vpop.f32.mrf.mxu0
      %v4878 = vpop.f32.mrf.mxu0
      %v4879 = vadd.f32 %v4814, %v4878
      %v4880 = vpop.f32.mrf.mxu0
      %4881 = vmatprep.mubr.bf16.mxu0 0
      %4882 = vmatmul.mubr.bf16.gmra.mxu0 %v4465
      %v4883 = vpop.f32.mrf.mxu0
      %v4884 = vadd.f32 %v4819, %v4883
      %v4885 = vpop.f32.mrf.mxu0
      %v4886 = vpop.f32.mrf.mxu0
      %v4887 = vadd.f32 %v4822, %v4886
      %v4888 = vpop.f32.mrf.mxu0
      %4889 = vmatprep.mubr.bf16.mxu0 0
      %4890 = vmatmul.mubr.bf16.gmra.mxu0 %v4468
      %v4891 = vpop.f32.mrf.mxu0
      %v4892 = vadd.f32 %v4827, %v4891
      %v4893 = vpop.f32.mrf.mxu0
      %v4894 = vpop.f32.mrf.mxu0
      %v4895 = vadd.f32 %v4830, %v4894
      %v4896 = vpop.f32.mrf.mxu0
      %4897 = vmatprep.mubr.bf16.mxu0 0
      %4898 = vmatmul.mubr.bf16.gmra.mxu0 %v4471
      %v4899 = vpop.f32.mrf.mxu0
      %v4900 = vadd.f32 %v4835, %v4899
      %v4901 = vpop.f32.mrf.mxu0
      %v4902 = vpop.f32.mrf.mxu0
      %v4903 = vadd.f32 %v4838, %v4902
      %v4904 = vpop.f32.mrf.mxu0
      %4905 = vdwg.mxu0
      %4906 = vmatprep.subr.bf16.mxu0 %v3496
      %4907 = vmatpush1.bf16.msra.mxu0 %v3495
      %4908 = vmatprep.subr.bf16.mxu0 %v3491
      %4909 = vmatpush1.bf16.msra.mxu0 %v3490
      %4910 = vmatprep.subr.bf16.mxu0 %v3486
      %4911 = vmatpush1.bf16.msra.mxu0 %v3485
      %4912 = vmatprep.subr.bf16.mxu0 %v3481
      %4913 = vmatpush1.bf16.msra.mxu0 %v3480
      %4914 = vmatprep.subr.bf16.mxu0 %v3476
      %4915 = vmatpush1.bf16.msra.mxu0 %v3475
      %4916 = vmatprep.subr.bf16.mxu0 %v3471
      %4917 = vmatpush1.bf16.msra.mxu0 %v3470
      %4918 = vmatprep.subr.bf16.mxu0 %v3466
      %4919 = vmatpush1.bf16.msra.mxu0 %v3465
      %4920 = vmatprep.subr.bf16.mxu0 %v3461
      %4921 = vmatpush1.bf16.msra.mxu0 %v3460
      %4922 = vmatprep.subr.bf16.mxu0 %v3849
      %4923 = vmatpush2.bf16.msra.mxu0 %v3848
      %4924 = vmatprep.subr.bf16.mxu0 %v3845
      %4925 = vmatpush2.bf16.msra.mxu0 %v3844
      %4926 = vmatprep.subr.bf16.mxu0 %v3841
      %4927 = vmatpush2.bf16.msra.mxu0 %v3840
      %4928 = vmatprep.subr.bf16.mxu0 %v3837
      %4929 = vmatpush2.bf16.msra.mxu0 %v3836
      %4930 = vmatprep.subr.bf16.mxu0 %v3833
      %4931 = vmatpush2.bf16.msra.mxu0 %v3832
      %4932 = vmatprep.subr.bf16.mxu0 %v3829
      %4933 = vmatpush2.bf16.msra.mxu0 %v3828
      %4934 = vmatprep.subr.bf16.mxu0 %v3825
      %4935 = vmatpush2.bf16.msra.mxu0 %v3824
      %4936 = vmatprep.subr.bf16.mxu0 %v3821
      %4937 = vmatpush2.bf16.msra.mxu0 %v3820
      %4938 = vmatprep.mubr.bf16.mxu0 %v4461
      %4939 = vmatmul.mubr.bf16.gmra.mxu0 %v4460
      %v4940 = vpop.f32.mrf.mxu0
      %v4941 = vadd.f32 %v4592, %v4940
      %v4942 = vpop.f32.mrf.mxu0
      %v4943 = vadd.f32 %v4594, %v4942
      %v4944 = vpop.f32.mrf.mxu0
      %v4945 = vadd.f32 %v4596, %v4944
      %v4946 = vpop.f32.mrf.mxu0
      %v4947 = vadd.f32 %v4598, %v4946
      %4948 = vmatprep.mubr.bf16.mxu0 %v4464
      %4949 = vmatmul.mubr.bf16.gmra.mxu0 %v4463
      %v4950 = vpop.f32.mrf.mxu0
      %v4951 = vadd.f32 %v4602, %v4950
      %v4952 = vpop.f32.mrf.mxu0
      %v4953 = vadd.f32 %v4604, %v4952
      %v4954 = vpop.f32.mrf.mxu0
      %v4955 = vadd.f32 %v4606, %v4954
      %v4956 = vpop.f32.mrf.mxu0
      %v4957 = vadd.f32 %v4608, %v4956
      %4958 = vmatprep.mubr.bf16.mxu0 %v4467
      %4959 = vmatmul.mubr.bf16.gmra.mxu0 %v4466
      %v4960 = vpop.f32.mrf.mxu0
      %v4961 = vadd.f32 %v4612, %v4960
      %v4962 = vpop.f32.mrf.mxu0
      %v4963 = vadd.f32 %v4614, %v4962
      %v4964 = vpop.f32.mrf.mxu0
      %v4965 = vadd.f32 %v4616, %v4964
      %v4966 = vpop.f32.mrf.mxu0
      %v4967 = vadd.f32 %v4618, %v4966
      %4968 = vmatprep.mubr.bf16.mxu0 %v4470
      %4969 = vmatmul.mubr.bf16.gmra.mxu0 %v4469
      %v4970 = vpop.f32.mrf.mxu0
      %v4971 = vadd.f32 %v4622, %v4970
      %v4972 = vpop.f32.mrf.mxu0
      %v4973 = vadd.f32 %v4624, %v4972
      %v4974 = vpop.f32.mrf.mxu0
      %v4975 = vadd.f32 %v4626, %v4974
      %v4976 = vpop.f32.mrf.mxu0
      %v4977 = vadd.f32 %v4628, %v4976
      %4978 = vdwg.mxu0
      %4979 = vmatprep.subr.bf16.mxu0 %v4001
      %4980 = vmatpush1.bf16.msra.mxu0 %v4000
      %4981 = vmatprep.subr.bf16.mxu0 %v3997
      %4982 = vmatpush1.bf16.msra.mxu0 %v3996
      %4983 = vmatprep.subr.bf16.mxu0 %v3993
      %4984 = vmatpush1.bf16.msra.mxu0 %v3992
      %4985 = vmatprep.subr.bf16.mxu0 %v3989
      %4986 = vmatpush1.bf16.msra.mxu0 %v3988
      %4987 = vmatprep.subr.bf16.mxu0 %v3985
      %4988 = vmatpush1.bf16.msra.mxu0 %v3984
      %4989 = vmatprep.subr.bf16.mxu0 %v3981
      %4990 = vmatpush1.bf16.msra.mxu0 %v3980
      %4991 = vmatprep.subr.bf16.mxu0 %v3977
      %4992 = vmatpush1.bf16.msra.mxu0 %v3976
      %4993 = vmatprep.subr.bf16.mxu0 %v3973
      %4994 = vmatpush1.bf16.msra.mxu0 %v3972
      %4995 = vmatprep.subr.bf16.mxu0 0
      %4996 = vmatpush2.bf16.msra.mxu0 0
      %4997 = vmatprep.subr.bf16.mxu0 0
      %4998 = vmatpush2.bf16.msra.mxu0 0
      %4999 = vmatprep.subr.bf16.mxu0 0
      %5000 = vmatpush2.bf16.msra.mxu0 0
      %5001 = vmatprep.subr.bf16.mxu0 0
      %5002 = vmatpush2.bf16.msra.mxu0 0
      %5003 = vmatprep.subr.bf16.mxu0 0
      %5004 = vmatpush2.bf16.msra.mxu0 0
      %5005 = vmatprep.subr.bf16.mxu0 0
      %5006 = vmatpush2.bf16.msra.mxu0 0
      %5007 = vmatprep.subr.bf16.mxu0 0
      %5008 = vmatpush2.bf16.msra.mxu0 0
      %5009 = vmatprep.subr.bf16.mxu0 0
      %5010 = vmatpush2.bf16.msra.mxu0 0
      %5011 = vmatprep.mubr.bf16.mxu0 0
      %5012 = vmatmul.mubr.bf16.gmra.mxu0 %v4462
      %v5013 = vpop.f32.mrf.mxu0
      %v5014 = vadd.f32 %v4941, %v5013
      %v5015 = vpop.f32.mrf.mxu0
      %v5016 = vadd.f32 %v4943, %v5015
      %v5017 = vpop.f32.mrf.mxu0
      %v5018 = vadd.f32 %v4945, %v5017
      %v5019 = vpop.f32.mrf.mxu0
      %v5020 = vadd.f32 %v4947, %v5019
      %5021 = vmatprep.mubr.bf16.mxu0 0
      %5022 = vmatmul.mubr.bf16.gmra.mxu0 %v4465
      %v5023 = vpop.f32.mrf.mxu0
      %v5024 = vadd.f32 %v4951, %v5023
      %v5025 = vpop.f32.mrf.mxu0
      %v5026 = vadd.f32 %v4953, %v5025
      %v5027 = vpop.f32.mrf.mxu0
      %v5028 = vadd.f32 %v4955, %v5027
      %v5029 = vpop.f32.mrf.mxu0
      %v5030 = vadd.f32 %v4957, %v5029
      %5031 = vmatprep.mubr.bf16.mxu0 0
      %5032 = vmatmul.mubr.bf16.gmra.mxu0 %v4468
      %v5033 = vpop.f32.mrf.mxu0
      %v5034 = vadd.f32 %v4961, %v5033
      %v5035 = vpop.f32.mrf.mxu0
      %v5036 = vadd.f32 %v4963, %v5035
      %v5037 = vpop.f32.mrf.mxu0
      %v5038 = vadd.f32 %v4965, %v5037
      %v5039 = vpop.f32.mrf.mxu0
      %v5040 = vadd.f32 %v4967, %v5039
      %5041 = vmatprep.mubr.bf16.mxu0 0
      %5042 = vmatmul.mubr.bf16.gmra.mxu0 %v4471
      %v5043 = vpop.f32.mrf.mxu0
      %v5044 = vadd.f32 %v4971, %v5043
      %v5045 = vpop.f32.mrf.mxu0
      %v5046 = vadd.f32 %v4973, %v5045
      %v5047 = vpop.f32.mrf.mxu0
      %v5048 = vadd.f32 %v4975, %v5047
      %v5049 = vpop.f32.mrf.mxu0
      %v5050 = vadd.f32 %v4977, %v5049
      %5051 = vdwg.mxu0
      %5052 = vmatprep.subr.bf16.mxu0 %v3498
      %5053 = vmatpush1.bf16.msra.mxu0 %v3497
      %5054 = vmatprep.subr.bf16.mxu0 %v3493
      %5055 = vmatpush1.bf16.msra.mxu0 %v3492
      %5056 = vmatprep.subr.bf16.mxu0 %v3488
      %5057 = vmatpush1.bf16.msra.mxu0 %v3487
      %5058 = vmatprep.subr.bf16.mxu0 %v3483
      %5059 = vmatpush1.bf16.msra.mxu0 %v3482
      %5060 = vmatprep.subr.bf16.mxu0 %v3478
      %5061 = vmatpush1.bf16.msra.mxu0 %v3477
      %5062 = vmatprep.subr.bf16.mxu0 %v3473
      %5063 = vmatpush1.bf16.msra.mxu0 %v3472
      %5064 = vmatprep.subr.bf16.mxu0 %v3468
      %5065 = vmatpush1.bf16.msra.mxu0 %v3467
      %5066 = vmatprep.subr.bf16.mxu0 %v3463
      %5067 = vmatpush1.bf16.msra.mxu0 %v3462
      %5068 = vmatprep.subr.bf16.mxu0 %v3851
      %5069 = vmatpush2.bf16.msra.mxu0 %v3850
      %5070 = vmatprep.subr.bf16.mxu0 %v3847
      %5071 = vmatpush2.bf16.msra.mxu0 %v3846
      %5072 = vmatprep.subr.bf16.mxu0 %v3843
      %5073 = vmatpush2.bf16.msra.mxu0 %v3842
      %5074 = vmatprep.subr.bf16.mxu0 %v3839
      %5075 = vmatpush2.bf16.msra.mxu0 %v3838
      %5076 = vmatprep.subr.bf16.mxu0 %v3835
      %5077 = vmatpush2.bf16.msra.mxu0 %v3834
      %5078 = vmatprep.subr.bf16.mxu0 %v3831
      %5079 = vmatpush2.bf16.msra.mxu0 %v3830
      %5080 = vmatprep.subr.bf16.mxu0 %v3827
      %5081 = vmatpush2.bf16.msra.mxu0 %v3826
      %5082 = vmatprep.subr.bf16.mxu0 %v3823
      %5083 = vmatpush2.bf16.msra.mxu0 %v3822
      %5084 = vmatprep.mubr.bf16.mxu0 %v4461
      %5085 = vmatmul.mubr.bf16.gmra.mxu0 %v4460
      %v5086 = vpop.f32.mrf.mxu0
      %v5087 = vadd.f32 %v4738, %v5086
      %v5088 = vpop.f32.mrf.mxu0
      %v5089 = vadd.f32 %v4740, %v5088
      %v5090 = vpop.f32.mrf.mxu0
      %v5091 = vadd.f32 %v4742, %v5090
      %v5092 = vpop.f32.mrf.mxu0
      %v5093 = vadd.f32 %v4744, %v5092
      %5094 = vmatprep.mubr.bf16.mxu0 %v4464
      %5095 = vmatmul.mubr.bf16.gmra.mxu0 %v4463
      %v5096 = vpop.f32.mrf.mxu0
      %v5097 = vadd.f32 %v4748, %v5096
      %v5098 = vpop.f32.mrf.mxu0
      %v5099 = vadd.f32 %v4750, %v5098
      %v5100 = vpop.f32.mrf.mxu0
      %v5101 = vadd.f32 %v4752, %v5100
      %v5102 = vpop.f32.mrf.mxu0
      %v5103 = vadd.f32 %v4754, %v5102
      %5104 = vmatprep.mubr.bf16.mxu0 %v4467
      %5105 = vmatmul.mubr.bf16.gmra.mxu0 %v4466
      %v5106 = vpop.f32.mrf.mxu0
      %v5107 = vadd.f32 %v4758, %v5106
      %v5108 = vpop.f32.mrf.mxu0
      %v5109 = vadd.f32 %v4760, %v5108
      %v5110 = vpop.f32.mrf.mxu0
      %v5111 = vadd.f32 %v4762, %v5110
      %v5112 = vpop.f32.mrf.mxu0
      %v5113 = vadd.f32 %v4764, %v5112
      %5114 = vmatprep.mubr.bf16.mxu0 %v4470
      %5115 = vmatmul.mubr.bf16.gmra.mxu0 %v4469
      %v5116 = vpop.f32.mrf.mxu0
      %v5117 = vadd.f32 %v4768, %v5116
      %v5118 = vpop.f32.mrf.mxu0
      %v5119 = vadd.f32 %v4770, %v5118
      %v5120 = vpop.f32.mrf.mxu0
      %v5121 = vadd.f32 %v4772, %v5120
      %v5122 = vpop.f32.mrf.mxu0
      %v5123 = vadd.f32 %v4774, %v5122
      %5124 = vdwg.mxu0
      %5125 = vmatprep.subr.bf16.mxu0 %v4003
      %5126 = vmatpush1.bf16.msra.mxu0 %v4002
      %5127 = vmatprep.subr.bf16.mxu0 %v3999
      %5128 = vmatpush1.bf16.msra.mxu0 %v3998
      %5129 = vmatprep.subr.bf16.mxu0 %v3995
      %5130 = vmatpush1.bf16.msra.mxu0 %v3994
      %5131 = vmatprep.subr.bf16.mxu0 %v3991
      %5132 = vmatpush1.bf16.msra.mxu0 %v3990
      %5133 = vmatprep.subr.bf16.mxu0 %v3987
      %5134 = vmatpush1.bf16.msra.mxu0 %v3986
      %5135 = vmatprep.subr.bf16.mxu0 %v3983
      %5136 = vmatpush1.bf16.msra.mxu0 %v3982
      %5137 = vmatprep.subr.bf16.mxu0 %v3979
      %5138 = vmatpush1.bf16.msra.mxu0 %v3978
      %5139 = vmatprep.subr.bf16.mxu0 %v3975
      %5140 = vmatpush1.bf16.msra.mxu0 %v3974
      %5141 = vmatprep.subr.bf16.mxu0 0
      %5142 = vmatpush2.bf16.msra.mxu0 0
      %5143 = vmatprep.subr.bf16.mxu0 0
      %5144 = vmatpush2.bf16.msra.mxu0 0
      %5145 = vmatprep.subr.bf16.mxu0 0
      %5146 = vmatpush2.bf16.msra.mxu0 0
      %5147 = vmatprep.subr.bf16.mxu0 0
      %5148 = vmatpush2.bf16.msra.mxu0 0
      %5149 = vmatprep.subr.bf16.mxu0 0
      %5150 = vmatpush2.bf16.msra.mxu0 0
      %5151 = vmatprep.subr.bf16.mxu0 0
      %5152 = vmatpush2.bf16.msra.mxu0 0
      %5153 = vmatprep.subr.bf16.mxu0 0
      %5154 = vmatpush2.bf16.msra.mxu0 0
      %5155 = vmatprep.subr.bf16.mxu0 0
      %5156 = vmatpush2.bf16.msra.mxu0 0
      %5157 = vmatprep.mubr.bf16.mxu0 0
      %5158 = vmatmul.mubr.bf16.gmra.mxu0 %v4462
      %v5159 = vpop.f32.mrf.mxu0
      %v5160 = vadd.f32 %v5087, %v5159
      %v5161 = vpop.f32.mrf.mxu0
      %v5162 = vadd.f32 %v5089, %v5161
      %v5163 = vpop.f32.mrf.mxu0
      %v5164 = vadd.f32 %v5091, %v5163
      %v5165 = vpop.f32.mrf.mxu0
      %v5166 = vadd.f32 %v5093, %v5165
      %5167 = vmatprep.mubr.bf16.mxu0 0
      %5168 = vmatmul.mubr.bf16.gmra.mxu0 %v4465
      %v5169 = vpop.f32.mrf.mxu0
      %v5170 = vadd.f32 %v5097, %v5169
      %v5171 = vpop.f32.mrf.mxu0
      %v5172 = vadd.f32 %v5099, %v5171
      %v5173 = vpop.f32.mrf.mxu0
      %v5174 = vadd.f32 %v5101, %v5173
      %v5175 = vpop.f32.mrf.mxu0
      %v5176 = vadd.f32 %v5103, %v5175
      %5177 = vmatprep.mubr.bf16.mxu0 0
      %5178 = vmatmul.mubr.bf16.gmra.mxu0 %v4468
      %v5179 = vpop.f32.mrf.mxu0
      %v5180 = vadd.f32 %v5107, %v5179
      %v5181 = vpop.f32.mrf.mxu0
      %v5182 = vadd.f32 %v5109, %v5181
      %v5183 = vpop.f32.mrf.mxu0
      %v5184 = vadd.f32 %v5111, %v5183
      %v5185 = vpop.f32.mrf.mxu0
      %v5186 = vadd.f32 %v5113, %v5185
      %5187 = vmatprep.mubr.bf16.mxu0 0
      %5188 = vmatmul.mubr.bf16.gmra.mxu0 %v4471
      %v5189 = vpop.f32.mrf.mxu0
      %v5190 = vadd.f32 %v5117, %v5189
      %v5191 = vpop.f32.mrf.mxu0
      %v5192 = vadd.f32 %v5119, %v5191
      %v5193 = vpop.f32.mrf.mxu0
      %v5194 = vadd.f32 %v5121, %v5193
      %v5195 = vpop.f32.mrf.mxu0
      %v5196 = vadd.f32 %v5123, %v5195
      %5197 = vdwg.mxu0
      %5198 = vmatprep.subr.bf16.mxu0 0
      %5199 = vmatpush1.bf16.msra.mxu0 %v3499
      %5200 = vmatprep.subr.bf16.mxu0 0
      %5201 = vmatpush1.bf16.msra.mxu0 %v3494
      %5202 = vmatprep.subr.bf16.mxu0 0
      %5203 = vmatpush1.bf16.msra.mxu0 %v3489
      %5204 = vmatprep.subr.bf16.mxu0 0
      %5205 = vmatpush1.bf16.msra.mxu0 %v3484
      %5206 = vmatprep.subr.bf16.mxu0 0
      %5207 = vmatpush1.bf16.msra.mxu0 %v3479
      %5208 = vmatprep.subr.bf16.mxu0 0
      %5209 = vmatpush1.bf16.msra.mxu0 %v3474
      %5210 = vmatprep.subr.bf16.mxu0 0
      %5211 = vmatpush1.bf16.msra.mxu0 %v3469
      %5212 = vmatprep.subr.bf16.mxu0 0
      %5213 = vmatpush1.bf16.msra.mxu0 %v3464
      %5214 = vmatprep.subr.bf16.mxu0 0
      %5215 = vmatpush2.bf16.msra.mxu0 %v3819
      %5216 = vmatprep.subr.bf16.mxu0 0
      %5217 = vmatpush2.bf16.msra.mxu0 %v3809
      %5218 = vmatprep.subr.bf16.mxu0 0
      %5219 = vmatpush2.bf16.msra.mxu0 %v3799
      %5220 = vmatprep.subr.bf16.mxu0 0
      %5221 = vmatpush2.bf16.msra.mxu0 %v3789
      %5222 = vmatprep.subr.bf16.mxu0 0
      %5223 = vmatpush2.bf16.msra.mxu0 %v3779
      %5224 = vmatprep.subr.bf16.mxu0 0
      %5225 = vmatpush2.bf16.msra.mxu0 %v3769
      %5226 = vmatprep.subr.bf16.mxu0 0
      %5227 = vmatpush2.bf16.msra.mxu0 %v3759
      %5228 = vmatprep.subr.bf16.mxu0 0
      %5229 = vmatpush2.bf16.msra.mxu0 %v3749
      %5230 = vmatprep.mubr.bf16.mxu0 %v4461
      %5231 = vmatmul.mubr.bf16.gmra.mxu0 %v4460
      %v5232 = vpop.f32.mrf.mxu0
      %v5233 = vadd.f32 %v4876, %v5232
      %v5234 = vpop.f32.mrf.mxu0
      %v5235 = vpop.f32.mrf.mxu0
      %v5236 = vadd.f32 %v4879, %v5235
      %v5237 = vpop.f32.mrf.mxu0
      %5238 = vmatprep.mubr.bf16.mxu0 %v4464
      %5239 = vmatmul.mubr.bf16.gmra.mxu0 %v4463
      %v5240 = vpop.f32.mrf.mxu0
      %v5241 = vadd.f32 %v4884, %v5240
      %v5242 = vpop.f32.mrf.mxu0
      %v5243 = vpop.f32.mrf.mxu0
      %v5244 = vadd.f32 %v4887, %v5243
      %v5245 = vpop.f32.mrf.mxu0
      %5246 = vmatprep.mubr.bf16.mxu0 %v4467
      %5247 = vmatmul.mubr.bf16.gmra.mxu0 %v4466
      %v5248 = vpop.f32.mrf.mxu0
      %v5249 = vadd.f32 %v4892, %v5248
      %v5250 = vpop.f32.mrf.mxu0
      %v5251 = vpop.f32.mrf.mxu0
      %v5252 = vadd.f32 %v4895, %v5251
      %v5253 = vpop.f32.mrf.mxu0
      %5254 = vmatprep.mubr.bf16.mxu0 %v4470
      %5255 = vmatmul.mubr.bf16.gmra.mxu0 %v4469
      %v5256 = vpop.f32.mrf.mxu0
      %v5257 = vadd.f32 %v4900, %v5256
      %v5258 = vpop.f32.mrf.mxu0
      %v5259 = vpop.f32.mrf.mxu0
      %v5260 = vadd.f32 %v4903, %v5259
      %v5261 = vpop.f32.mrf.mxu0
      %5262 = vdwg.mxu0
      %5263 = vmatprep.subr.bf16.mxu0 0
      %5264 = vmatpush1.bf16.msra.mxu0 %v3971
      %5265 = vmatprep.subr.bf16.mxu0 0
      %5266 = vmatpush1.bf16.msra.mxu0 %v3961
      %5267 = vmatprep.subr.bf16.mxu0 0
      %5268 = vmatpush1.bf16.msra.mxu0 %v3951
      %5269 = vmatprep.subr.bf16.mxu0 0
      %5270 = vmatpush1.bf16.msra.mxu0 %v3941
      %5271 = vmatprep.subr.bf16.mxu0 0
      %5272 = vmatpush1.bf16.msra.mxu0 %v3931
      %5273 = vmatprep.subr.bf16.mxu0 0
      %5274 = vmatpush1.bf16.msra.mxu0 %v3921
      %5275 = vmatprep.subr.bf16.mxu0 0
      %5276 = vmatpush1.bf16.msra.mxu0 %v3911
      %5277 = vmatprep.subr.bf16.mxu0 0
      %5278 = vmatpush1.bf16.msra.mxu0 %v3901
      %5279 = vmatprep.subr.bf16.mxu0 0
      %5280 = vmatpush2.bf16.msra.mxu0 0
      %5281 = vmatprep.subr.bf16.mxu0 0
      %5282 = vmatpush2.bf16.msra.mxu0 0
      %5283 = vmatprep.subr.bf16.mxu0 0
      %5284 = vmatpush2.bf16.msra.mxu0 0
      %5285 = vmatprep.subr.bf16.mxu0 0
      %5286 = vmatpush2.bf16.msra.mxu0 0
      %5287 = vmatprep.subr.bf16.mxu0 0
      %5288 = vmatpush2.bf16.msra.mxu0 0
      %5289 = vmatprep.subr.bf16.mxu0 0
      %5290 = vmatpush2.bf16.msra.mxu0 0
      %5291 = vmatprep.subr.bf16.mxu0 0
      %5292 = vmatpush2.bf16.msra.mxu0 0
      %5293 = vmatprep.subr.bf16.mxu0 0
      %5294 = vmatpush2.bf16.msra.mxu0 0
      %5295 = vmatprep.mubr.bf16.mxu0 0
      %5296 = vmatmul.mubr.bf16.gmra.mxu0 %v4462
      %v5297 = vpop.f32.mrf.mxu0
      %v5298 = vadd.f32 %v5233, %v5297
      %v5299 = vpop.f32.mrf.mxu0
      %v5300 = vpop.f32.mrf.mxu0
      %v5301 = vadd.f32 %v5236, %v5300
      %v5302 = vpop.f32.mrf.mxu0
      %5303 = vmatprep.mubr.bf16.mxu0 0
      %5304 = vmatmul.mubr.bf16.gmra.mxu0 %v4465
      %v5305 = vpop.f32.mrf.mxu0
      %v5306 = vadd.f32 %v5241, %v5305
      %v5307 = vpop.f32.mrf.mxu0
      %v5308 = vpop.f32.mrf.mxu0
      %v5309 = vadd.f32 %v5244, %v5308
      %v5310 = vpop.f32.mrf.mxu0
      %5311 = vmatprep.mubr.bf16.mxu0 0
      %5312 = vmatmul.mubr.bf16.gmra.mxu0 %v4468
      %v5313 = vpop.f32.mrf.mxu0
      %v5314 = vadd.f32 %v5249, %v5313
      %v5315 = vpop.f32.mrf.mxu0
      %v5316 = vpop.f32.mrf.mxu0
      %v5317 = vadd.f32 %v5252, %v5316
      %v5318 = vpop.f32.mrf.mxu0
      %5319 = vmatprep.mubr.bf16.mxu0 0
      %5320 = vmatmul.mubr.bf16.gmra.mxu0 %v4471
      %v5321 = vpop.f32.mrf.mxu0
      %v5322 = vadd.f32 %v5257, %v5321
      %v5323 = vpop.f32.mrf.mxu0
      %v5324 = vpop.f32.mrf.mxu0
      %v5325 = vadd.f32 %v5260, %v5324
      %v5326 = vpop.f32.mrf.mxu0
      %5327 = vdwg.mxu0
      %v5344 = vunpack.c.l.b16 %v4404
      %v5345 = vunpack.c.h.b16 %v4404
      %v5346 = vunpack.c.l.b16 %v4405
      %v5347 = vunpack.c.l.b16 %v4406
      %v5348 = vunpack.c.h.b16 %v4406
      %v5349 = vunpack.c.l.b16 %v4407
      %v5350 = vunpack.c.l.b16 %v4408
      %v5351 = vunpack.c.h.b16 %v4408
      %v5352 = vunpack.c.l.b16 %v4409
      %v5353 = vunpack.c.l.b16 %v4410
      %v5354 = vunpack.c.h.b16 %v4410
      %v5355 = vunpack.c.l.b16 %v4411
      %v5356 = vunpack.c.l.b16 %v4412
      %v5357 = vunpack.c.h.b16 %v4412
      %v5358 = vunpack.c.l.b16 %v4413
      %v5359 = vunpack.c.l.b16 %v4414
      %v5360 = vunpack.c.h.b16 %v4414
      %v5361 = vunpack.c.l.b16 %v4415
      %v5362 = vunpack.c.l.b16 %v4416
      %v5363 = vunpack.c.h.b16 %v4416
      %v5364 = vunpack.c.l.b16 %v4417
      %v5365 = vunpack.c.l.b16 %v4418
      %v5366 = vunpack.c.h.b16 %v4418
      %v5367 = vunpack.c.l.b16 %v4419
      %v5368 = vpack.c.b16 %v5347, %v5344
      %v5369 = vpack.c.b16 %v5348, %v5345
      %v5370 = vpack.c.b16 %v5349, %v5346
      %v5371 = vpack.c.b16 %v5353, %v5350
      %v5372 = vpack.c.b16 %v5354, %v5351
      %v5373 = vpack.c.b16 %v5355, %v5352
      %v5374 = vpack.c.b16 %v5359, %v5356
      %v5375 = vpack.c.b16 %v5360, %v5357
      %v5376 = vpack.c.b16 %v5361, %v5358
      %v5377 = vpack.c.b16 %v5365, %v5362
      %v5378 = vpack.c.b16 %v5366, %v5363
      %v5379 = vpack.c.b16 %v5367, %v5364
      %5392 = vmatprep.subr.bf16.mxu0 %v3496
      %5393 = vmatpush1.bf16.msra.mxu0 %v3495
      %5394 = vmatprep.subr.bf16.mxu0 %v3491
      %5395 = vmatpush1.bf16.msra.mxu0 %v3490
      %5396 = vmatprep.subr.bf16.mxu0 %v3486
      %5397 = vmatpush1.bf16.msra.mxu0 %v3485
      %5398 = vmatprep.subr.bf16.mxu0 %v3481
      %5399 = vmatpush1.bf16.msra.mxu0 %v3480
      %5400 = vmatprep.subr.bf16.mxu0 %v3476
      %5401 = vmatpush1.bf16.msra.mxu0 %v3475
      %5402 = vmatprep.subr.bf16.mxu0 %v3471
      %5403 = vmatpush1.bf16.msra.mxu0 %v3470
      %5404 = vmatprep.subr.bf16.mxu0 %v3466
      %5405 = vmatpush1.bf16.msra.mxu0 %v3465
      %5406 = vmatprep.subr.bf16.mxu0 %v3461
      %5407 = vmatpush1.bf16.msra.mxu0 %v3460
      %5408 = vmatprep.subr.bf16.mxu0 %v3849
      %5409 = vmatpush2.bf16.msra.mxu0 %v3848
      %5410 = vmatprep.subr.bf16.mxu0 %v3845
      %5411 = vmatpush2.bf16.msra.mxu0 %v3844
      %5412 = vmatprep.subr.bf16.mxu0 %v3841
      %5413 = vmatpush2.bf16.msra.mxu0 %v3840
      %5414 = vmatprep.subr.bf16.mxu0 %v3837
      %5415 = vmatpush2.bf16.msra.mxu0 %v3836
      %5416 = vmatprep.subr.bf16.mxu0 %v3833
      %5417 = vmatpush2.bf16.msra.mxu0 %v3832
      %5418 = vmatprep.subr.bf16.mxu0 %v3829
      %5419 = vmatpush2.bf16.msra.mxu0 %v3828
      %5420 = vmatprep.subr.bf16.mxu0 %v3825
      %5421 = vmatpush2.bf16.msra.mxu0 %v3824
      %5422 = vmatprep.subr.bf16.mxu0 %v3821
      %5423 = vmatpush2.bf16.msra.mxu0 %v3820
      %5424 = vmatprep.mubr.bf16.mxu0 %v5369
      %5425 = vmatmul.mubr.bf16.gmra.mxu0 %v5368
      %v5426 = vpop.f32.mrf.mxu0
      %v5427 = vadd.f32 0.0, %v5426
      %v5428 = vpop.f32.mrf.mxu0
      %v5429 = vadd.f32 0.0, %v5428
      %v5430 = vpop.f32.mrf.mxu0
      %v5431 = vadd.f32 0.0, %v5430
      %v5432 = vpop.f32.mrf.mxu0
      %v5433 = vadd.f32 0.0, %v5432
      %5434 = vmatprep.mubr.bf16.mxu0 %v5372
      %5435 = vmatmul.mubr.bf16.gmra.mxu0 %v5371
      %v5436 = vpop.f32.mrf.mxu0
      %v5437 = vadd.f32 0.0, %v5436
      %v5438 = vpop.f32.mrf.mxu0
      %v5439 = vadd.f32 0.0, %v5438
      %v5440 = vpop.f32.mrf.mxu0
      %v5441 = vadd.f32 0.0, %v5440
      %v5442 = vpop.f32.mrf.mxu0
      %v5443 = vadd.f32 0.0, %v5442
      %5444 = vmatprep.mubr.bf16.mxu0 %v5375
      %5445 = vmatmul.mubr.bf16.gmra.mxu0 %v5374
      %v5446 = vpop.f32.mrf.mxu0
      %v5447 = vadd.f32 0.0, %v5446
      %v5448 = vpop.f32.mrf.mxu0
      %v5449 = vadd.f32 0.0, %v5448
      %v5450 = vpop.f32.mrf.mxu0
      %v5451 = vadd.f32 0.0, %v5450
      %v5452 = vpop.f32.mrf.mxu0
      %v5453 = vadd.f32 0.0, %v5452
      %5454 = vmatprep.mubr.bf16.mxu0 %v5378
      %5455 = vmatmul.mubr.bf16.gmra.mxu0 %v5377
      %v5456 = vpop.f32.mrf.mxu0
      %v5457 = vadd.f32 0.0, %v5456
      %v5458 = vpop.f32.mrf.mxu0
      %v5459 = vadd.f32 0.0, %v5458
      %v5460 = vpop.f32.mrf.mxu0
      %v5461 = vadd.f32 0.0, %v5460
      %v5462 = vpop.f32.mrf.mxu0
      %v5463 = vadd.f32 0.0, %v5462
      %5464 = vdwg.mxu0
      %5465 = vmatprep.subr.bf16.mxu0 %v4001
      %5466 = vmatpush1.bf16.msra.mxu0 %v4000
      %5467 = vmatprep.subr.bf16.mxu0 %v3997
      %5468 = vmatpush1.bf16.msra.mxu0 %v3996
      %5469 = vmatprep.subr.bf16.mxu0 %v3993
      %5470 = vmatpush1.bf16.msra.mxu0 %v3992
      %5471 = vmatprep.subr.bf16.mxu0 %v3989
      %5472 = vmatpush1.bf16.msra.mxu0 %v3988
      %5473 = vmatprep.subr.bf16.mxu0 %v3985
      %5474 = vmatpush1.bf16.msra.mxu0 %v3984
      %5475 = vmatprep.subr.bf16.mxu0 %v3981
      %5476 = vmatpush1.bf16.msra.mxu0 %v3980
      %5477 = vmatprep.subr.bf16.mxu0 %v3977
      %5478 = vmatpush1.bf16.msra.mxu0 %v3976
      %5479 = vmatprep.subr.bf16.mxu0 %v3973
      %5480 = vmatpush1.bf16.msra.mxu0 %v3972
      %5481 = vmatprep.subr.bf16.mxu0 0
      %5482 = vmatpush2.bf16.msra.mxu0 0
      %5483 = vmatprep.subr.bf16.mxu0 0
      %5484 = vmatpush2.bf16.msra.mxu0 0
      %5485 = vmatprep.subr.bf16.mxu0 0
      %5486 = vmatpush2.bf16.msra.mxu0 0
      %5487 = vmatprep.subr.bf16.mxu0 0
      %5488 = vmatpush2.bf16.msra.mxu0 0
      %5489 = vmatprep.subr.bf16.mxu0 0
      %5490 = vmatpush2.bf16.msra.mxu0 0
      %5491 = vmatprep.subr.bf16.mxu0 0
      %5492 = vmatpush2.bf16.msra.mxu0 0
      %5493 = vmatprep.subr.bf16.mxu0 0
      %5494 = vmatpush2.bf16.msra.mxu0 0
      %5495 = vmatprep.subr.bf16.mxu0 0
      %5496 = vmatpush2.bf16.msra.mxu0 0
      %5497 = vmatprep.mubr.bf16.mxu0 0
      %5498 = vmatmul.mubr.bf16.gmra.mxu0 %v5370
      %v5499 = vpop.f32.mrf.mxu0
      %v5500 = vadd.f32 %v5427, %v5499
      %v5501 = vpop.f32.mrf.mxu0
      %v5502 = vadd.f32 %v5429, %v5501
      %v5503 = vpop.f32.mrf.mxu0
      %v5504 = vadd.f32 %v5431, %v5503
      %v5505 = vpop.f32.mrf.mxu0
      %v5506 = vadd.f32 %v5433, %v5505
      %5507 = vmatprep.mubr.bf16.mxu0 0
      %5508 = vmatmul.mubr.bf16.gmra.mxu0 %v5373
      %v5509 = vpop.f32.mrf.mxu0
      %v5510 = vadd.f32 %v5437, %v5509
      %v5511 = vpop.f32.mrf.mxu0
      %v5512 = vadd.f32 %v5439, %v5511
      %v5513 = vpop.f32.mrf.mxu0
      %v5514 = vadd.f32 %v5441, %v5513
      %v5515 = vpop.f32.mrf.mxu0
      %v5516 = vadd.f32 %v5443, %v5515
      %5517 = vmatprep.mubr.bf16.mxu0 0
      %5518 = vmatmul.mubr.bf16.gmra.mxu0 %v5376
      %v5519 = vpop.f32.mrf.mxu0
      %v5520 = vadd.f32 %v5447, %v5519
      %v5521 = vpop.f32.mrf.mxu0
      %v5522 = vadd.f32 %v5449, %v5521
      %v5523 = vpop.f32.mrf.mxu0
      %v5524 = vadd.f32 %v5451, %v5523
      %v5525 = vpop.f32.mrf.mxu0
      %v5526 = vadd.f32 %v5453, %v5525
      %5527 = vmatprep.mubr.bf16.mxu0 0
      %5528 = vmatmul.mubr.bf16.gmra.mxu0 %v5379
      %v5529 = vpop.f32.mrf.mxu0
      %v5530 = vadd.f32 %v5457, %v5529
      %v5531 = vpop.f32.mrf.mxu0
      %v5532 = vadd.f32 %v5459, %v5531
      %v5533 = vpop.f32.mrf.mxu0
      %v5534 = vadd.f32 %v5461, %v5533
      %v5535 = vpop.f32.mrf.mxu0
      %v5536 = vadd.f32 %v5463, %v5535
      %5537 = vdwg.mxu0
      %5538 = vmatprep.subr.bf16.mxu0 %v3498
      %5539 = vmatpush1.bf16.msra.mxu0 %v3497
      %5540 = vmatprep.subr.bf16.mxu0 %v3493
      %5541 = vmatpush1.bf16.msra.mxu0 %v3492
      %5542 = vmatprep.subr.bf16.mxu0 %v3488
      %5543 = vmatpush1.bf16.msra.mxu0 %v3487
      %5544 = vmatprep.subr.bf16.mxu0 %v3483
      %5545 = vmatpush1.bf16.msra.mxu0 %v3482
      %5546 = vmatprep.subr.bf16.mxu0 %v3478
      %5547 = vmatpush1.bf16.msra.mxu0 %v3477
      %5548 = vmatprep.subr.bf16.mxu0 %v3473
      %5549 = vmatpush1.bf16.msra.mxu0 %v3472
      %5550 = vmatprep.subr.bf16.mxu0 %v3468
      %5551 = vmatpush1.bf16.msra.mxu0 %v3467
      %5552 = vmatprep.subr.bf16.mxu0 %v3463
      %5553 = vmatpush1.bf16.msra.mxu0 %v3462
      %5554 = vmatprep.subr.bf16.mxu0 %v3851
      %5555 = vmatpush2.bf16.msra.mxu0 %v3850
      %5556 = vmatprep.subr.bf16.mxu0 %v3847
      %5557 = vmatpush2.bf16.msra.mxu0 %v3846
      %5558 = vmatprep.subr.bf16.mxu0 %v3843
      %5559 = vmatpush2.bf16.msra.mxu0 %v3842
      %5560 = vmatprep.subr.bf16.mxu0 %v3839
      %5561 = vmatpush2.bf16.msra.mxu0 %v3838
      %5562 = vmatprep.subr.bf16.mxu0 %v3835
      %5563 = vmatpush2.bf16.msra.mxu0 %v3834
      %5564 = vmatprep.subr.bf16.mxu0 %v3831
      %5565 = vmatpush2.bf16.msra.mxu0 %v3830
      %5566 = vmatprep.subr.bf16.mxu0 %v3827
      %5567 = vmatpush2.bf16.msra.mxu0 %v3826
      %5568 = vmatprep.subr.bf16.mxu0 %v3823
      %5569 = vmatpush2.bf16.msra.mxu0 %v3822
      %5570 = vmatprep.mubr.bf16.mxu0 %v5369
      %5571 = vmatmul.mubr.bf16.gmra.mxu0 %v5368
      %v5572 = vpop.f32.mrf.mxu0
      %v5573 = vadd.f32 0.0, %v5572
      %v5574 = vpop.f32.mrf.mxu0
      %v5575 = vadd.f32 0.0, %v5574
      %v5576 = vpop.f32.mrf.mxu0
      %v5577 = vadd.f32 0.0, %v5576
      %v5578 = vpop.f32.mrf.mxu0
      %v5579 = vadd.f32 0.0, %v5578
      %5580 = vmatprep.mubr.bf16.mxu0 %v5372
      %5581 = vmatmul.mubr.bf16.gmra.mxu0 %v5371
      %v5582 = vpop.f32.mrf.mxu0
      %v5583 = vadd.f32 0.0, %v5582
      %v5584 = vpop.f32.mrf.mxu0
      %v5585 = vadd.f32 0.0, %v5584
      %v5586 = vpop.f32.mrf.mxu0
      %v5587 = vadd.f32 0.0, %v5586
      %v5588 = vpop.f32.mrf.mxu0
      %v5589 = vadd.f32 0.0, %v5588
      %5590 = vmatprep.mubr.bf16.mxu0 %v5375
      %5591 = vmatmul.mubr.bf16.gmra.mxu0 %v5374
      %v5592 = vpop.f32.mrf.mxu0
      %v5593 = vadd.f32 0.0, %v5592
      %v5594 = vpop.f32.mrf.mxu0
      %v5595 = vadd.f32 0.0, %v5594
      %v5596 = vpop.f32.mrf.mxu0
      %v5597 = vadd.f32 0.0, %v5596
      %v5598 = vpop.f32.mrf.mxu0
      %v5599 = vadd.f32 0.0, %v5598
      %5600 = vmatprep.mubr.bf16.mxu0 %v5378
      %5601 = vmatmul.mubr.bf16.gmra.mxu0 %v5377
      %v5602 = vpop.f32.mrf.mxu0
      %v5603 = vadd.f32 0.0, %v5602
      %v5604 = vpop.f32.mrf.mxu0
      %v5605 = vadd.f32 0.0, %v5604
      %v5606 = vpop.f32.mrf.mxu0
      %v5607 = vadd.f32 0.0, %v5606
      %v5608 = vpop.f32.mrf.mxu0
      %v5609 = vadd.f32 0.0, %v5608
      %5610 = vdwg.mxu0
      %5611 = vmatprep.subr.bf16.mxu0 %v4003
      %5612 = vmatpush1.bf16.msra.mxu0 %v4002
      %5613 = vmatprep.subr.bf16.mxu0 %v3999
      %5614 = vmatpush1.bf16.msra.mxu0 %v3998
      %5615 = vmatprep.subr.bf16.mxu0 %v3995
      %5616 = vmatpush1.bf16.msra.mxu0 %v3994
      %5617 = vmatprep.subr.bf16.mxu0 %v3991
      %5618 = vmatpush1.bf16.msra.mxu0 %v3990
      %5619 = vmatprep.subr.bf16.mxu0 %v3987
      %5620 = vmatpush1.bf16.msra.mxu0 %v3986
      %5621 = vmatprep.subr.bf16.mxu0 %v3983
      %5622 = vmatpush1.bf16.msra.mxu0 %v3982
      %5623 = vmatprep.subr.bf16.mxu0 %v3979
      %5624 = vmatpush1.bf16.msra.mxu0 %v3978
      %5625 = vmatprep.subr.bf16.mxu0 %v3975
      %5626 = vmatpush1.bf16.msra.mxu0 %v3974
      %5627 = vmatprep.subr.bf16.mxu0 0
      %5628 = vmatpush2.bf16.msra.mxu0 0
      %5629 = vmatprep.subr.bf16.mxu0 0
      %5630 = vmatpush2.bf16.msra.mxu0 0
      %5631 = vmatprep.subr.bf16.mxu0 0
      %5632 = vmatpush2.bf16.msra.mxu0 0
      %5633 = vmatprep.subr.bf16.mxu0 0
      %5634 = vmatpush2.bf16.msra.mxu0 0
      %5635 = vmatprep.subr.bf16.mxu0 0
      %5636 = vmatpush2.bf16.msra.mxu0 0
      %5637 = vmatprep.subr.bf16.mxu0 0
      %5638 = vmatpush2.bf16.msra.mxu0 0
      %5639 = vmatprep.subr.bf16.mxu0 0
      %5640 = vmatpush2.bf16.msra.mxu0 0
      %5641 = vmatprep.subr.bf16.mxu0 0
      %5642 = vmatpush2.bf16.msra.mxu0 0
      %5643 = vmatprep.mubr.bf16.mxu0 0
      %5644 = vmatmul.mubr.bf16.gmra.mxu0 %v5370
      %v5645 = vpop.f32.mrf.mxu0
      %v5646 = vadd.f32 %v5573, %v5645
      %v5647 = vpop.f32.mrf.mxu0
      %v5648 = vadd.f32 %v5575, %v5647
      %v5649 = vpop.f32.mrf.mxu0
      %v5650 = vadd.f32 %v5577, %v5649
      %v5651 = vpop.f32.mrf.mxu0
      %v5652 = vadd.f32 %v5579, %v5651
      %5653 = vmatprep.mubr.bf16.mxu0 0
      %5654 = vmatmul.mubr.bf16.gmra.mxu0 %v5373
      %v5655 = vpop.f32.mrf.mxu0
      %v5656 = vadd.f32 %v5583, %v5655
      %v5657 = vpop.f32.mrf.mxu0
      %v5658 = vadd.f32 %v5585, %v5657
      %v5659 = vpop.f32.mrf.mxu0
      %v5660 = vadd.f32 %v5587, %v5659
      %v5661 = vpop.f32.mrf.mxu0
      %v5662 = vadd.f32 %v5589, %v5661
      %5663 = vmatprep.mubr.bf16.mxu0 0
      %5664 = vmatmul.mubr.bf16.gmra.mxu0 %v5376
      %v5665 = vpop.f32.mrf.mxu0
      %v5666 = vadd.f32 %v5593, %v5665
      %v5667 = vpop.f32.mrf.mxu0
      %v5668 = vadd.f32 %v5595, %v5667
      %v5669 = vpop.f32.mrf.mxu0
      %v5670 = vadd.f32 %v5597, %v5669
      %v5671 = vpop.f32.mrf.mxu0
      %v5672 = vadd.f32 %v5599, %v5671
      %5673 = vmatprep.mubr.bf16.mxu0 0
      %5674 = vmatmul.mubr.bf16.gmra.mxu0 %v5379
      %v5675 = vpop.f32.mrf.mxu0
      %v5676 = vadd.f32 %v5603, %v5675
      %v5677 = vpop.f32.mrf.mxu0
      %v5678 = vadd.f32 %v5605, %v5677
      %v5679 = vpop.f32.mrf.mxu0
      %v5680 = vadd.f32 %v5607, %v5679
      %v5681 = vpop.f32.mrf.mxu0
      %v5682 = vadd.f32 %v5609, %v5681
      %5683 = vdwg.mxu0
      %5684 = vmatprep.subr.bf16.mxu0 0
      %5685 = vmatpush1.bf16.msra.mxu0 %v3499
      %5686 = vmatprep.subr.bf16.mxu0 0
      %5687 = vmatpush1.bf16.msra.mxu0 %v3494
      %5688 = vmatprep.subr.bf16.mxu0 0
      %5689 = vmatpush1.bf16.msra.mxu0 %v3489
      %5690 = vmatprep.subr.bf16.mxu0 0
      %5691 = vmatpush1.bf16.msra.mxu0 %v3484
      %5692 = vmatprep.subr.bf16.mxu0 0
      %5693 = vmatpush1.bf16.msra.mxu0 %v3479
      %5694 = vmatprep.subr.bf16.mxu0 0
      %5695 = vmatpush1.bf16.msra.mxu0 %v3474
      %5696 = vmatprep.subr.bf16.mxu0 0
      %5697 = vmatpush1.bf16.msra.mxu0 %v3469
      %5698 = vmatprep.subr.bf16.mxu0 0
      %5699 = vmatpush1.bf16.msra.mxu0 %v3464
      %5700 = vmatprep.subr.bf16.mxu0 0
      %5701 = vmatpush2.bf16.msra.mxu0 %v3819
      %5702 = vmatprep.subr.bf16.mxu0 0
      %5703 = vmatpush2.bf16.msra.mxu0 %v3809
      %5704 = vmatprep.subr.bf16.mxu0 0
      %5705 = vmatpush2.bf16.msra.mxu0 %v3799
      %5706 = vmatprep.subr.bf16.mxu0 0
      %5707 = vmatpush2.bf16.msra.mxu0 %v3789
      %5708 = vmatprep.subr.bf16.mxu0 0
      %5709 = vmatpush2.bf16.msra.mxu0 %v3779
      %5710 = vmatprep.subr.bf16.mxu0 0
      %5711 = vmatpush2.bf16.msra.mxu0 %v3769
      %5712 = vmatprep.subr.bf16.mxu0 0
      %5713 = vmatpush2.bf16.msra.mxu0 %v3759
      %5714 = vmatprep.subr.bf16.mxu0 0
      %5715 = vmatpush2.bf16.msra.mxu0 %v3749
      %5716 = vmatprep.mubr.bf16.mxu0 %v5369
      %5717 = vmatmul.mubr.bf16.gmra.mxu0 %v5368
      %v5718 = vpop.f32.mrf.mxu0
      %v5719 = vadd.f32 0.0, %v5718
      %v5720 = vpop.f32.mrf.mxu0
      %v5721 = vpop.f32.mrf.mxu0
      %v5722 = vadd.f32 0.0, %v5721
      %v5723 = vpop.f32.mrf.mxu0
      %5724 = vmatprep.mubr.bf16.mxu0 %v5372
      %5725 = vmatmul.mubr.bf16.gmra.mxu0 %v5371
      %v5726 = vpop.f32.mrf.mxu0
      %v5727 = vadd.f32 0.0, %v5726
      %v5728 = vpop.f32.mrf.mxu0
      %v5729 = vpop.f32.mrf.mxu0
      %v5730 = vadd.f32 0.0, %v5729
      %v5731 = vpop.f32.mrf.mxu0
      %5732 = vmatprep.mubr.bf16.mxu0 %v5375
      %5733 = vmatmul.mubr.bf16.gmra.mxu0 %v5374
      %v5734 = vpop.f32.mrf.mxu0
      %v5735 = vadd.f32 0.0, %v5734
      %v5736 = vpop.f32.mrf.mxu0
      %v5737 = vpop.f32.mrf.mxu0
      %v5738 = vadd.f32 0.0, %v5737
      %v5739 = vpop.f32.mrf.mxu0
      %5740 = vmatprep.mubr.bf16.mxu0 %v5378
      %5741 = vmatmul.mubr.bf16.gmra.mxu0 %v5377
      %v5742 = vpop.f32.mrf.mxu0
      %v5743 = vadd.f32 0.0, %v5742
      %v5744 = vpop.f32.mrf.mxu0
      %v5745 = vpop.f32.mrf.mxu0
      %v5746 = vadd.f32 0.0, %v5745
      %v5747 = vpop.f32.mrf.mxu0
      %5748 = vdwg.mxu0
      %5749 = vmatprep.subr.bf16.mxu0 0
      %5750 = vmatpush1.bf16.msra.mxu0 %v3971
      %5751 = vmatprep.subr.bf16.mxu0 0
      %5752 = vmatpush1.bf16.msra.mxu0 %v3961
      %5753 = vmatprep.subr.bf16.mxu0 0
      %5754 = vmatpush1.bf16.msra.mxu0 %v3951
      %5755 = vmatprep.subr.bf16.mxu0 0
      %5756 = vmatpush1.bf16.msra.mxu0 %v3941
      %5757 = vmatprep.subr.bf16.mxu0 0
      %5758 = vmatpush1.bf16.msra.mxu0 %v3931
      %5759 = vmatprep.subr.bf16.mxu0 0
      %5760 = vmatpush1.bf16.msra.mxu0 %v3921
      %5761 = vmatprep.subr.bf16.mxu0 0
      %5762 = vmatpush1.bf16.msra.mxu0 %v3911
      %5763 = vmatprep.subr.bf16.mxu0 0
      %5764 = vmatpush1.bf16.msra.mxu0 %v3901
      %5765 = vmatprep.subr.bf16.mxu0 0
      %5766 = vmatpush2.bf16.msra.mxu0 0
      %5767 = vmatprep.subr.bf16.mxu0 0
      %5768 = vmatpush2.bf16.msra.mxu0 0
      %5769 = vmatprep.subr.bf16.mxu0 0
      %5770 = vmatpush2.bf16.msra.mxu0 0
      %5771 = vmatprep.subr.bf16.mxu0 0
      %5772 = vmatpush2.bf16.msra.mxu0 0
      %5773 = vmatprep.subr.bf16.mxu0 0
      %5774 = vmatpush2.bf16.msra.mxu0 0
      %5775 = vmatprep.subr.bf16.mxu0 0
      %5776 = vmatpush2.bf16.msra.mxu0 0
      %5777 = vmatprep.subr.bf16.mxu0 0
      %5778 = vmatpush2.bf16.msra.mxu0 0
      %5779 = vmatprep.subr.bf16.mxu0 0
      %5780 = vmatpush2.bf16.msra.mxu0 0
      %5781 = vmatprep.mubr.bf16.mxu0 0
      %5782 = vmatmul.mubr.bf16.gmra.mxu0 %v5370
      %v5783 = vpop.f32.mrf.mxu0
      %v5784 = vadd.f32 %v5719, %v5783
      %v5785 = vpop.f32.mrf.mxu0
      %v5786 = vpop.f32.mrf.mxu0
      %v5787 = vadd.f32 %v5722, %v5786
      %v5788 = vpop.f32.mrf.mxu0
      %5789 = vmatprep.mubr.bf16.mxu0 0
      %5790 = vmatmul.mubr.bf16.gmra.mxu0 %v5373
      %v5791 = vpop.f32.mrf.mxu0
      %v5792 = vadd.f32 %v5727, %v5791
      %v5793 = vpop.f32.mrf.mxu0
      %v5794 = vpop.f32.mrf.mxu0
      %v5795 = vadd.f32 %v5730, %v5794
      %v5796 = vpop.f32.mrf.mxu0
      %5797 = vmatprep.mubr.bf16.mxu0 0
      %5798 = vmatmul.mubr.bf16.gmra.mxu0 %v5376
      %v5799 = vpop.f32.mrf.mxu0
      %v5800 = vadd.f32 %v5735, %v5799
      %v5801 = vpop.f32.mrf.mxu0
      %v5802 = vpop.f32.mrf.mxu0
      %v5803 = vadd.f32 %v5738, %v5802
      %v5804 = vpop.f32.mrf.mxu0
      %5805 = vmatprep.mubr.bf16.mxu0 0
      %5806 = vmatmul.mubr.bf16.gmra.mxu0 %v5379
      %v5807 = vpop.f32.mrf.mxu0
      %v5808 = vadd.f32 %v5743, %v5807
      %v5809 = vpop.f32.mrf.mxu0
      %v5810 = vpop.f32.mrf.mxu0
      %v5811 = vadd.f32 %v5746, %v5810
      %v5812 = vpop.f32.mrf.mxu0
      %5813 = vdwg.mxu0
      %v5814 = vadd.f32 %v5014, %v5500
      %v5815 = vadd.f32 %v5016, %v5502
      %v5816 = vadd.f32 %v5160, %v5646
      %v5817 = vadd.f32 %v5162, %v5648
      %v5818 = vadd.f32 %v5298, %v5784
      %v5819 = vadd.f32 %v5018, %v5504
      %v5820 = vadd.f32 %v5020, %v5506
      %v5821 = vadd.f32 %v5164, %v5650
      %v5822 = vadd.f32 %v5166, %v5652
      %v5823 = vadd.f32 %v5301, %v5787
      %v5824 = vadd.f32 %v5024, %v5510
      %v5825 = vadd.f32 %v5026, %v5512
      %v5826 = vadd.f32 %v5170, %v5656
      %v5827 = vadd.f32 %v5172, %v5658
      %v5828 = vadd.f32 %v5306, %v5792
      %v5829 = vadd.f32 %v5028, %v5514
      %v5830 = vadd.f32 %v5030, %v5516
      %v5831 = vadd.f32 %v5174, %v5660
      %v5832 = vadd.f32 %v5176, %v5662
      %v5833 = vadd.f32 %v5309, %v5795
      %v5834 = vadd.f32 %v5034, %v5520
      %v5835 = vadd.f32 %v5036, %v5522
      %v5836 = vadd.f32 %v5180, %v5666
      %v5837 = vadd.f32 %v5182, %v5668
      %v5838 = vadd.f32 %v5314, %v5800
      %v5839 = vadd.f32 %v5038, %v5524
      %v5840 = vadd.f32 %v5040, %v5526
      %v5841 = vadd.f32 %v5184, %v5670
      %v5842 = vadd.f32 %v5186, %v5672
      %v5843 = vadd.f32 %v5317, %v5803
      %v5844 = vadd.f32 %v5044, %v5530
      %v5845 = vadd.f32 %v5046, %v5532
      %v5846 = vadd.f32 %v5190, %v5676
      %v5847 = vadd.f32 %v5192, %v5678
      %v5848 = vadd.f32 %v5322, %v5808
      %v5849 = vadd.f32 %v5048, %v5534
      %v5850 = vadd.f32 %v5050, %v5536
      %v5851 = vadd.f32 %v5194, %v5680
      %v5852 = vadd.f32 %v5196, %v5682
      %v5853 = vadd.f32 %v5325, %v5811
      %v5854 = vld [vmem:[%s8] sm:$0xff]
      %v5855 = vld [vmem:[%s8 + $0x8] sm:$0xff]
      %v5856 = vld [vmem:[%s8 + $0x10] sm:$0xff]
      %v5857 = vld [vmem:[%s8 + $0x18] sm:$0xff]
      %v5858 = vld [vmem:[%s8 + $0x20] sm:$0xff]
      %v5859 = vld [vmem:[%s8 + $0x28] sm:$0xff]
      %v5860 = vld [vmem:[%s8 + $0x30] sm:$0xff]
      %v5861 = vld [vmem:[%s8 + $0x38] sm:$0xff]
      %5863 = vset.pattern.permute.xlu0 0
      %5864 = vperm.xlu0 %5863, %v5854
      %v5865 = vpop.permute.xlu0 %5864
      %5868 = vset.pattern.permute.xlu0 0
      %5869 = vperm.xlu0 %5868, %v5855
      %v5870 = vpop.permute.xlu0 %5869
      %5873 = vset.pattern.permute.xlu0 0
      %5874 = vperm.xlu0 %5873, %v5856
      %v5875 = vpop.permute.xlu0 %5874
      %5878 = vset.pattern.permute.xlu0 0
      %5879 = vperm.xlu0 %5878, %v5857
      %v5880 = vpop.permute.xlu0 %5879
      %5883 = vset.pattern.permute.xlu0 0
      %5884 = vperm.xlu0 %5883, %v5858
      %v5885 = vpop.permute.xlu0 %5884
      %5888 = vset.pattern.permute.xlu0 0
      %5889 = vperm.xlu0 %5888, %v5859
      %v5890 = vpop.permute.xlu0 %5889
      %5893 = vset.pattern.permute.xlu0 0
      %5894 = vperm.xlu0 %5893, %v5860
      %v5895 = vpop.permute.xlu0 %5894
      %5898 = vset.pattern.permute.xlu0 0
      %5899 = vperm.xlu0 %5898, %v5861
      %v5900 = vpop.permute.xlu0 %5899
      %v5902 = vadd.f32 %v5814, %v5865
      %v5903 = vadd.f32 %v5815, %v5865
      %v5904 = vadd.f32 %v5816, %v5865
      %v5905 = vadd.f32 %v5817, %v5865
      %v5906 = vadd.f32 %v5818, %v5865
      %v5907 = vadd.f32 %v5819, %v5870
      %v5908 = vadd.f32 %v5820, %v5870
      %v5909 = vadd.f32 %v5821, %v5870
      %v5910 = vadd.f32 %v5822, %v5870
      %v5911 = vadd.f32 %v5823, %v5870
      %v5912 = vadd.f32 %v5824, %v5875
      %v5913 = vadd.f32 %v5825, %v5875
      %v5914 = vadd.f32 %v5826, %v5875
      %v5915 = vadd.f32 %v5827, %v5875
      %v5916 = vadd.f32 %v5828, %v5875
      %v5917 = vadd.f32 %v5829, %v5880
      %v5918 = vadd.f32 %v5830, %v5880
      %v5919 = vadd.f32 %v5831, %v5880
      %v5920 = vadd.f32 %v5832, %v5880
      %v5921 = vadd.f32 %v5833, %v5880
      %v5922 = vadd.f32 %v5834, %v5885
      %v5923 = vadd.f32 %v5835, %v5885
      %v5924 = vadd.f32 %v5836, %v5885
      %v5925 = vadd.f32 %v5837, %v5885
      %v5926 = vadd.f32 %v5838, %v5885
      %v5927 = vadd.f32 %v5839, %v5890
      %v5928 = vadd.f32 %v5840, %v5890
      %v5929 = vadd.f32 %v5841, %v5890
      %v5930 = vadd.f32 %v5842, %v5890
      %v5931 = vadd.f32 %v5843, %v5890
      %v5932 = vadd.f32 %v5844, %v5895
      %v5933 = vadd.f32 %v5845, %v5895
      %v5934 = vadd.f32 %v5846, %v5895
      %v5935 = vadd.f32 %v5847, %v5895
      %v5936 = vadd.f32 %v5848, %v5895
      %v5937 = vadd.f32 %v5849, %v5900
      %v5938 = vadd.f32 %v5850, %v5900
      %v5939 = vadd.f32 %v5851, %v5900
      %v5940 = vadd.f32 %v5852, %v5900
      %v5941 = vadd.f32 %v5853, %v5900
      %v5942 = vmax.f32 %v5902, 0.0
      %v5943 = vmax.f32 %v5903, 0.0
      %v5944 = vmax.f32 %v5904, 0.0
      %v5945 = vmax.f32 %v5905, 0.0
      %v5946 = vmax.f32 %v5906, 0.0
      %v5947 = vmax.f32 %v5907, 0.0
      %v5948 = vmax.f32 %v5908, 0.0
      %v5949 = vmax.f32 %v5909, 0.0
      %v5950 = vmax.f32 %v5910, 0.0
      %v5951 = vmax.f32 %v5911, 0.0
      %v5952 = vmax.f32 %v5912, 0.0
      %v5953 = vmax.f32 %v5913, 0.0
      %v5954 = vmax.f32 %v5914, 0.0
      %v5955 = vmax.f32 %v5915, 0.0
      %v5956 = vmax.f32 %v5916, 0.0
      %v5957 = vmax.f32 %v5917, 0.0
      %v5958 = vmax.f32 %v5918, 0.0
      %v5959 = vmax.f32 %v5919, 0.0
      %v5960 = vmax.f32 %v5920, 0.0
      %v5961 = vmax.f32 %v5921, 0.0
      %v5962 = vmax.f32 %v5922, 0.0
      %v5963 = vmax.f32 %v5923, 0.0
      %v5964 = vmax.f32 %v5924, 0.0
      %v5965 = vmax.f32 %v5925, 0.0
      %v5966 = vmax.f32 %v5926, 0.0
      %v5967 = vmax.f32 %v5927, 0.0
      %v5968 = vmax.f32 %v5928, 0.0
      %v5969 = vmax.f32 %v5929, 0.0
      %v5970 = vmax.f32 %v5930, 0.0
      %v5971 = vmax.f32 %v5931, 0.0
      %v5972 = vmax.f32 %v5932, 0.0
      %v5973 = vmax.f32 %v5933, 0.0
      %v5974 = vmax.f32 %v5934, 0.0
      %v5975 = vmax.f32 %v5935, 0.0
      %v5976 = vmax.f32 %v5936, 0.0
      %v5977 = vmax.f32 %v5937, 0.0
      %v5978 = vmax.f32 %v5938, 0.0
      %v5979 = vmax.f32 %v5939, 0.0
      %v5980 = vmax.f32 %v5940, 0.0
      %v5981 = vmax.f32 %v5941, 0.0
      %s5982 = ssub.s32 %s420, 1
      %v5983 = vstv %s5982
      %v5984 = vadd.s32 %v5983, %v1276
      %v5985 = vadd.s32 %v5983, %v1277
      %v5986 = vadd.s32 %v5983, %v1278
      %v5987 = vadd.s32 %v5983, %v1279
      %v5988 = vadd.s32 %v5983, %v1280
      %vm5989 = vcmp.ge.s32.totalorder %v5984, 0
      %vm5990 = vcmp.ge.s32.totalorder %v5985, 0
      %vm5991 = vcmp.ge.s32.totalorder %v5986, 0
      %vm5992 = vcmp.ge.s32.totalorder %v5987, 0
      %vm5993 = vcmp.ge.s32.totalorder %v5988, 0
      %vm5994 = vcmp.lt.s32.totalorder %v5984, 1500
      %vm5995 = vcmp.lt.s32.totalorder %v5985, 1500
      %vm5996 = vcmp.lt.s32.totalorder %v5986, 1500
      %vm5997 = vcmp.lt.s32.totalorder %v5987, 1500
      %vm5998 = vcmp.lt.s32.totalorder %v5988, 1500
      %vm5999 = vmand %vm5989, %vm5994
      %vm6000 = vmand %vm5990, %vm5995
      %vm6001 = vmand %vm5991, %vm5996
      %vm6002 = vmand %vm5992, %vm5997
      %vm6003 = vmand %vm5993, %vm5998
      %v6004 = vsel %vm5999, 1, 0
      %v6005 = vsel %vm6000, 1, 0
      %v6006 = vsel %vm6001, 1, 0
      %v6007 = vsel %vm6002, 1, 0
      %v6008 = vsel %vm6003, 1, 0
      %vm6009 = vcmp.eq.s32.totalorder %v6004, 1
      %vm6010 = vcmp.eq.s32.totalorder %v6005, 1
      %vm6011 = vcmp.eq.s32.totalorder %v6006, 1
      %vm6012 = vcmp.eq.s32.totalorder %v6007, 1
      %vm6013 = vcmp.eq.s32.totalorder %v6008, 1
      %v6014 = vsel %vm6009, %v5942, 0.0
      %v6015 = vsel %vm6010, %v5943, 0.0
      %v6016 = vsel %vm6011, %v5944, 0.0
      %v6017 = vsel %vm6012, %v5945, 0.0
      %v6018 = vsel %vm6013, %v5946, 0.0
      %v6019 = vsel %vm6009, %v5947, 0.0
      %v6020 = vsel %vm6010, %v5948, 0.0
      %v6021 = vsel %vm6011, %v5949, 0.0
      %v6022 = vsel %vm6012, %v5950, 0.0
      %v6023 = vsel %vm6013, %v5951, 0.0
      %v6024 = vsel %vm6009, %v5952, 0.0
      %v6025 = vsel %vm6010, %v5953, 0.0
      %v6026 = vsel %vm6011, %v5954, 0.0
      %v6027 = vsel %vm6012, %v5955, 0.0
      %v6028 = vsel %vm6013, %v5956, 0.0
      %v6029 = vsel %vm6009, %v5957, 0.0
      %v6030 = vsel %vm6010, %v5958, 0.0
      %v6031 = vsel %vm6011, %v5959, 0.0
      %v6032 = vsel %vm6012, %v5960, 0.0
      %v6033 = vsel %vm6013, %v5961, 0.0
      %v6034 = vsel %vm6009, %v5962, 0.0
      %v6035 = vsel %vm6010, %v5963, 0.0
      %v6036 = vsel %vm6011, %v5964, 0.0
      %v6037 = vsel %vm6012, %v5965, 0.0
      %v6038 = vsel %vm6013, %v5966, 0.0
      %v6039 = vsel %vm6009, %v5967, 0.0
      %v6040 = vsel %vm6010, %v5968, 0.0
      %v6041 = vsel %vm6011, %v5969, 0.0
      %v6042 = vsel %vm6012, %v5970, 0.0
      %v6043 = vsel %vm6013, %v5971, 0.0
      %v6044 = vsel %vm6009, %v5972, 0.0
      %v6045 = vsel %vm6010, %v5973, 0.0
      %v6046 = vsel %vm6011, %v5974, 0.0
      %v6047 = vsel %vm6012, %v5975, 0.0
      %v6048 = vsel %vm6013, %v5976, 0.0
      %v6049 = vsel %vm6009, %v5977, 0.0
      %v6050 = vsel %vm6010, %v5978, 0.0
      %v6051 = vsel %vm6011, %v5979, 0.0
      %v6052 = vsel %vm6012, %v5980, 0.0
      %v6053 = vsel %vm6013, %v5981, 0.0
      %v6054 = vld [vmem:[%s9] sm:$0xff]
      %v6055 = vld [vmem:[%s9 + $0x8] sm:$0xff]
      %v6056 = vld [vmem:[%s9 + $0x10] sm:$0xff]
      %v6057 = vld [vmem:[%s9 + $0x18] sm:$0xff]
      %v6058 = vld [vmem:[%s9 + $0x20] sm:$0xff]
      %v6059 = vld [vmem:[%s9 + $0x28] sm:$0xff]
      %v6060 = vld [vmem:[%s9 + $0x30] sm:$0xff]
      %v6061 = vld [vmem:[%s9 + $0x38] sm:$0xff]
      %6063 = vset.pattern.permute.xlu0 0
      %6064 = vperm.xlu0 %6063, %v6054
      %v6065 = vpop.permute.xlu0 %6064
      %6068 = vset.pattern.permute.xlu0 0
      %6069 = vperm.xlu0 %6068, %v6055
      %v6070 = vpop.permute.xlu0 %6069
      %6073 = vset.pattern.permute.xlu0 0
      %6074 = vperm.xlu0 %6073, %v6056
      %v6075 = vpop.permute.xlu0 %6074
      %6078 = vset.pattern.permute.xlu0 0
      %6079 = vperm.xlu0 %6078, %v6057
      %v6080 = vpop.permute.xlu0 %6079
      %6083 = vset.pattern.permute.xlu0 0
      %6084 = vperm.xlu0 %6083, %v6058
      %v6085 = vpop.permute.xlu0 %6084
      %6088 = vset.pattern.permute.xlu0 0
      %6089 = vperm.xlu0 %6088, %v6059
      %v6090 = vpop.permute.xlu0 %6089
      %6093 = vset.pattern.permute.xlu0 0
      %6094 = vperm.xlu0 %6093, %v6060
      %v6095 = vpop.permute.xlu0 %6094
      %6098 = vset.pattern.permute.xlu0 0
      %6099 = vperm.xlu0 %6098, %v6061
      %v6100 = vpop.permute.xlu0 %6099
      %v6102 = vmul.f32 %v6065, %v6014
      %v6103 = vmul.f32 %v6065, %v6015
      %v6104 = vmul.f32 %v6065, %v6016
      %v6105 = vmul.f32 %v6065, %v6017
      %v6106 = vmul.f32 %v6070, %v6019
      %v6107 = vmul.f32 %v6070, %v6020
      %v6108 = vmul.f32 %v6070, %v6021
      %v6109 = vmul.f32 %v6070, %v6022
      %v6110 = vmul.f32 %v6075, %v6024
      %v6111 = vmul.f32 %v6075, %v6025
      %v6112 = vmul.f32 %v6075, %v6026
      %v6113 = vmul.f32 %v6075, %v6027
      %v6114 = vmul.f32 %v6080, %v6029
      %v6115 = vmul.f32 %v6080, %v6030
      %v6116 = vmul.f32 %v6080, %v6031
      %v6117 = vmul.f32 %v6080, %v6032
      %v6118 = vmul.f32 %v6085, %v6034
      %v6119 = vmul.f32 %v6085, %v6035
      %v6120 = vmul.f32 %v6085, %v6036
      %v6121 = vmul.f32 %v6085, %v6037
      %v6122 = vmul.f32 %v6090, %v6039
      %v6123 = vmul.f32 %v6090, %v6040
      %v6124 = vmul.f32 %v6090, %v6041
      %v6125 = vmul.f32 %v6090, %v6042
      %v6126 = vmul.f32 %v6095, %v6044
      %v6127 = vmul.f32 %v6095, %v6045
      %v6128 = vmul.f32 %v6095, %v6046
      %v6129 = vmul.f32 %v6095, %v6047
      %v6130 = vmul.f32 %v6100, %v6049
      %v6131 = vmul.f32 %v6100, %v6050
      %v6132 = vmul.f32 %v6100, %v6051
      %v6133 = vmul.f32 %v6100, %v6052
      %6134 = vset.pattern.permute.xlu0 1
      %6135 = vperm.xlu0 %6134, %v6054
      %v6136 = vpop.permute.xlu0 %6135
      %6138 = vset.pattern.permute.xlu0 1
      %6139 = vperm.xlu0 %6138, %v6055
      %v6140 = vpop.permute.xlu0 %6139
      %6142 = vset.pattern.permute.xlu0 1
      %6143 = vperm.xlu0 %6142, %v6056
      %v6144 = vpop.permute.xlu0 %6143
      %6146 = vset.pattern.permute.xlu0 1
      %6147 = vperm.xlu0 %6146, %v6057
      %v6148 = vpop.permute.xlu0 %6147
      %6150 = vset.pattern.permute.xlu0 1
      %6151 = vperm.xlu0 %6150, %v6058
      %v6152 = vpop.permute.xlu0 %6151
      %6154 = vset.pattern.permute.xlu0 1
      %6155 = vperm.xlu0 %6154, %v6059
      %v6156 = vpop.permute.xlu0 %6155
      %6158 = vset.pattern.permute.xlu0 1
      %6159 = vperm.xlu0 %6158, %v6060
      %v6160 = vpop.permute.xlu0 %6159
      %6162 = vset.pattern.permute.xlu0 1
      %6163 = vperm.xlu0 %6162, %v6061
      %v6164 = vpop.permute.xlu0 %6163
      %v6166 = vmul.f32 %v6136, %v6014
      %v6167 = vmul.f32 %v6136, %v6015
      %v6168 = vmul.f32 %v6136, %v6016
      %v6169 = vmul.f32 %v6136, %v6017
      %v6170 = vmul.f32 %v6136, %v6018
      %v6171 = vmul.f32 %v6140, %v6019
      %v6172 = vmul.f32 %v6140, %v6020
      %v6173 = vmul.f32 %v6140, %v6021
      %v6174 = vmul.f32 %v6140, %v6022
      %v6175 = vmul.f32 %v6140, %v6023
      %v6176 = vmul.f32 %v6144, %v6024
      %v6177 = vmul.f32 %v6144, %v6025
      %v6178 = vmul.f32 %v6144, %v6026
      %v6179 = vmul.f32 %v6144, %v6027
      %v6180 = vmul.f32 %v6144, %v6028
      %v6181 = vmul.f32 %v6148, %v6029
      %v6182 = vmul.f32 %v6148, %v6030
      %v6183 = vmul.f32 %v6148, %v6031
      %v6184 = vmul.f32 %v6148, %v6032
      %v6185 = vmul.f32 %v6148, %v6033
      %v6186 = vmul.f32 %v6152, %v6034
      %v6187 = vmul.f32 %v6152, %v6035
      %v6188 = vmul.f32 %v6152, %v6036
      %v6189 = vmul.f32 %v6152, %v6037
      %v6190 = vmul.f32 %v6152, %v6038
      %v6191 = vmul.f32 %v6156, %v6039
      %v6192 = vmul.f32 %v6156, %v6040
      %v6193 = vmul.f32 %v6156, %v6041
      %v6194 = vmul.f32 %v6156, %v6042
      %v6195 = vmul.f32 %v6156, %v6043
      %v6196 = vmul.f32 %v6160, %v6044
      %v6197 = vmul.f32 %v6160, %v6045
      %v6198 = vmul.f32 %v6160, %v6046
      %v6199 = vmul.f32 %v6160, %v6047
      %v6200 = vmul.f32 %v6160, %v6048
      %v6201 = vmul.f32 %v6164, %v6049
      %v6202 = vmul.f32 %v6164, %v6050
      %v6203 = vmul.f32 %v6164, %v6051
      %v6204 = vmul.f32 %v6164, %v6052
      %v6205 = vmul.f32 %v6164, %v6053
      %6246 = vrot.lane.b32.xlu0 %v6166, 127
      %v6247 = vpop.permute.xlu0 %6246
      %6248 = vrot.lane.b32.xlu0 %v6167, 127
      %v6249 = vpop.permute.xlu0 %6248
      %6250 = vrot.lane.b32.xlu0 %v6168, 127
      %v6251 = vpop.permute.xlu0 %6250
      %6252 = vrot.lane.b32.xlu0 %v6169, 127
      %v6253 = vpop.permute.xlu0 %6252
      %6254 = vrot.lane.b32.xlu0 %v6170, 127
      %v6255 = vpop.permute.xlu0 %6254
      %6256 = vrot.lane.b32.xlu0 %v6171, 127
      %v6257 = vpop.permute.xlu0 %6256
      %6258 = vrot.lane.b32.xlu0 %v6172, 127
      %v6259 = vpop.permute.xlu0 %6258
      %6260 = vrot.lane.b32.xlu0 %v6173, 127
      %v6261 = vpop.permute.xlu0 %6260
      %6262 = vrot.lane.b32.xlu0 %v6174, 127
      %v6263 = vpop.permute.xlu0 %6262
      %6264 = vrot.lane.b32.xlu0 %v6175, 127
      %v6265 = vpop.permute.xlu0 %6264
      %6266 = vrot.lane.b32.xlu0 %v6176, 127
      %v6267 = vpop.permute.xlu0 %6266
      %6268 = vrot.lane.b32.xlu0 %v6177, 127
      %v6269 = vpop.permute.xlu0 %6268
      %6270 = vrot.lane.b32.xlu0 %v6178, 127
      %v6271 = vpop.permute.xlu0 %6270
      %6272 = vrot.lane.b32.xlu0 %v6179, 127
      %v6273 = vpop.permute.xlu0 %6272
      %6274 = vrot.lane.b32.xlu0 %v6180, 127
      %v6275 = vpop.permute.xlu0 %6274
      %6276 = vrot.lane.b32.xlu0 %v6181, 127
      %v6277 = vpop.permute.xlu0 %6276
      %6278 = vrot.lane.b32.xlu0 %v6182, 127
      %v6279 = vpop.permute.xlu0 %6278
      %6280 = vrot.lane.b32.xlu0 %v6183, 127
      %v6281 = vpop.permute.xlu0 %6280
      %6282 = vrot.lane.b32.xlu0 %v6184, 127
      %v6283 = vpop.permute.xlu0 %6282
      %6284 = vrot.lane.b32.xlu0 %v6185, 127
      %v6285 = vpop.permute.xlu0 %6284
      %6286 = vrot.lane.b32.xlu0 %v6186, 127
      %v6287 = vpop.permute.xlu0 %6286
      %6288 = vrot.lane.b32.xlu0 %v6187, 127
      %v6289 = vpop.permute.xlu0 %6288
      %6290 = vrot.lane.b32.xlu0 %v6188, 127
      %v6291 = vpop.permute.xlu0 %6290
      %6292 = vrot.lane.b32.xlu0 %v6189, 127
      %v6293 = vpop.permute.xlu0 %6292
      %6294 = vrot.lane.b32.xlu0 %v6190, 127
      %v6295 = vpop.permute.xlu0 %6294
      %6296 = vrot.lane.b32.xlu0 %v6191, 127
      %v6297 = vpop.permute.xlu0 %6296
      %6298 = vrot.lane.b32.xlu0 %v6192, 127
      %v6299 = vpop.permute.xlu0 %6298
      %6300 = vrot.lane.b32.xlu0 %v6193, 127
      %v6301 = vpop.permute.xlu0 %6300
      %6302 = vrot.lane.b32.xlu0 %v6194, 127
      %v6303 = vpop.permute.xlu0 %6302
      %6304 = vrot.lane.b32.xlu0 %v6195, 127
      %v6305 = vpop.permute.xlu0 %6304
      %6306 = vrot.lane.b32.xlu0 %v6196, 127
      %v6307 = vpop.permute.xlu0 %6306
      %6308 = vrot.lane.b32.xlu0 %v6197, 127
      %v6309 = vpop.permute.xlu0 %6308
      %6310 = vrot.lane.b32.xlu0 %v6198, 127
      %v6311 = vpop.permute.xlu0 %6310
      %6312 = vrot.lane.b32.xlu0 %v6199, 127
      %v6313 = vpop.permute.xlu0 %6312
      %6314 = vrot.lane.b32.xlu0 %v6200, 127
      %v6315 = vpop.permute.xlu0 %6314
      %6316 = vrot.lane.b32.xlu0 %v6201, 127
      %v6317 = vpop.permute.xlu0 %6316
      %6318 = vrot.lane.b32.xlu0 %v6202, 127
      %v6319 = vpop.permute.xlu0 %6318
      %6320 = vrot.lane.b32.xlu0 %v6203, 127
      %v6321 = vpop.permute.xlu0 %6320
      %6322 = vrot.lane.b32.xlu0 %v6204, 127
      %v6323 = vpop.permute.xlu0 %6322
      %6324 = vrot.lane.b32.xlu0 %v6205, 127
      %v6325 = vpop.permute.xlu0 %6324
      %v6326 = vsel %vm728, %v6247, %v6249
      %v6327 = vsel %vm728, %v6249, %v6251
      %v6328 = vsel %vm728, %v6251, %v6253
      %v6329 = vsel %vm728, %v6253, %v6255
      %v6330 = vsel %vm728, %v6257, %v6259
      %v6331 = vsel %vm728, %v6259, %v6261
      %v6332 = vsel %vm728, %v6261, %v6263
      %v6333 = vsel %vm728, %v6263, %v6265
      %v6334 = vsel %vm728, %v6267, %v6269
      %v6335 = vsel %vm728, %v6269, %v6271
      %v6336 = vsel %vm728, %v6271, %v6273
      %v6337 = vsel %vm728, %v6273, %v6275
      %v6338 = vsel %vm728, %v6277, %v6279
      %v6339 = vsel %vm728, %v6279, %v6281
      %v6340 = vsel %vm728, %v6281, %v6283
      %v6341 = vsel %vm728, %v6283, %v6285
      %v6342 = vsel %vm728, %v6287, %v6289
      %v6343 = vsel %vm728, %v6289, %v6291
      %v6344 = vsel %vm728, %v6291, %v6293
      %v6345 = vsel %vm728, %v6293, %v6295
      %v6346 = vsel %vm728, %v6297, %v6299
      %v6347 = vsel %vm728, %v6299, %v6301
      %v6348 = vsel %vm728, %v6301, %v6303
      %v6349 = vsel %vm728, %v6303, %v6305
      %v6350 = vsel %vm728, %v6307, %v6309
      %v6351 = vsel %vm728, %v6309, %v6311
      %v6352 = vsel %vm728, %v6311, %v6313
      %v6353 = vsel %vm728, %v6313, %v6315
      %v6354 = vsel %vm728, %v6317, %v6319
      %v6355 = vsel %vm728, %v6319, %v6321
      %v6356 = vsel %vm728, %v6321, %v6323
      %v6357 = vsel %vm728, %v6323, %v6325
      %v6390 = vadd.f32 %v6102, %v6326
      %v6391 = vadd.f32 %v6103, %v6327
      %v6392 = vadd.f32 %v6104, %v6328
      %v6393 = vadd.f32 %v6105, %v6329
      %v6394 = vadd.f32 %v6106, %v6330
      %v6395 = vadd.f32 %v6107, %v6331
      %v6396 = vadd.f32 %v6108, %v6332
      %v6397 = vadd.f32 %v6109, %v6333
      %v6398 = vadd.f32 %v6110, %v6334
      %v6399 = vadd.f32 %v6111, %v6335
      %v6400 = vadd.f32 %v6112, %v6336
      %v6401 = vadd.f32 %v6113, %v6337
      %v6402 = vadd.f32 %v6114, %v6338
      %v6403 = vadd.f32 %v6115, %v6339
      %v6404 = vadd.f32 %v6116, %v6340
      %v6405 = vadd.f32 %v6117, %v6341
      %v6406 = vadd.f32 %v6118, %v6342
      %v6407 = vadd.f32 %v6119, %v6343
      %v6408 = vadd.f32 %v6120, %v6344
      %v6409 = vadd.f32 %v6121, %v6345
      %v6410 = vadd.f32 %v6122, %v6346
      %v6411 = vadd.f32 %v6123, %v6347
      %v6412 = vadd.f32 %v6124, %v6348
      %v6413 = vadd.f32 %v6125, %v6349
      %v6414 = vadd.f32 %v6126, %v6350
      %v6415 = vadd.f32 %v6127, %v6351
      %v6416 = vadd.f32 %v6128, %v6352
      %v6417 = vadd.f32 %v6129, %v6353
      %v6418 = vadd.f32 %v6130, %v6354
      %v6419 = vadd.f32 %v6131, %v6355
      %v6420 = vadd.f32 %v6132, %v6356
      %v6421 = vadd.f32 %v6133, %v6357
      %6422 = vset.pattern.permute.xlu0 2
      %6423 = vperm.xlu0 %6422, %v6054
      %v6424 = vpop.permute.xlu0 %6423
      %6426 = vset.pattern.permute.xlu0 2
      %6427 = vperm.xlu0 %6426, %v6055
      %v6428 = vpop.permute.xlu0 %6427
      %6430 = vset.pattern.permute.xlu0 2
      %6431 = vperm.xlu0 %6430, %v6056
      %v6432 = vpop.permute.xlu0 %6431
      %6434 = vset.pattern.permute.xlu0 2
      %6435 = vperm.xlu0 %6434, %v6057
      %v6436 = vpop.permute.xlu0 %6435
      %6438 = vset.pattern.permute.xlu0 2
      %6439 = vperm.xlu0 %6438, %v6058
      %v6440 = vpop.permute.xlu0 %6439
      %6442 = vset.pattern.permute.xlu0 2
      %6443 = vperm.xlu0 %6442, %v6059
      %v6444 = vpop.permute.xlu0 %6443
      %6446 = vset.pattern.permute.xlu0 2
      %6447 = vperm.xlu0 %6446, %v6060
      %v6448 = vpop.permute.xlu0 %6447
      %6450 = vset.pattern.permute.xlu0 2
      %6451 = vperm.xlu0 %6450, %v6061
      %v6452 = vpop.permute.xlu0 %6451
      %v6454 = vmul.f32 %v6424, %v6014
      %v6455 = vmul.f32 %v6424, %v6015
      %v6456 = vmul.f32 %v6424, %v6016
      %v6457 = vmul.f32 %v6424, %v6017
      %v6458 = vmul.f32 %v6424, %v6018
      %v6459 = vmul.f32 %v6428, %v6019
      %v6460 = vmul.f32 %v6428, %v6020
      %v6461 = vmul.f32 %v6428, %v6021
      %v6462 = vmul.f32 %v6428, %v6022
      %v6463 = vmul.f32 %v6428, %v6023
      %v6464 = vmul.f32 %v6432, %v6024
      %v6465 = vmul.f32 %v6432, %v6025
      %v6466 = vmul.f32 %v6432, %v6026
      %v6467 = vmul.f32 %v6432, %v6027
      %v6468 = vmul.f32 %v6432, %v6028
      %v6469 = vmul.f32 %v6436, %v6029
      %v6470 = vmul.f32 %v6436, %v6030
      %v6471 = vmul.f32 %v6436, %v6031
      %v6472 = vmul.f32 %v6436, %v6032
      %v6473 = vmul.f32 %v6436, %v6033
      %v6474 = vmul.f32 %v6440, %v6034
      %v6475 = vmul.f32 %v6440, %v6035
      %v6476 = vmul.f32 %v6440, %v6036
      %v6477 = vmul.f32 %v6440, %v6037
      %v6478 = vmul.f32 %v6440, %v6038
      %v6479 = vmul.f32 %v6444, %v6039
      %v6480 = vmul.f32 %v6444, %v6040
      %v6481 = vmul.f32 %v6444, %v6041
      %v6482 = vmul.f32 %v6444, %v6042
      %v6483 = vmul.f32 %v6444, %v6043
      %v6484 = vmul.f32 %v6448, %v6044
      %v6485 = vmul.f32 %v6448, %v6045
      %v6486 = vmul.f32 %v6448, %v6046
      %v6487 = vmul.f32 %v6448, %v6047
      %v6488 = vmul.f32 %v6448, %v6048
      %v6489 = vmul.f32 %v6452, %v6049
      %v6490 = vmul.f32 %v6452, %v6050
      %v6491 = vmul.f32 %v6452, %v6051
      %v6492 = vmul.f32 %v6452, %v6052
      %v6493 = vmul.f32 %v6452, %v6053
      %6534 = vrot.lane.b32.xlu0 %v6454, 126
      %v6535 = vpop.permute.xlu0 %6534
      %6536 = vrot.lane.b32.xlu0 %v6455, 126
      %v6537 = vpop.permute.xlu0 %6536
      %6538 = vrot.lane.b32.xlu0 %v6456, 126
      %v6539 = vpop.permute.xlu0 %6538
      %6540 = vrot.lane.b32.xlu0 %v6457, 126
      %v6541 = vpop.permute.xlu0 %6540
      %6542 = vrot.lane.b32.xlu0 %v6458, 126
      %v6543 = vpop.permute.xlu0 %6542
      %6544 = vrot.lane.b32.xlu0 %v6459, 126
      %v6545 = vpop.permute.xlu0 %6544
      %6546 = vrot.lane.b32.xlu0 %v6460, 126
      %v6547 = vpop.permute.xlu0 %6546
      %6548 = vrot.lane.b32.xlu0 %v6461, 126
      %v6549 = vpop.permute.xlu0 %6548
      %6550 = vrot.lane.b32.xlu0 %v6462, 126
      %v6551 = vpop.permute.xlu0 %6550
      %6552 = vrot.lane.b32.xlu0 %v6463, 126
      %v6553 = vpop.permute.xlu0 %6552
      %6554 = vrot.lane.b32.xlu0 %v6464, 126
      %v6555 = vpop.permute.xlu0 %6554
      %6556 = vrot.lane.b32.xlu0 %v6465, 126
      %v6557 = vpop.permute.xlu0 %6556
      %6558 = vrot.lane.b32.xlu0 %v6466, 126
      %v6559 = vpop.permute.xlu0 %6558
      %6560 = vrot.lane.b32.xlu0 %v6467, 126
      %v6561 = vpop.permute.xlu0 %6560
      %6562 = vrot.lane.b32.xlu0 %v6468, 126
      %v6563 = vpop.permute.xlu0 %6562
      %6564 = vrot.lane.b32.xlu0 %v6469, 126
      %v6565 = vpop.permute.xlu0 %6564
      %6566 = vrot.lane.b32.xlu0 %v6470, 126
      %v6567 = vpop.permute.xlu0 %6566
      %6568 = vrot.lane.b32.xlu0 %v6471, 126
      %v6569 = vpop.permute.xlu0 %6568
      %6570 = vrot.lane.b32.xlu0 %v6472, 126
      %v6571 = vpop.permute.xlu0 %6570
      %6572 = vrot.lane.b32.xlu0 %v6473, 126
      %v6573 = vpop.permute.xlu0 %6572
      %6574 = vrot.lane.b32.xlu0 %v6474, 126
      %v6575 = vpop.permute.xlu0 %6574
      %6576 = vrot.lane.b32.xlu0 %v6475, 126
      %v6577 = vpop.permute.xlu0 %6576
      %6578 = vrot.lane.b32.xlu0 %v6476, 126
      %v6579 = vpop.permute.xlu0 %6578
      %6580 = vrot.lane.b32.xlu0 %v6477, 126
      %v6581 = vpop.permute.xlu0 %6580
      %6582 = vrot.lane.b32.xlu0 %v6478, 126
      %v6583 = vpop.permute.xlu0 %6582
      %6584 = vrot.lane.b32.xlu0 %v6479, 126
      %v6585 = vpop.permute.xlu0 %6584
      %6586 = vrot.lane.b32.xlu0 %v6480, 126
      %v6587 = vpop.permute.xlu0 %6586
      %6588 = vrot.lane.b32.xlu0 %v6481, 126
      %v6589 = vpop.permute.xlu0 %6588
      %6590 = vrot.lane.b32.xlu0 %v6482, 126
      %v6591 = vpop.permute.xlu0 %6590
      %6592 = vrot.lane.b32.xlu0 %v6483, 126
      %v6593 = vpop.permute.xlu0 %6592
      %6594 = vrot.lane.b32.xlu0 %v6484, 126
      %v6595 = vpop.permute.xlu0 %6594
      %6596 = vrot.lane.b32.xlu0 %v6485, 126
      %v6597 = vpop.permute.xlu0 %6596
      %6598 = vrot.lane.b32.xlu0 %v6486, 126
      %v6599 = vpop.permute.xlu0 %6598
      %6600 = vrot.lane.b32.xlu0 %v6487, 126
      %v6601 = vpop.permute.xlu0 %6600
      %6602 = vrot.lane.b32.xlu0 %v6488, 126
      %v6603 = vpop.permute.xlu0 %6602
      %6604 = vrot.lane.b32.xlu0 %v6489, 126
      %v6605 = vpop.permute.xlu0 %6604
      %6606 = vrot.lane.b32.xlu0 %v6490, 126
      %v6607 = vpop.permute.xlu0 %6606
      %6608 = vrot.lane.b32.xlu0 %v6491, 126
      %v6609 = vpop.permute.xlu0 %6608
      %6610 = vrot.lane.b32.xlu0 %v6492, 126
      %v6611 = vpop.permute.xlu0 %6610
      %6612 = vrot.lane.b32.xlu0 %v6493, 126
      %v6613 = vpop.permute.xlu0 %6612
      %v6614 = vsel %vm1033, %v6535, %v6537
      %v6615 = vsel %vm1033, %v6537, %v6539
      %v6616 = vsel %vm1033, %v6539, %v6541
      %v6617 = vsel %vm1033, %v6541, %v6543
      %v6618 = vsel %vm1033, %v6545, %v6547
      %v6619 = vsel %vm1033, %v6547, %v6549
      %v6620 = vsel %vm1033, %v6549, %v6551
      %v6621 = vsel %vm1033, %v6551, %v6553
      %v6622 = vsel %vm1033, %v6555, %v6557
      %v6623 = vsel %vm1033, %v6557, %v6559
      %v6624 = vsel %vm1033, %v6559, %v6561
      %v6625 = vsel %vm1033, %v6561, %v6563
      %v6626 = vsel %vm1033, %v6565, %v6567
      %v6627 = vsel %vm1033, %v6567, %v6569
      %v6628 = vsel %vm1033, %v6569, %v6571
      %v6629 = vsel %vm1033, %v6571, %v6573
      %v6630 = vsel %vm1033, %v6575, %v6577
      %v6631 = vsel %vm1033, %v6577, %v6579
      %v6632 = vsel %vm1033, %v6579, %v6581
      %v6633 = vsel %vm1033, %v6581, %v6583
      %v6634 = vsel %vm1033, %v6585, %v6587
      %v6635 = vsel %vm1033, %v6587, %v6589
      %v6636 = vsel %vm1033, %v6589, %v6591
      %v6637 = vsel %vm1033, %v6591, %v6593
      %v6638 = vsel %vm1033, %v6595, %v6597
      %v6639 = vsel %vm1033, %v6597, %v6599
      %v6640 = vsel %vm1033, %v6599, %v6601
      %v6641 = vsel %vm1033, %v6601, %v6603
      %v6642 = vsel %vm1033, %v6605, %v6607
      %v6643 = vsel %vm1033, %v6607, %v6609
      %v6644 = vsel %vm1033, %v6609, %v6611
      %v6645 = vsel %vm1033, %v6611, %v6613
      %v6678 = vadd.f32 %v6390, %v6614
      %v6679 = vadd.f32 %v6391, %v6615
      %v6680 = vadd.f32 %v6392, %v6616
      %v6681 = vadd.f32 %v6393, %v6617
      %v6682 = vadd.f32 %v6394, %v6618
      %v6683 = vadd.f32 %v6395, %v6619
      %v6684 = vadd.f32 %v6396, %v6620
      %v6685 = vadd.f32 %v6397, %v6621
      %v6686 = vadd.f32 %v6398, %v6622
      %v6687 = vadd.f32 %v6399, %v6623
      %v6688 = vadd.f32 %v6400, %v6624
      %v6689 = vadd.f32 %v6401, %v6625
      %v6690 = vadd.f32 %v6402, %v6626
      %v6691 = vadd.f32 %v6403, %v6627
      %v6692 = vadd.f32 %v6404, %v6628
      %v6693 = vadd.f32 %v6405, %v6629
      %v6694 = vadd.f32 %v6406, %v6630
      %v6695 = vadd.f32 %v6407, %v6631
      %v6696 = vadd.f32 %v6408, %v6632
      %v6697 = vadd.f32 %v6409, %v6633
      %v6698 = vadd.f32 %v6410, %v6634
      %v6699 = vadd.f32 %v6411, %v6635
      %v6700 = vadd.f32 %v6412, %v6636
      %v6701 = vadd.f32 %v6413, %v6637
      %v6702 = vadd.f32 %v6414, %v6638
      %v6703 = vadd.f32 %v6415, %v6639
      %v6704 = vadd.f32 %v6416, %v6640
      %v6705 = vadd.f32 %v6417, %v6641
      %v6706 = vadd.f32 %v6418, %v6642
      %v6707 = vadd.f32 %v6419, %v6643
      %v6708 = vadd.f32 %v6420, %v6644
      %v6709 = vadd.f32 %v6421, %v6645
      %v6710 = vadd.f32 %v6678, %v6682
      %v6711 = vadd.f32 %v6710, %v6686
      %v6712 = vadd.f32 %v6711, %v6690
      %v6713 = vadd.f32 %v6712, %v6694
      %v6714 = vadd.f32 %v6713, %v6698
      %v6715 = vadd.f32 %v6714, %v6702
      %v6716 = vadd.f32 %v6715, %v6706
      %v6717 = vrot.slane %v6716, 4
      %v6718 = vadd.f32 %v6716, %v6717
      %v6719 = vrot.slane %v6718, 2
      %v6720 = vadd.f32 %v6718, %v6719
      %v6721 = vrot.slane %v6720, 1
      %v6722 = vadd.f32 %v6720, %v6721
      %v6723 = vadd.f32 %v6679, %v6683
      %v6724 = vadd.f32 %v6723, %v6687
      %v6725 = vadd.f32 %v6724, %v6691
      %v6726 = vadd.f32 %v6725, %v6695
      %v6727 = vadd.f32 %v6726, %v6699
      %v6728 = vadd.f32 %v6727, %v6703
      %v6729 = vadd.f32 %v6728, %v6707
      %v6730 = vrot.slane %v6729, 4
      %v6731 = vadd.f32 %v6729, %v6730
      %v6732 = vrot.slane %v6731, 2
      %v6733 = vadd.f32 %v6731, %v6732
      %v6734 = vrot.slane %v6733, 1
      %v6735 = vadd.f32 %v6733, %v6734
      %v6736 = vadd.f32 %v6680, %v6684
      %v6737 = vadd.f32 %v6736, %v6688
      %v6738 = vadd.f32 %v6737, %v6692
      %v6739 = vadd.f32 %v6738, %v6696
      %v6740 = vadd.f32 %v6739, %v6700
      %v6741 = vadd.f32 %v6740, %v6704
      %v6742 = vadd.f32 %v6741, %v6708
      %v6743 = vrot.slane %v6742, 4
      %v6744 = vadd.f32 %v6742, %v6743
      %v6745 = vrot.slane %v6744, 2
      %v6746 = vadd.f32 %v6744, %v6745
      %v6747 = vrot.slane %v6746, 1
      %v6748 = vadd.f32 %v6746, %v6747
      %v6749 = vadd.f32 %v6681, %v6685
      %v6750 = vadd.f32 %v6749, %v6689
      %v6751 = vadd.f32 %v6750, %v6693
      %v6752 = vadd.f32 %v6751, %v6697
      %v6753 = vadd.f32 %v6752, %v6701
      %v6754 = vadd.f32 %v6753, %v6705
      %v6755 = vadd.f32 %v6754, %v6709
      %v6756 = vrot.slane %v6755, 4
      %v6757 = vadd.f32 %v6755, %v6756
      %v6758 = vrot.slane %v6757, 2
      %v6759 = vadd.f32 %v6757, %v6758
      %v6760 = vrot.slane %v6759, 1
      %v6761 = vadd.f32 %v6759, %v6760
      %s6762 = sld [smem:[#allocation2]]
      %v6763 = vstv %s6762
      %v6764 = vadd.f32 %v6722, %v6763
      %v6765 = vadd.f32 %v6735, %v6763
      %v6766 = vadd.f32 %v6748, %v6763
      %v6767 = vadd.f32 %v6761, %v6763
      %v6768 = vtanh.pop %v6764
      %v6769 = vtanh.pop %v6765
      %v6770 = vtanh.pop %v6766
      %v6771 = vtanh.pop %v6767
      %v6776 = vcombine.low %v6768, %v6769
      %v6777 = vcombine.low %v6770, %v6771
      %v6779 = vunpack.c.l.s4 1966171168
      %v6780 = vunpack.c.0.s8 %v6779
      %v6781 = vlaneseq
      %v6782 = vshrl.u32 %v6781, 7
      %v6783 = vsub.s32 %v6780, %v6782
      %v6784 = vrot.slane %v6776, %v6783
      %v6786 = vunpack.c.l.s4 1966171168
      %v6787 = vunpack.c.0.s8 %v6786
      %v6788 = vlaneseq
      %v6789 = vshrl.u32 %v6788, 7
      %v6790 = vsub.s32 %v6787, %v6789
      %v6791 = vrot.slane %v6777, %v6790
      %v6792 = vcombine.low %v6784, %v6791
      %v6794 = vunpack.c.l.s4 1966171168
      %v6795 = vunpack.c.0.s8 %v6794
      %v6796 = vlaneseq
      %v6797 = vshrl.u32 %v6796, 7
      %v6798 = vsub.s32 %v6795, %v6797
      %v6799 = vrot.slane %v6792, %v6798
      %v6801 = vlaneseq
      %vm6802 = vcmp.ge.s32.totalorder %v6801, 0
      %vm6803 = vcmp.lt.s32.totalorder %v6801, 512
      %vm6804 = vmand %vm6802, %vm6803
      %6805 = vst.msk [vmem:[%s418] sm:$0xf] %vm6804, %v6799
      %p6806 = scmp.lt.s32.totalorder %s27, 1
      %s6807 = scalar_select %p6806, %s27, 1
      %p6808 = scmp.lt.s32.totalorder %s28, 2
      %s6809 = scalar_select %p6808, %s28, 2
      %s6810 = smul.addr %s6809, 4
      %s6811 = smul.addr %s6807, 12
      %s6812 = sadd.s32 %s6810, %s6811
      %s6813 = scalar_lea.vmem %s11, %s6812
      // Predicated region
      $region65: #{generator_forward.1} parent=63 // pred_check
        %p6814 = pneg %p293
      $region66: #{generator_forward.1} parent=63 // pred_check_branch
        %6816 = sbr.rel (%p6814) target = $region68
      $region67: #{generator_forward.1} parent=63 // pred_region
        _
      $region68: #{generator_forward.1} parent=63 // pred_fallthru
        _
    $region64: #{generator_forward.1} parent=5 // pred_fallthru
      _
    %p6817 = scmp.le.s32.totalorder 2, %s18
    // Predicated region
    $region69: #{generator_forward.1} parent=5 // pred_check
      %p6818 = pneg %p6817
    $region70: #{generator_forward.1} parent=5 // pred_check_branch
      %6820 = sbr.rel (%p6818) target = $region72
    $region71: #{generator_forward.1} parent=5 // pred_region
      %s6821 = ssub.s32 %s18, 2
      // Predicated region
      $region73: #{generator_forward.1} parent=71 // pred_check
        %p6822 = pneg %p299
      $region74: #{generator_forward.1} parent=71 // pred_check_branch
        %6824 = sbr.rel (%p6822) target = $region76
      $region75: #{generator_forward.1} parent=71 // pred_region
        %p6825 = scmp.lt.s32.totalorder %s29, 1
        %s6826 = scalar_select %p6825, %s29, 1
        %p6827 = scmp.lt.s32.totalorder %s30, 2
        %s6828 = scalar_select %p6827, %s30, 2
        %s6829 = smul.addr %s6828, 4
        %s6830 = smul.addr %s6826, 12
        %s6831 = sadd.s32 %s6829, %s6830
        %s6832 = scalar_lea.vmem %s11, %s6831
      $region76: #{generator_forward.1} parent=71 // pred_fallthru
        _
    $region72: #{generator_forward.1} parent=5 // pred_fallthru
      _
  $region6: #{generator_forward.1} parent=0 // loop_footer
    %s22 = sadd.s32 1, %s18
  $region7: #{generator_forward.1} parent=0 // loop_footer_branch
    %17 = sbr.rel target = $region3
  $region8: #{generator_forward.1} parent=0 // loop_exit
    _

</llo_original>
